<compile_context>
chip_gen: v7x
topology: tpu7x:2x2x1
jax: 0.10.0
libtpu: 0.0.40
codegen_flags: <defaults>
</compile_context>

<pallas_src>
import functools

import numpy as np

import jax
import jax.numpy as jnp
from jax import lax
from jax.experimental import pallas as pl
from jax.experimental.pallas import tpu as pltpu

EPS = 1e-5
NCPAD = 128  # padded class count for a lane-dense fc2 / output store


# ------------------------------ fused kernel --------------------------------

def _rasternet_kernel(x_ref, *refs, conv_dims, mode, tb):
    """Entire RasterNet3 forward for TB batch elements (grid axis = batch/TB)."""
    nconv = len(conv_dims)
    conv_w = refs[:nconv]
    fc1_w_ref, fc2_w_ref, shift_ref, o_ref = refs[nconv:nconv + 4]
    pad_refs = refs[nconv + 4:]          # bf16 VMEM scratch, one per inter-layer act.

    # `cur` holds the current layer's input, H-padded, phase-split, batch-stacked:
    #   row index = block * tb + image, block order = even padded rows then odd.
    cur = x_ref
    feat = None
    for l, (H, W, _Cin, Cout) in enumerate(conv_dims):
        Ho, Wo = (H + 1) // 2, (W + 1) // 2
        n_even = (H + 3) // 2                      # even-phase padded row blocks
        N = Wo * Cout
        w_ref = conv_w[l]                          # (3, K, N) bf16, BN scale folded
        shift = shift_ref[l:l + 1, 0:N]            # (1, N) f32

        # stride-2 row selection is contiguous thanks to the phase-split layout
        rows_k0 = cur[0:Ho * tb, :]                        # padded rows 2*oy
        rows_k1 = cur[n_even * tb:(n_even + Ho) * tb, :]   # padded rows 2*oy+1
        rows_k2 = cur[tb:(Ho + 1) * tb, :]                 # padded rows 2*oy+2

        acc = jnp.dot(rows_k0, w_ref[0], preferred_element_type=jnp.float32)
        acc = acc + jnp.dot(rows_k1, w_ref[1], preferred_element_type=jnp.float32)
        acc = acc + jnp.dot(rows_k2, w_ref[2], preferred_element_type=jnp.float32)

        # folded BatchNorm2d shift (+ conv bias) and ReLU, in f32
        y = jnp.maximum(acc + shift, 0.0)          # (Ho*tb, N)

        if l + 1 < nconv:
            nxt = pad_refs[l]                      # ((Ho+2)*tb, N) bf16 scratch
            yb = y.astype(jnp.bfloat16)            # single cast per layer
            n_even_nxt = (Ho + 3) // 2
            zero_blk = jnp.zeros((tb, N), jnp.bfloat16)
            # zero ONLY the two padded border row-blocks (scratch persists
            # across grid steps, so refresh them every step)
            nxt[0:tb, :] = zero_blk                                   # padded row 0
            r_bot = Ho + 1
            d_bot = (r_bot // 2) if r_bot % 2 == 0 else (n_even_nxt + r_bot // 2)
            nxt[d_bot * tb:(d_bot + 1) * tb, :] = zero_blk            # padded row Ho+1
            # contiguous TB-row block store per output row into the next
            # layer's phase-split padded buffer
            for oy in range(Ho):
                r = oy + 1
                dst = (r // 2) if r % 2 == 0 else (n_even_nxt + r // 2)
                nxt[dst * tb:(dst + 1) * tb, :] = yb[oy * tb:(oy + 1) * tb, :]
            cur = nxt
        else:
            # global average pool over all spatial positions of the last conv
            if Ho == 1 and Wo == 1:
                feat = y                           # already (tb, Cout)
            else:
                feat = jnp.mean(y.reshape(Ho, tb, Wo, Cout), axis=(0, 2))

    # fc1 (BN1d scale folded into weight) + shift + ReLU (dropout = identity)
    d1 = fc1_w_ref.shape[1]
    h = jnp.dot(feat.astype(jnp.bfloat16), fc1_w_ref[...],
                preferred_element_type=jnp.float32)
    h = jnp.maximum(h + shift_ref[len(conv_dims):len(conv_dims) + 1, 0:d1], 0.0)

    # fc2 + head (classes padded to NCPAD; pad bias = -1e30 -> excluded)
    ncp = fc2_w_ref.shape[1]
    z = jnp.dot(h.astype(jnp.bfloat16), fc2_w_ref[...],
                preferred_element_type=jnp.float32)
    z = z + shift_ref[len(conv_dims) + 1:len(conv_dims) + 2, 0:ncp]
    if mode == "classification":
        m = jnp.max(z, axis=-1, keepdims=True)
        lse = jnp.log(jnp.sum(jnp.exp(z - m), axis=-1, keepdims=True)) + m
        o_ref[...] = z - lse                       # log_softmax
    elif mode == "regression":
        o_ref[...] = 1.0 / (1.0 + jnp.exp(-z))     # sigmoid
    else:
        raise ValueError(f"Invalid mode: {mode}")


# ---------------------------- host-side packing ------------------------------

def _fold_bn(gamma, beta, mean, var, bias):
    scale = gamma / jnp.sqrt(var + EPS)
    shift = beta + scale * (bias - mean)
    return scale, shift


def _pack_conv_weight(w_hwio, scale, w_in_width, cin_pad=None):
    """(3,3,Cin,Cout) HWIO weight -> (3, W*Cin_pad, Wo*Cout) structured bf16.

    For vertical tap ky, packed[ky] maps a flattened input row (w, c) to a
    flattened output row (ox, o) of the stride-2, pad-1 conv; horizontal taps
    falling on the zero W-padding are omitted.  The per-output-channel
    BatchNorm scale is folded into the columns before the bf16 cast.
    """
    _, _, cin, cout = w_hwio.shape
    cin_p = cin if cin_pad is None else cin_pad
    wo = (w_in_width + 1) // 2
    w_np = (np.asarray(w_hwio, np.float32)
            * np.asarray(scale, np.float32)[None, None, None, :])
    packed = np.zeros((3, w_in_width * cin_p, wo * cout), np.float32)
    for ky in range(3):
        for ox in range(wo):
            for kx in range(3):
                w_in = 2 * ox - 1 + kx
                if 0 <= w_in < w_in_width:
                    packed[ky,
                           w_in * cin_p:w_in * cin_p + cin,
                           ox * cout:(ox + 1) * cout] = w_np[ky, kx]
    return jnp.asarray(packed, jnp.bfloat16)


def build_params(key, n_classes, H=16, W=16):
    assert n_classes <= NCPAD
    conv_chan = [(3, 32), (32, 64), (64, 128), (128, 256), (256, 512)]
    conv_dims, conv_w_packed, ref_conv, shift_rows = [], [], [], []
    h, w = H, W
    cin_pad_first = 8                               # 3 -> 8 so W*Cin = 128 for layer 1
    for li, (cin, cout) in enumerate(conv_chan):
        conv_dims.append((h, w, cin, cout))
        key, kw_, kb, kg, kbt, km, kv = jax.random.split(key, 7)
        wconv = jax.random.normal(kw_, (3, 3, cin, cout), jnp.float32) / jnp.sqrt(9.0 * cin)
        bias = 0.01 * jax.random.normal(kb, (cout,), jnp.float32)
        gamma = 1.0 + 0.1 * jax.random.normal(kg, (cout,), jnp.float32)
        beta = 0.1 * jax.random.normal(kbt, (cout,), jnp.float32)
        mean = 0.05 * jax.random.normal(km, (cout,), jnp.float32)
        var = 1.0 + 0.1 * jnp.abs(jax.random.normal(kv, (cout,), jnp.float32))
        scale, shift = _fold_bn(gamma, beta, mean, var, bias)

        cin_p = cin_pad_first if li == 0 else cin
        conv_w_packed.append(_pack_conv_weight(wconv, scale, w, cin_pad=cin_p))
        wo = (w + 1) // 2
        shift_rows.append(np.asarray(jnp.tile(shift, wo), np.float32))
        ref_conv.append((wconv, scale, shift))
        h, w = (h + 1) // 2, (w + 1) // 2

    key, k1, kb1, kg1, kbt1, km1, kv1, k2, kb2 = jax.random.split(key, 9)
    w1 = jax.random.normal(k1, (512, 256), jnp.float32) / jnp.sqrt(512.0)
    b1 = 0.01 * jax.random.normal(kb1, (256,), jnp.float32)
    g1 = 1.0 + 0.1 * jax.random.normal(kg1, (256,), jnp.float32)
    bt1 = 0.1 * jax.random.normal(kbt1, (256,), jnp.float32)
    m1 = 0.05 * jax.random.normal(km1, (256,), jnp.float32)
    v1 = 1.0 + 0.1 * jnp.abs(jax.random.normal(kv1, (256,), jnp.float32))
    s1, sh1 = _fold_bn(g1, bt1, m1, v1, b1)
    fc1_w = (w1 * s1[None, :]).astype(jnp.bfloat16)          # BN1d scale folded
    shift_rows.append(np.asarray(sh1, np.float32))

    w2 = jax.random.normal(k2, (256, n_classes), jnp.float32) / jnp.sqrt(256.0)
    b2 = 0.01 * jax.random.normal(kb2, (n_classes,), jnp.float32)
    fc2_w_np = np.zeros((256, NCPAD), np.float32)
    fc2_w_np[:, :n_classes] = np.asarray(w2)
    fc2_w = jnp.asarray(fc2_w_np, jnp.bfloat16)
    fc2_b_row = np.full((NCPAD,), -1e30, np.float32)          # pad classes -> -inf-ish
    fc2_b_row[:n_classes] = np.asarray(b2)
    shift_rows.append(fc2_b_row)

    max_w = max(r.shape[0] for r in shift_rows)               # 512 for H=W=16
    shifts = np.zeros((8, max_w), np.float32)                 # one consolidated ref
    for i, r in enumerate(shift_rows):
        shifts[i, :r.shape[0]] = r

    params = dict(conv_dims=tuple(conv_dims), conv_w=conv_w_packed,
                  fc1_w=fc1_w, fc2_w=fc2_w, shifts=jnp.asarray(shifts),
                  cin_pad=cin_pad_first, n_classes=n_classes)
    ref = dict(conv=ref_conv, fc1=(w1, s1, sh1), fc2=(w2, b2))
    return params, ref


# -------------------------------- wrapper ------------------------------------

def _choose_tb(batch):
    """Batch tile: <=16 (v5e f32 acc / 128-tall MXU) and grid >= 2 when possible."""
    for tb in (16, 8, 4, 2, 1):
        if batch % tb == 0 and batch // tb >= 2:
            return tb
    return batch


def rasternet3_forward(x_nchw, params, mode="classification"):
    conv_dims = params["conv_dims"]
    H, W, Cin, _ = conv_dims[0]
    cin_pad = params["cin_pad"]
    B = x_nchw.shape[0]
    assert x_nchw.shape[1] == Cin
    tb = _choose_tb(B)
    assert B % tb == 0
    nblk = B // tb
    K0 = W * cin_pad

    # Layer-1 input prep (tiny XLA ops on the raw input only): NCHW -> NHWC,
    # zero-pad channels 3->8 and H by 1, flatten (w, c), phase-split the padded
    # rows (even then odd), and stack TB images per grid block in
    # (padded_row, image) order.  Cast to bf16 once here.
    x = jnp.transpose(x_nchw, (0, 2, 3, 1)).astype(jnp.float32)
    x = jnp.pad(x, ((0, 0), (1, 1), (0, 0), (0, cin_pad - Cin)))
    xp = x.reshape(B, H + 2, K0)
    xs = jnp.concatenate([xp[:, 0::2, :], xp[:, 1::2, :]], axis=1)    # (B, H+2, K0)
    xb = (xs.reshape(nblk, tb, H + 2, K0)
            .transpose(0, 2, 1, 3)
            .reshape(nblk, (H + 2) * tb, K0)
            .astype(jnp.bfloat16))

    inputs = [xb]
    in_specs = [pl.BlockSpec((None, (H + 2) * tb, K0), lambda g: (g, 0, 0))]
    for wk in params["conv_w"]:
        inputs.append(wk)
        in_specs.append(pl.BlockSpec(wk.shape, lambda g: (0, 0, 0)))
    inputs += [params["fc1_w"], params["fc2_w"], params["shifts"]]
    in_specs += [pl.BlockSpec(params["fc1_w"].shape, lambda g: (0, 0)),
                 pl.BlockSpec(params["fc2_w"].shape, lambda g: (0, 0)),
                 pl.BlockSpec(params["shifts"].shape, lambda g: (0, 0))]

    # bf16 VMEM scratch: phase-split padded inputs of layers 2..5.
    scratch = []
    for (h_l, w_l, _ci, co) in conv_dims[:-1]:
        ho, wo = (h_l + 1) // 2, (w_l + 1) // 2
        scratch.append(pltpu.VMEM(((ho + 2) * tb, wo * co), jnp.bfloat16))

    ncpad = params["fc2_w"].shape[1]
    out = pl.pallas_call(
        functools.partial(_rasternet_kernel, conv_dims=conv_dims, mode=mode, tb=tb),
        grid=(nblk,),
        in_specs=in_specs,
        out_specs=pl.BlockSpec((None, tb, ncpad), lambda g: (g, 0, 0)),
        out_shape=jax.ShapeDtypeStruct((nblk, tb, ncpad), jnp.float32),
        scratch_shapes=scratch,
        compiler_params=pltpu.CompilerParams(
            dimension_semantics=("parallel",),       # v7x: blocks shard across 2 TCs
            vmem_limit_bytes=32 * 1024 * 1024),      # cheap insurance for big TB
    )(*inputs)
    return out.reshape(B, ncpad)[:, :params["n_classes"]]


# -------------------------- pure-JAX reference --------------------------------

def rasternet3_reference(x_nchw, ref, mode="classification"):
    x = jnp.transpose(x_nchw, (0, 2, 3, 1)).astype(jnp.float32)
    for (w_hwio, scale, shift) in ref["conv"]:
        y = lax.conv_general_dilated(x, w_hwio, window_strides=(2, 2),
                                     padding=((1, 1), (1, 1)),
                                     dimension_numbers=("NHWC", "HWIO", "NHWC"))
        x = jnp.maximum(y * scale + shift, 0.0)
    feat = jnp.mean(x, axis=(1, 2))
    w1, s1, sh1 = ref["fc1"]
    h = jnp.maximum((feat @ w1) * s1 + sh1, 0.0)
    w2, b2 = ref["fc2"]
    z = h @ w2 + b2
    if mode == "classification":
        return jax.nn.log_softmax(z, axis=-1)
    return jax.nn.sigmoid(z)


# --------------------------------- main ---------------------------------------

if __name__ == "__main__":
    n_classes = 10
    key = jax.random.PRNGKey(0)
    key, kx = jax.random.split(key)
    B = 16                                            # -> TB=8, grid=(2,)
    x = jax.random.normal(kx, (B, 3, 16, 16), jnp.float32)   # NCHW, like PyTorch

    params, ref = build_params(key, n_classes, H=16, W=16)

    fwd = jax.jit(lambda inp: rasternet3_forward(inp, params, mode="classification"))
    out = jax.block_until_ready(fwd(x))

    assert out.shape == (B, n_classes)
    assert bool(jnp.all(jnp.isfinite(out)))
    # log_softmax rows should exp-sum to ~1 (pad classes carry ~0 probability)
    assert jnp.allclose(jnp.sum(jnp.exp(out), axis=-1), 1.0, atol=1e-3)
    # compare against a pure-JAX f32 reference (bf16 MXU numerics -> loose tol)
    ref_out = rasternet3_reference(x, ref, mode="classification")
    err = float(jnp.max(jnp.abs(out - ref_out)))
    assert err < 0.35, f"max |kernel - reference| too large: {err}"
    print("KERNEL_OK")
</pallas_src>

<mosaic_0001>
module attributes {stable_mosaic.version = 11 : i64} {
  func.func @_rasternet_kernel(%arg0: i32, %arg1: memref<1x144x128xbf16, #tpu.memory_space<vmem>>, %arg2: memref<3x128x256xbf16, #tpu.memory_space<vmem>>, %arg3: memref<3x256x256xbf16, #tpu.memory_space<vmem>>, %arg4: memref<3x256x256xbf16, #tpu.memory_space<vmem>>, %arg5: memref<3x256x256xbf16, #tpu.memory_space<vmem>>, %arg6: memref<3x256x512xbf16, #tpu.memory_space<vmem>>, %arg7: memref<512x256xbf16, #tpu.memory_space<vmem>>, %arg8: memref<256x128xbf16, #tpu.memory_space<vmem>>, %arg9: memref<8x512xf32, #tpu.memory_space<vmem>>, %arg10: memref<1x8x128xf32, #tpu.memory_space<vmem>>, %arg11: memref<80x256xbf16, #tpu.memory_space<vmem>>, %arg12: memref<48x256xbf16, #tpu.memory_space<vmem>>, %arg13: memref<32x256xbf16, #tpu.memory_space<vmem>>, %arg14: memref<24x256xbf16, #tpu.memory_space<vmem>>) attributes {dimension_semantics = [#tpu.dimension_semantics<parallel>], iteration_bounds = array<i64: 2>, scalar_prefetch = 0 : i64, scratch_operands = 4 : i64, tpu.core_type = #tpu.core_type<tc>, window_params = [{transform_indices = @transform_0, window_bounds = array<i64: 1, 144, 128>}, {pipeline_mode = #tpu.pipeline_mode<synchronous>, transform_indices = @transform_1, window_bounds = array<i64: 3, 128, 256>}, {pipeline_mode = #tpu.pipeline_mode<synchronous>, transform_indices = @transform_2, window_bounds = array<i64: 3, 256, 256>}, {pipeline_mode = #tpu.pipeline_mode<synchronous>, transform_indices = @transform_3, window_bounds = array<i64: 3, 256, 256>}, {pipeline_mode = #tpu.pipeline_mode<synchronous>, transform_indices = @transform_4, window_bounds = array<i64: 3, 256, 256>}, {pipeline_mode = #tpu.pipeline_mode<synchronous>, transform_indices = @transform_5, window_bounds = array<i64: 3, 256, 512>}, {pipeline_mode = #tpu.pipeline_mode<synchronous>, transform_indices = @transform_6, window_bounds = array<i64: 512, 256>}, {pipeline_mode = #tpu.pipeline_mode<synchronous>, transform_indices = @transform_7, window_bounds = array<i64: 256, 128>}, {pipeline_mode = #tpu.pipeline_mode<synchronous>, transform_indices = @transform_8, window_bounds = array<i64: 8, 512>}, {transform_indices = @transform_9, window_bounds = array<i64: 1, 8, 128>}]} {
    %c0 = arith.constant 0 : index
    %c0_0 = arith.constant 0 : index
    %0 = vector.load %arg9[%c0, %c0_0] : memref<8x512xf32, #tpu.memory_space<vmem>>, vector<1x256xf32>
    %c0_1 = arith.constant 0 : index
    %c0_2 = arith.constant 0 : index
    %c0_3 = arith.constant 0 : index
    %1 = vector.load %arg1[%c0_1, %c0_2, %c0_3] : memref<1x144x128xbf16, #tpu.memory_space<vmem>>, vector<1x64x128xbf16>
    %2 = vector.shape_cast %1 : vector<1x64x128xbf16> to vector<64x128xbf16>
    %c0_4 = arith.constant 0 : index
    %c72 = arith.constant 72 : index
    %c0_5 = arith.constant 0 : index
    %3 = vector.load %arg1[%c0_4, %c72, %c0_5] : memref<1x144x128xbf16, #tpu.memory_space<vmem>>, vector<1x64x128xbf16>
    %4 = vector.shape_cast %3 : vector<1x64x128xbf16> to vector<64x128xbf16>
    %c0_6 = arith.constant 0 : index
    %c8 = arith.constant 8 : index
    %c0_7 = arith.constant 0 : index
    %5 = vector.load %arg1[%c0_6, %c8, %c0_7] : memref<1x144x128xbf16, #tpu.memory_space<vmem>>, vector<1x64x128xbf16>
    %6 = vector.shape_cast %5 : vector<1x64x128xbf16> to vector<64x128xbf16>
    %c0_8 = arith.constant 0 : index
    %c0_9 = arith.constant 0 : index
    %c0_10 = arith.constant 0 : index
    %7 = vector.load %arg2[%c0_8, %c0_9, %c0_10] : memref<3x128x256xbf16, #tpu.memory_space<vmem>>, vector<1x128x256xbf16>
    %8 = vector.shape_cast %7 : vector<1x128x256xbf16> to vector<128x256xbf16>
    %cst = arith.constant dense<0.000000e+00> : vector<64x256xf32>
    %9 = tpu.matmul %2, %8, %cst {dimension_numbers = #tpu.dot_dimension_numbers<[1], [0], [0], [1], [0, 0, 1, 1], [], []>} : vector<64x128xbf16>, vector<128x256xbf16>, vector<64x256xf32> -> vector<64x256xf32>
    %c1 = arith.constant 1 : index
    %c0_11 = arith.constant 0 : index
    %c0_12 = arith.constant 0 : index
    %10 = vector.load %arg2[%c1, %c0_11, %c0_12] : memref<3x128x256xbf16, #tpu.memory_space<vmem>>, vector<1x128x256xbf16>
    %11 = vector.shape_cast %10 : vector<1x128x256xbf16> to vector<128x256xbf16>
    %cst_13 = arith.constant dense<0.000000e+00> : vector<64x256xf32>
    %12 = tpu.matmul %4, %11, %cst_13 {dimension_numbers = #tpu.dot_dimension_numbers<[1], [0], [0], [1], [0, 0, 1, 1], [], []>} : vector<64x128xbf16>, vector<128x256xbf16>, vector<64x256xf32> -> vector<64x256xf32>
    %13 = arith.addf %9, %12 : vector<64x256xf32>
    %c2 = arith.constant 2 : index
    %c0_14 = arith.constant 0 : index
    %c0_15 = arith.constant 0 : index
    %14 = vector.load %arg2[%c2, %c0_14, %c0_15] : memref<3x128x256xbf16, #tpu.memory_space<vmem>>, vector<1x128x256xbf16>
    %15 = vector.shape_cast %14 : vector<1x128x256xbf16> to vector<128x256xbf16>
    %cst_16 = arith.constant dense<0.000000e+00> : vector<64x256xf32>
    %16 = tpu.matmul %6, %15, %cst_16 {dimension_numbers = #tpu.dot_dimension_numbers<[1], [0], [0], [1], [0, 0, 1, 1], [], []>} : vector<64x128xbf16>, vector<128x256xbf16>, vector<64x256xf32> -> vector<64x256xf32>
    %17 = arith.addf %13, %16 : vector<64x256xf32>
    %18 = vector.broadcast %0 : vector<1x256xf32> to vector<64x256xf32>
    %19 = arith.addf %17, %18 : vector<64x256xf32>
    %cst_17 = arith.constant 0.000000e+00 : f32
    %20 = vector.broadcast %cst_17 : f32 to vector<64x256xf32>
    %21 = arith.maximumf %19, %20 : vector<64x256xf32>
    %22 = arith.truncf %21 : vector<64x256xf32> to vector<64x256xbf16>
    %cst_18 = arith.constant 0.000000e+00 : bf16
    %23 = vector.broadcast %cst_18 : bf16 to vector<8x256xbf16>
    %c0_19 = arith.constant 0 : index
    %c0_20 = arith.constant 0 : index
    %24 = vector.load %arg11[%c0_19, %c0_20] : memref<80x256xbf16, #tpu.memory_space<vmem>>, vector<8x256xbf16>
    tpu.vector_store %arg11[%c0_19, %c0_20], %23 {strides = array<i32>} : memref<80x256xbf16, #tpu.memory_space<vmem>>, vector<8x256xbf16>,
    %c72_21 = arith.constant 72 : index
    %c0_22 = arith.constant 0 : index
    %25 = vector.load %arg11[%c72_21, %c0_22] : memref<80x256xbf16, #tpu.memory_space<vmem>>, vector<8x256xbf16>
    tpu.vector_store %arg11[%c72_21, %c0_22], %23 {strides = array<i32>} : memref<80x256xbf16, #tpu.memory_space<vmem>>, vector<8x256xbf16>,
    %26 = vector.extract_strided_slice %22 {offsets = [0, 0], sizes = [8, 256], strides = [1, 1]} : vector<64x256xbf16> to vector<8x256xbf16>
    %c40 = arith.constant 40 : index
    %c0_23 = arith.constant 0 : index
    %27 = vector.load %arg11[%c40, %c0_23] : memref<80x256xbf16, #tpu.memory_space<vmem>>, vector<8x256xbf16>
    tpu.vector_store %arg11[%c40, %c0_23], %26 {strides = array<i32>} : memref<80x256xbf16, #tpu.memory_space<vmem>>, vector<8x256xbf16>,
    %28 = vector.extract_strided_slice %22 {offsets = [8, 0], sizes = [8, 256], strides = [1, 1]} : vector<64x256xbf16> to vector<8x256xbf16>
    %c8_24 = arith.constant 8 : index
    %c0_25 = arith.constant 0 : index
    %29 = vector.load %arg11[%c8_24, %c0_25] : memref<80x256xbf16, #tpu.memory_space<vmem>>, vector<8x256xbf16>
    tpu.vector_store %arg11[%c8_24, %c0_25], %28 {strides = array<i32>} : memref<80x256xbf16, #tpu.memory_space<vmem>>, vector<8x256xbf16>,
    %30 = vector.extract_strided_slice %22 {offsets = [16, 0], sizes = [8, 256], strides = [1, 1]} : vector<64x256xbf16> to vector<8x256xbf16>
    %c48 = arith.constant 48 : index
    %c0_26 = arith.constant 0 : index
    %31 = vector.load %arg11[%c48, %c0_26] : memref<80x256xbf16, #tpu.memory_space<vmem>>, vector<8x256xbf16>
    tpu.vector_store %arg11[%c48, %c0_26], %30 {strides = array<i32>} : memref<80x256xbf16, #tpu.memory_space<vmem>>, vector<8x256xbf16>,
    %32 = vector.extract_strided_slice %22 {offsets = [24, 0], sizes = [8, 256], strides = [1, 1]} : vector<64x256xbf16> to vector<8x256xbf16>
    %c16 = arith.constant 16 : index
    %c0_27 = arith.constant 0 : index
    %33 = vector.load %arg11[%c16, %c0_27] : memref<80x256xbf16, #tpu.memory_space<vmem>>, vector<8x256xbf16>
    tpu.vector_store %arg11[%c16, %c0_27], %32 {strides = array<i32>} : memref<80x256xbf16, #tpu.memory_space<vmem>>, vector<8x256xbf16>,
    %34 = vector.extract_strided_slice %22 {offsets = [32, 0], sizes = [8, 256], strides = [1, 1]} : vector<64x256xbf16> to vector<8x256xbf16>
    %c56 = arith.constant 56 : index
    %c0_28 = arith.constant 0 : index
    %35 = vector.load %arg11[%c56, %c0_28] : memref<80x256xbf16, #tpu.memory_space<vmem>>, vector<8x256xbf16>
    tpu.vector_store %arg11[%c56, %c0_28], %34 {strides = array<i32>} : memref<80x256xbf16, #tpu.memory_space<vmem>>, vector<8x256xbf16>,
    %36 = vector.extract_strided_slice %22 {offsets = [40, 0], sizes = [8, 256], strides = [1, 1]} : vector<64x256xbf16> to vector<8x256xbf16>
    %c24 = arith.constant 24 : index
    %c0_29 = arith.constant 0 : index
    %37 = vector.load %arg11[%c24, %c0_29] : memref<80x256xbf16, #tpu.memory_space<vmem>>, vector<8x256xbf16>
    tpu.vector_store %arg11[%c24, %c0_29], %36 {strides = array<i32>} : memref<80x256xbf16, #tpu.memory_space<vmem>>, vector<8x256xbf16>,
    %38 = vector.extract_strided_slice %22 {offsets = [48, 0], sizes = [8, 256], strides = [1, 1]} : vector<64x256xbf16> to vector<8x256xbf16>
    %c64 = arith.constant 64 : index
    %c0_30 = arith.constant 0 : index
    %39 = vector.load %arg11[%c64, %c0_30] : memref<80x256xbf16, #tpu.memory_space<vmem>>, vector<8x256xbf16>
    tpu.vector_store %arg11[%c64, %c0_30], %38 {strides = array<i32>} : memref<80x256xbf16, #tpu.memory_space<vmem>>, vector<8x256xbf16>,
    %40 = vector.extract_strided_slice %22 {offsets = [56, 0], sizes = [8, 256], strides = [1, 1]} : vector<64x256xbf16> to vector<8x256xbf16>
    %c32 = arith.constant 32 : index
    %c0_31 = arith.constant 0 : index
    %41 = vector.load %arg11[%c32, %c0_31] : memref<80x256xbf16, #tpu.memory_space<vmem>>, vector<8x256xbf16>
    tpu.vector_store %arg11[%c32, %c0_31], %40 {strides = array<i32>} : memref<80x256xbf16, #tpu.memory_space<vmem>>, vector<8x256xbf16>,
    %c1_32 = arith.constant 1 : index
    %c0_33 = arith.constant 0 : index
    %42 = vector.load %arg9[%c1_32, %c0_33] : memref<8x512xf32, #tpu.memory_space<vmem>>, vector<1x256xf32>
    %c0_34 = arith.constant 0 : index
    %c0_35 = arith.constant 0 : index
    %43 = vector.load %arg11[%c0_34, %c0_35] : memref<80x256xbf16, #tpu.memory_space<vmem>>, vector<32x256xbf16>
    %c40_36 = arith.constant 40 : index
    %c0_37 = arith.constant 0 : index
    %44 = vector.load %arg11[%c40_36, %c0_37] : memref<80x256xbf16, #tpu.memory_space<vmem>>, vector<32x256xbf16>
    %c8_38 = arith.constant 8 : index
    %c0_39 = arith.constant 0 : index
    %45 = vector.load %arg11[%c8_38, %c0_39] : memref<80x256xbf16, #tpu.memory_space<vmem>>, vector<32x256xbf16>
    %c0_40 = arith.constant 0 : index
    %c0_41 = arith.constant 0 : index
    %c0_42 = arith.constant 0 : index
    %46 = vector.load %arg3[%c0_40, %c0_41, %c0_42] : memref<3x256x256xbf16, #tpu.memory_space<vmem>>, vector<1x256x256xbf16>
    %47 = vector.shape_cast %46 : vector<1x256x256xbf16> to vector<256x256xbf16>
    %cst_43 = arith.constant dense<0.000000e+00> : vector<32x256xf32>
    %48 = tpu.matmul %43, %47, %cst_43 {dimension_numbers = #tpu.dot_dimension_numbers<[1], [0], [0], [1], [0, 0, 1, 1], [], []>} : vector<32x256xbf16>, vector<256x256xbf16>, vector<32x256xf32> -> vector<32x256xf32>
    %c1_44 = arith.constant 1 : index
    %c0_45 = arith.constant 0 : index
    %c0_46 = arith.constant 0 : index
    %49 = vector.load %arg3[%c1_44, %c0_45, %c0_46] : memref<3x256x256xbf16, #tpu.memory_space<vmem>>, vector<1x256x256xbf16>
    %50 = vector.shape_cast %49 : vector<1x256x256xbf16> to vector<256x256xbf16>
    %cst_47 = arith.constant dense<0.000000e+00> : vector<32x256xf32>
    %51 = tpu.matmul %44, %50, %cst_47 {dimension_numbers = #tpu.dot_dimension_numbers<[1], [0], [0], [1], [0, 0, 1, 1], [], []>} : vector<32x256xbf16>, vector<256x256xbf16>, vector<32x256xf32> -> vector<32x256xf32>
    %52 = arith.addf %48, %51 : vector<32x256xf32>
    %c2_48 = arith.constant 2 : index
    %c0_49 = arith.constant 0 : index
    %c0_50 = arith.constant 0 : index
    %53 = vector.load %arg3[%c2_48, %c0_49, %c0_50] : memref<3x256x256xbf16, #tpu.memory_space<vmem>>, vector<1x256x256xbf16>
    %54 = vector.shape_cast %53 : vector<1x256x256xbf16> to vector<256x256xbf16>
    %cst_51 = arith.constant dense<0.000000e+00> : vector<32x256xf32>
    %55 = tpu.matmul %45, %54, %cst_51 {dimension_numbers = #tpu.dot_dimension_numbers<[1], [0], [0], [1], [0, 0, 1, 1], [], []>} : vector<32x256xbf16>, vector<256x256xbf16>, vector<32x256xf32> -> vector<32x256xf32>
    %56 = arith.addf %52, %55 : vector<32x256xf32>
    %57 = vector.broadcast %42 : vector<1x256xf32> to vector<32x256xf32>
    %58 = arith.addf %56, %57 : vector<32x256xf32>
    %cst_52 = arith.constant 0.000000e+00 : f32
    %59 = vector.broadcast %cst_52 : f32 to vector<32x256xf32>
    %60 = arith.maximumf %58, %59 : vector<32x256xf32>
    %61 = arith.truncf %60 : vector<32x256xf32> to vector<32x256xbf16>
    %cst_53 = arith.constant 0.000000e+00 : bf16
    %62 = vector.broadcast %cst_53 : bf16 to vector<8x256xbf16>
    %c0_54 = arith.constant 0 : index
    %c0_55 = arith.constant 0 : index
    %63 = vector.load %arg12[%c0_54, %c0_55] : memref<48x256xbf16, #tpu.memory_space<vmem>>, vector<8x256xbf16>
    tpu.vector_store %arg12[%c0_54, %c0_55], %62 {strides = array<i32>} : memref<48x256xbf16, #tpu.memory_space<vmem>>, vector<8x256xbf16>,
    %c40_56 = arith.constant 40 : index
    %c0_57 = arith.constant 0 : index
    %64 = vector.load %arg12[%c40_56, %c0_57] : memref<48x256xbf16, #tpu.memory_space<vmem>>, vector<8x256xbf16>
    tpu.vector_store %arg12[%c40_56, %c0_57], %62 {strides = array<i32>} : memref<48x256xbf16, #tpu.memory_space<vmem>>, vector<8x256xbf16>,
    %65 = vector.extract_strided_slice %61 {offsets = [0, 0], sizes = [8, 256], strides = [1, 1]} : vector<32x256xbf16> to vector<8x256xbf16>
    %c24_58 = arith.constant 24 : index
    %c0_59 = arith.constant 0 : index
    %66 = vector.load %arg12[%c24_58, %c0_59] : memref<48x256xbf16, #tpu.memory_space<vmem>>, vector<8x256xbf16>
    tpu.vector_store %arg12[%c24_58, %c0_59], %65 {strides = array<i32>} : memref<48x256xbf16, #tpu.memory_space<vmem>>, vector<8x256xbf16>,
    %67 = vector.extract_strided_slice %61 {offsets = [8, 0], sizes = [8, 256], strides = [1, 1]} : vector<32x256xbf16> to vector<8x256xbf16>
    %c8_60 = arith.constant 8 : index
    %c0_61 = arith.constant 0 : index
    %68 = vector.load %arg12[%c8_60, %c0_61] : memref<48x256xbf16, #tpu.memory_space<vmem>>, vector<8x256xbf16>
    tpu.vector_store %arg12[%c8_60, %c0_61], %67 {strides = array<i32>} : memref<48x256xbf16, #tpu.memory_space<vmem>>, vector<8x256xbf16>,
    %69 = vector.extract_strided_slice %61 {offsets = [16, 0], sizes = [8, 256], strides = [1, 1]} : vector<32x256xbf16> to vector<8x256xbf16>
    %c32_62 = arith.constant 32 : index
    %c0_63 = arith.constant 0 : index
    %70 = vector.load %arg12[%c32_62, %c0_63] : memref<48x256xbf16, #tpu.memory_space<vmem>>, vector<8x256xbf16>
    tpu.vector_store %arg12[%c32_62, %c0_63], %69 {strides = array<i32>} : memref<48x256xbf16, #tpu.memory_space<vmem>>, vector<8x256xbf16>,
    %71 = vector.extract_strided_slice %61 {offsets = [24, 0], sizes = [8, 256], strides = [1, 1]} : vector<32x256xbf16> to vector<8x256xbf16>
    %c16_64 = arith.constant 16 : index
    %c0_65 = arith.constant 0 : index
    %72 = vector.load %arg12[%c16_64, %c0_65] : memref<48x256xbf16, #tpu.memory_space<vmem>>, vector<8x256xbf16>
    tpu.vector_store %arg12[%c16_64, %c0_65], %71 {strides = array<i32>} : memref<48x256xbf16, #tpu.memory_space<vmem>>, vector<8x256xbf16>,
    %c2_66 = arith.constant 2 : index
    %c0_67 = arith.constant 0 : index
    %73 = vector.load %arg9[%c2_66, %c0_67] : memref<8x512xf32, #tpu.memory_space<vmem>>, vector<1x256xf32>
    %c0_68 = arith.constant 0 : index
    %c0_69 = arith.constant 0 : index
    %74 = vector.load %arg12[%c0_68, %c0_69] : memref<48x256xbf16, #tpu.memory_space<vmem>>, vector<16x256xbf16>
    %c24_70 = arith.constant 24 : index
    %c0_71 = arith.constant 0 : index
    %75 = vector.load %arg12[%c24_70, %c0_71] : memref<48x256xbf16, #tpu.memory_space<vmem>>, vector<16x256xbf16>
    %c8_72 = arith.constant 8 : index
    %c0_73 = arith.constant 0 : index
    %76 = vector.load %arg12[%c8_72, %c0_73] : memref<48x256xbf16, #tpu.memory_space<vmem>>, vector<16x256xbf16>
    %c0_74 = arith.constant 0 : index
    %c0_75 = arith.constant 0 : index
    %c0_76 = arith.constant 0 : index
    %77 = vector.load %arg4[%c0_74, %c0_75, %c0_76] : memref<3x256x256xbf16, #tpu.memory_space<vmem>>, vector<1x256x256xbf16>
    %78 = vector.shape_cast %77 : vector<1x256x256xbf16> to vector<256x256xbf16>
    %cst_77 = arith.constant dense<0.000000e+00> : vector<16x256xf32>
    %79 = tpu.matmul %74, %78, %cst_77 {dimension_numbers = #tpu.dot_dimension_numbers<[1], [0], [0], [1], [0, 0, 1, 1], [], []>} : vector<16x256xbf16>, vector<256x256xbf16>, vector<16x256xf32> -> vector<16x256xf32>
    %c1_78 = arith.constant 1 : index
    %c0_79 = arith.constant 0 : index
    %c0_80 = arith.constant 0 : index
    %80 = vector.load %arg4[%c1_78, %c0_79, %c0_80] : memref<3x256x256xbf16, #tpu.memory_space<vmem>>, vector<1x256x256xbf16>
    %81 = vector.shape_cast %80 : vector<1x256x256xbf16> to vector<256x256xbf16>
    %cst_81 = arith.constant dense<0.000000e+00> : vector<16x256xf32>
    %82 = tpu.matmul %75, %81, %cst_81 {dimension_numbers = #tpu.dot_dimension_numbers<[1], [0], [0], [1], [0, 0, 1, 1], [], []>} : vector<16x256xbf16>, vector<256x256xbf16>, vector<16x256xf32> -> vector<16x256xf32>
    %83 = arith.addf %79, %82 : vector<16x256xf32>
    %c2_82 = arith.constant 2 : index
    %c0_83 = arith.constant 0 : index
    %c0_84 = arith.constant 0 : index
    %84 = vector.load %arg4[%c2_82, %c0_83, %c0_84] : memref<3x256x256xbf16, #tpu.memory_space<vmem>>, vector<1x256x256xbf16>
    %85 = vector.shape_cast %84 : vector<1x256x256xbf16> to vector<256x256xbf16>
    %cst_85 = arith.constant dense<0.000000e+00> : vector<16x256xf32>
    %86 = tpu.matmul %76, %85, %cst_85 {dimension_numbers = #tpu.dot_dimension_numbers<[1], [0], [0], [1], [0, 0, 1, 1], [], []>} : vector<16x256xbf16>, vector<256x256xbf16>, vector<16x256xf32> -> vector<16x256xf32>
    %87 = arith.addf %83, %86 : vector<16x256xf32>
    %88 = vector.broadcast %73 : vector<1x256xf32> to vector<16x256xf32>
    %89 = arith.addf %87, %88 : vector<16x256xf32>
    %cst_86 = arith.constant 0.000000e+00 : f32
    %90 = vector.broadcast %cst_86 : f32 to vector<16x256xf32>
    %91 = arith.maximumf %89, %90 : vector<16x256xf32>
    %92 = arith.truncf %91 : vector<16x256xf32> to vector<16x256xbf16>
    %cst_87 = arith.constant 0.000000e+00 : bf16
    %93 = vector.broadcast %cst_87 : bf16 to vector<8x256xbf16>
    %c0_88 = arith.constant 0 : index
    %c0_89 = arith.constant 0 : index
    %94 = vector.load %arg13[%c0_88, %c0_89] : memref<32x256xbf16, #tpu.memory_space<vmem>>, vector<8x256xbf16>
    tpu.vector_store %arg13[%c0_88, %c0_89], %93 {strides = array<i32>} : memref<32x256xbf16, #tpu.memory_space<vmem>>, vector<8x256xbf16>,
    %c24_90 = arith.constant 24 : index
    %c0_91 = arith.constant 0 : index
    %95 = vector.load %arg13[%c24_90, %c0_91] : memref<32x256xbf16, #tpu.memory_space<vmem>>, vector<8x256xbf16>
    tpu.vector_store %arg13[%c24_90, %c0_91], %93 {strides = array<i32>} : memref<32x256xbf16, #tpu.memory_space<vmem>>, vector<8x256xbf16>,
    %96 = vector.extract_strided_slice %92 {offsets = [0, 0], sizes = [8, 256], strides = [1, 1]} : vector<16x256xbf16> to vector<8x256xbf16>
    %c16_92 = arith.constant 16 : index
    %c0_93 = arith.constant 0 : index
    %97 = vector.load %arg13[%c16_92, %c0_93] : memref<32x256xbf16, #tpu.memory_space<vmem>>, vector<8x256xbf16>
    tpu.vector_store %arg13[%c16_92, %c0_93], %96 {strides = array<i32>} : memref<32x256xbf16, #tpu.memory_space<vmem>>, vector<8x256xbf16>,
    %98 = vector.extract_strided_slice %92 {offsets = [8, 0], sizes = [8, 256], strides = [1, 1]} : vector<16x256xbf16> to vector<8x256xbf16>
    %c8_94 = arith.constant 8 : index
    %c0_95 = arith.constant 0 : index
    %99 = vector.load %arg13[%c8_94, %c0_95] : memref<32x256xbf16, #tpu.memory_space<vmem>>, vector<8x256xbf16>
    tpu.vector_store %arg13[%c8_94, %c0_95], %98 {strides = array<i32>} : memref<32x256xbf16, #tpu.memory_space<vmem>>, vector<8x256xbf16>,
    %c3 = arith.constant 3 : index
    %c0_96 = arith.constant 0 : index
    %100 = vector.load %arg9[%c3, %c0_96] : memref<8x512xf32, #tpu.memory_space<vmem>>, vector<1x256xf32>
    %c0_97 = arith.constant 0 : index
    %c0_98 = arith.constant 0 : index
    %101 = vector.load %arg13[%c0_97, %c0_98] : memref<32x256xbf16, #tpu.memory_space<vmem>>, vector<8x256xbf16>
    %c16_99 = arith.constant 16 : index
    %c0_100 = arith.constant 0 : index
    %102 = vector.load %arg13[%c16_99, %c0_100] : memref<32x256xbf16, #tpu.memory_space<vmem>>, vector<8x256xbf16>
    %c8_101 = arith.constant 8 : index
    %c0_102 = arith.constant 0 : index
    %103 = vector.load %arg13[%c8_101, %c0_102] : memref<32x256xbf16, #tpu.memory_space<vmem>>, vector<8x256xbf16>
    %c0_103 = arith.constant 0 : index
    %c0_104 = arith.constant 0 : index
    %c0_105 = arith.constant 0 : index
    %104 = vector.load %arg5[%c0_103, %c0_104, %c0_105] : memref<3x256x256xbf16, #tpu.memory_space<vmem>>, vector<1x256x256xbf16>
    %105 = vector.shape_cast %104 : vector<1x256x256xbf16> to vector<256x256xbf16>
    %cst_106 = arith.constant dense<0.000000e+00> : vector<8x256xf32>
    %106 = tpu.matmul %101, %105, %cst_106 {dimension_numbers = #tpu.dot_dimension_numbers<[1], [0], [0], [1], [0, 0, 1, 1], [], []>} : vector<8x256xbf16>, vector<256x256xbf16>, vector<8x256xf32> -> vector<8x256xf32>
    %c1_107 = arith.constant 1 : index
    %c0_108 = arith.constant 0 : index
    %c0_109 = arith.constant 0 : index
    %107 = vector.load %arg5[%c1_107, %c0_108, %c0_109] : memref<3x256x256xbf16, #tpu.memory_space<vmem>>, vector<1x256x256xbf16>
    %108 = vector.shape_cast %107 : vector<1x256x256xbf16> to vector<256x256xbf16>
    %cst_110 = arith.constant dense<0.000000e+00> : vector<8x256xf32>
    %109 = tpu.matmul %102, %108, %cst_110 {dimension_numbers = #tpu.dot_dimension_numbers<[1], [0], [0], [1], [0, 0, 1, 1], [], []>} : vector<8x256xbf16>, vector<256x256xbf16>, vector<8x256xf32> -> vector<8x256xf32>
    %110 = arith.addf %106, %109 : vector<8x256xf32>
    %c2_111 = arith.constant 2 : index
    %c0_112 = arith.constant 0 : index
    %c0_113 = arith.constant 0 : index
    %111 = vector.load %arg5[%c2_111, %c0_112, %c0_113] : memref<3x256x256xbf16, #tpu.memory_space<vmem>>, vector<1x256x256xbf16>
    %112 = vector.shape_cast %111 : vector<1x256x256xbf16> to vector<256x256xbf16>
    %cst_114 = arith.constant dense<0.000000e+00> : vector<8x256xf32>
    %113 = tpu.matmul %103, %112, %cst_114 {dimension_numbers = #tpu.dot_dimension_numbers<[1], [0], [0], [1], [0, 0, 1, 1], [], []>} : vector<8x256xbf16>, vector<256x256xbf16>, vector<8x256xf32> -> vector<8x256xf32>
    %114 = arith.addf %110, %113 : vector<8x256xf32>
    %115 = vector.broadcast %100 : vector<1x256xf32> to vector<8x256xf32>
    %116 = arith.addf %114, %115 : vector<8x256xf32>
    %cst_115 = arith.constant 0.000000e+00 : f32
    %117 = vector.broadcast %cst_115 : f32 to vector<8x256xf32>
    %118 = arith.maximumf %116, %117 : vector<8x256xf32>
    %119 = arith.truncf %118 : vector<8x256xf32> to vector<8x256xbf16>
    %cst_116 = arith.constant 0.000000e+00 : bf16
    %120 = vector.broadcast %cst_116 : bf16 to vector<8x256xbf16>
    %c0_117 = arith.constant 0 : index
    %c0_118 = arith.constant 0 : index
    %121 = vector.load %arg14[%c0_117, %c0_118] : memref<24x256xbf16, #tpu.memory_space<vmem>>, vector<8x256xbf16>
    tpu.vector_store %arg14[%c0_117, %c0_118], %120 {strides = array<i32>} : memref<24x256xbf16, #tpu.memory_space<vmem>>, vector<8x256xbf16>,
    %c8_119 = arith.constant 8 : index
    %c0_120 = arith.constant 0 : index
    %122 = vector.load %arg14[%c8_119, %c0_120] : memref<24x256xbf16, #tpu.memory_space<vmem>>, vector<8x256xbf16>
    tpu.vector_store %arg14[%c8_119, %c0_120], %120 {strides = array<i32>} : memref<24x256xbf16, #tpu.memory_space<vmem>>, vector<8x256xbf16>,
    %c16_121 = arith.constant 16 : index
    %c0_122 = arith.constant 0 : index
    %123 = vector.load %arg14[%c16_121, %c0_122] : memref<24x256xbf16, #tpu.memory_space<vmem>>, vector<8x256xbf16>
    tpu.vector_store %arg14[%c16_121, %c0_122], %119 {strides = array<i32>} : memref<24x256xbf16, #tpu.memory_space<vmem>>, vector<8x256xbf16>,
    %c4 = arith.constant 4 : index
    %c0_123 = arith.constant 0 : index
    %124 = vector.load %arg9[%c4, %c0_123] : memref<8x512xf32, #tpu.memory_space<vmem>>, vector<1x512xf32>
    %c0_124 = arith.constant 0 : index
    %c0_125 = arith.constant 0 : index
    %125 = vector.load %arg14[%c0_124, %c0_125] : memref<24x256xbf16, #tpu.memory_space<vmem>>, vector<8x256xbf16>
    %c16_126 = arith.constant 16 : index
    %c0_127 = arith.constant 0 : index
    %126 = vector.load %arg14[%c16_126, %c0_127] : memref<24x256xbf16, #tpu.memory_space<vmem>>, vector<8x256xbf16>
    %c8_128 = arith.constant 8 : index
    %c0_129 = arith.constant 0 : index
    %127 = vector.load %arg14[%c8_128, %c0_129] : memref<24x256xbf16, #tpu.memory_space<vmem>>, vector<8x256xbf16>
    %c0_130 = arith.constant 0 : index
    %c0_131 = arith.constant 0 : index
    %c0_132 = arith.constant 0 : index
    %128 = vector.load %arg6[%c0_130, %c0_131, %c0_132] : memref<3x256x512xbf16, #tpu.memory_space<vmem>>, vector<1x256x512xbf16>
    %129 = vector.shape_cast %128 : vector<1x256x512xbf16> to vector<256x512xbf16>
    %cst_133 = arith.constant dense<0.000000e+00> : vector<8x512xf32>
    %130 = tpu.matmul %125, %129, %cst_133 {dimension_numbers = #tpu.dot_dimension_numbers<[1], [0], [0], [1], [0, 0, 1, 1], [], []>} : vector<8x256xbf16>, vector<256x512xbf16>, vector<8x512xf32> -> vector<8x512xf32>
    %c1_134 = arith.constant 1 : index
    %c0_135 = arith.constant 0 : index
    %c0_136 = arith.constant 0 : index
    %131 = vector.load %arg6[%c1_134, %c0_135, %c0_136] : memref<3x256x512xbf16, #tpu.memory_space<vmem>>, vector<1x256x512xbf16>
    %132 = vector.shape_cast %131 : vector<1x256x512xbf16> to vector<256x512xbf16>
    %cst_137 = arith.constant dense<0.000000e+00> : vector<8x512xf32>
    %133 = tpu.matmul %126, %132, %cst_137 {dimension_numbers = #tpu.dot_dimension_numbers<[1], [0], [0], [1], [0, 0, 1, 1], [], []>} : vector<8x256xbf16>, vector<256x512xbf16>, vector<8x512xf32> -> vector<8x512xf32>
    %134 = arith.addf %130, %133 : vector<8x512xf32>
    %c2_138 = arith.constant 2 : index
    %c0_139 = arith.constant 0 : index
    %c0_140 = arith.constant 0 : index
    %135 = vector.load %arg6[%c2_138, %c0_139, %c0_140] : memref<3x256x512xbf16, #tpu.memory_space<vmem>>, vector<1x256x512xbf16>
    %136 = vector.shape_cast %135 : vector<1x256x512xbf16> to vector<256x512xbf16>
    %cst_141 = arith.constant dense<0.000000e+00> : vector<8x512xf32>
    %137 = tpu.matmul %127, %136, %cst_141 {dimension_numbers = #tpu.dot_dimension_numbers<[1], [0], [0], [1], [0, 0, 1, 1], [], []>} : vector<8x256xbf16>, vector<256x512xbf16>, vector<8x512xf32> -> vector<8x512xf32>
    %138 = arith.addf %134, %137 : vector<8x512xf32>
    %139 = vector.broadcast %124 : vector<1x512xf32> to vector<8x512xf32>
    %140 = arith.addf %138, %139 : vector<8x512xf32>
    %cst_142 = arith.constant 0.000000e+00 : f32
    %141 = vector.broadcast %cst_142 : f32 to vector<8x512xf32>
    %142 = arith.maximumf %140, %141 : vector<8x512xf32>
    %143 = arith.truncf %142 : vector<8x512xf32> to vector<8x512xbf16>
    %c0_143 = arith.constant 0 : index
    %c0_144 = arith.constant 0 : index
    %144 = vector.load %arg7[%c0_143, %c0_144] : memref<512x256xbf16, #tpu.memory_space<vmem>>, vector<512x256xbf16>
    %cst_145 = arith.constant dense<0.000000e+00> : vector<8x256xf32>
    %145 = tpu.matmul %143, %144, %cst_145 {dimension_numbers = #tpu.dot_dimension_numbers<[1], [0], [0], [1], [0, 0, 1, 1], [], []>} : vector<8x512xbf16>, vector<512x256xbf16>, vector<8x256xf32> -> vector<8x256xf32>
    %c5 = arith.constant 5 : index
    %c0_146 = arith.constant 0 : index
    %146 = vector.load %arg9[%c5, %c0_146] : memref<8x512xf32, #tpu.memory_space<vmem>>, vector<1x256xf32>
    %147 = vector.broadcast %146 : vector<1x256xf32> to vector<8x256xf32>
    %148 = arith.addf %145, %147 : vector<8x256xf32>
    %cst_147 = arith.constant 0.000000e+00 : f32
    %149 = vector.broadcast %cst_147 : f32 to vector<8x256xf32>
    %150 = arith.maximumf %148, %149 : vector<8x256xf32>
    %151 = arith.truncf %150 : vector<8x256xf32> to vector<8x256xbf16>
    %c0_148 = arith.constant 0 : index
    %c0_149 = arith.constant 0 : index
    %152 = vector.load %arg8[%c0_148, %c0_149] : memref<256x128xbf16, #tpu.memory_space<vmem>>, vector<256x128xbf16>
    %cst_150 = arith.constant dense<0.000000e+00> : vector<8x128xf32>
    %153 = tpu.matmul %151, %152, %cst_150 {dimension_numbers = #tpu.dot_dimension_numbers<[1], [0], [0], [1], [0, 0, 1, 1], [], []>} : vector<8x256xbf16>, vector<256x128xbf16>, vector<8x128xf32> -> vector<8x128xf32>
    %c6 = arith.constant 6 : index
    %c0_151 = arith.constant 0 : index
    %154 = vector.load %arg9[%c6, %c0_151] : memref<8x512xf32, #tpu.memory_space<vmem>>, vector<1x128xf32>
    %155 = vector.broadcast %154 : vector<1x128xf32> to vector<8x128xf32>
    %156 = arith.addf %153, %155 : vector<8x128xf32>
    %cst_152 = arith.constant dense<0xFF800000> : vector<8xf32>
    %157 = vector.multi_reduction <maximumf>, %156, %cst_152 [1] : vector<8x128xf32> to vector<8xf32>
    %158 = vector.shape_cast %157 : vector<8xf32> to vector<8x1xf32>
    %159 = vector.broadcast %158 : vector<8x1xf32> to vector<8x128xf32>
    %160 = arith.subf %156, %159 : vector<8x128xf32>
    %161 = math.exp %160 : vector<8x128xf32>
    %cst_153 = arith.constant dense<0.000000e+00> : vector<8xf32>
    %162 = vector.multi_reduction <add>, %161, %cst_153 [1] : vector<8x128xf32> to vector<8xf32>
    %163 = vector.shape_cast %162 : vector<8xf32> to vector<8x1xf32>
    %164 = math.log %163 : vector<8x1xf32>
    %165 = arith.addf %164, %158 : vector<8x1xf32>
    %166 = vector.broadcast %165 : vector<8x1xf32> to vector<8x128xf32>
    %167 = arith.subf %156, %166 : vector<8x128xf32>
    %c0_154 = arith.constant 0 : index
    %c0_155 = arith.constant 0 : index
    %c0_156 = arith.constant 0 : index
    %168 = vector.load %arg10[%c0_154, %c0_155, %c0_156] : memref<1x8x128xf32, #tpu.memory_space<vmem>>, vector<1x8x128xf32>
    %169 = vector.shape_cast %168 : vector<1x8x128xf32> to vector<8x128xf32>
    %170 = vector.shape_cast %167 : vector<8x128xf32> to vector<1x8x128xf32>
    tpu.vector_store %arg10[%c0_154, %c0_155, %c0_156], %170 {strides = array<i32>} : memref<1x8x128xf32, #tpu.memory_space<vmem>>, vector<1x8x128xf32>,
    return
  }
  func.func @transform_0(%arg0: i32) -> (i32, i32, i32) {
    %c0_i32 = arith.constant 0 : i32
    %c0_i32_0 = arith.constant 0 : i32
    %c0_i32_1 = arith.constant 0 : i32
    return %arg0, %c0_i32, %c0_i32_0 : i32, i32, i32
  }
  func.func @transform_1(%arg0: i32) -> (i32, i32, i32) {
    %c0_i32 = arith.constant 0 : i32
    %c0_i32_0 = arith.constant 0 : i32
    %c0_i32_1 = arith.constant 0 : i32
    %c0_i32_2 = arith.constant 0 : i32
    return %c0_i32, %c0_i32_0, %c0_i32_1 : i32, i32, i32
  }
  func.func @transform_2(%arg0: i32) -> (i32, i32, i32) {
    %c0_i32 = arith.constant 0 : i32
    %c0_i32_0 = arith.constant 0 : i32
    %c0_i32_1 = arith.constant 0 : i32
    %c0_i32_2 = arith.constant 0 : i32
    return %c0_i32, %c0_i32_0, %c0_i32_1 : i32, i32, i32
  }
  func.func @transform_3(%arg0: i32) -> (i32, i32, i32) {
    %c0_i32 = arith.constant 0 : i32
    %c0_i32_0 = arith.constant 0 : i32
    %c0_i32_1 = arith.constant 0 : i32
    %c0_i32_2 = arith.constant 0 : i32
    return %c0_i32, %c0_i32_0, %c0_i32_1 : i32, i32, i32
  }
  func.func @transform_4(%arg0: i32) -> (i32, i32, i32) {
    %c0_i32 = arith.constant 0 : i32
    %c0_i32_0 = arith.constant 0 : i32
    %c0_i32_1 = arith.constant 0 : i32
    %c0_i32_2 = arith.constant 0 : i32
    return %c0_i32, %c0_i32_0, %c0_i32_1 : i32, i32, i32
  }
  func.func @transform_5(%arg0: i32) -> (i32, i32, i32) {
    %c0_i32 = arith.constant 0 : i32
    %c0_i32_0 = arith.constant 0 : i32
    %c0_i32_1 = arith.constant 0 : i32
    %c0_i32_2 = arith.constant 0 : i32
    return %c0_i32, %c0_i32_0, %c0_i32_1 : i32, i32, i32
  }
  func.func @transform_6(%arg0: i32) -> (i32, i32) {
    %c0_i32 = arith.constant 0 : i32
    %c0_i32_0 = arith.constant 0 : i32
    %c0_i32_1 = arith.constant 0 : i32
    return %c0_i32, %c0_i32_0 : i32, i32
  }
  func.func @transform_7(%arg0: i32) -> (i32, i32) {
    %c0_i32 = arith.constant 0 : i32
    %c0_i32_0 = arith.constant 0 : i32
    %c0_i32_1 = arith.constant 0 : i32
    return %c0_i32, %c0_i32_0 : i32, i32
  }
  func.func @transform_8(%arg0: i32) -> (i32, i32) {
    %c0_i32 = arith.constant 0 : i32
    %c0_i32_0 = arith.constant 0 : i32
    %c0_i32_1 = arith.constant 0 : i32
    return %c0_i32, %c0_i32_0 : i32, i32
  }
  func.func @transform_9(%arg0: i32) -> (i32, i32, i32) {
    %c0_i32 = arith.constant 0 : i32
    %c0_i32_0 = arith.constant 0 : i32
    %c0_i32_1 = arith.constant 0 : i32
    return %arg0, %c0_i32, %c0_i32_0 : i32, i32, i32
  }
}

</mosaic_0001>

<llo_original>
// kernel: _lambda_.1
$region0: #{_lambda_.1}
  #allocation0 [shape = 'u32[]', space=smem, size = 0x4, offset = 0x4, fixed_abs, tag = 'smem constant byte address 0x4 - core index']
  #allocation1 [shape = 'u32[144,128]{1,0:T(1,128)}', space=vmem, size = 0x12000, scoped, tag = 'internal scratch']
  #allocation2 [shape = 'bf16[80,256]{1,0:T(16,128)(2,1)}', space=vmem, size = 0xa000, scoped, tag = 'scratch operand']
  #allocation3 [shape = 'bf16[48,256]{1,0:T(16,128)(2,1)}', space=vmem, size = 0x6000, scoped, tag = 'scratch operand']
  #allocation4 [shape = 'bf16[32,256]{1,0:T(16,128)(2,1)}', space=vmem, size = 0x4000, scoped, tag = 'scratch operand']
  #allocation5 [shape = 'bf16[24,256]{1,0:T(8,128)(2,1)}', space=vmem, size = 0x3000, scoped, tag = 'scratch operand']
  %s0 = inlined_call_operand.vmem [shape: bf16[2,144,128], index: 0, kind: input, shape index: {}]
  %s1 = inlined_call_operand.vmem [shape: bf16[3,128,256], index: 1, kind: input, shape index: {}]
  %s2 = inlined_call_operand.vmem [shape: bf16[3,256,256], index: 2, kind: input, shape index: {}]
  %s3 = inlined_call_operand.vmem [shape: bf16[3,256,256], index: 3, kind: input, shape index: {}]
  %s4 = inlined_call_operand.vmem [shape: bf16[3,256,256], index: 4, kind: input, shape index: {}]
  %s5 = inlined_call_operand.vmem [shape: bf16[3,256,512], index: 5, kind: input, shape index: {}]
  %s6 = inlined_call_operand.vmem [shape: bf16[512,256], index: 6, kind: input, shape index: {}]
  %s7 = inlined_call_operand.vmem [shape: bf16[256,128], index: 7, kind: input, shape index: {}]
  %s8 = inlined_call_operand.vmem [shape: f32[8,512], index: 8, kind: input, shape index: {}]
  %s9 = inlined_call_operand.hbm [shape: f32[2,8,128], index: 9, kind: output, shape index: {}]
  %s10 = sld [smem:[#allocation0]]
  $region69: #{_lambda_.1} parent=0
    _
  %s12 = ssub.s32 1, %s10
  %s13 = scalar_select 0, %s12, %s10
  $region1: #{_lambda_.1} parent=0
    #allocation6 [shape = 'u8[8192]{0}', space=vmem, size = 0x2000, scoped, tag = 'output window, operand 0']
    #allocation7 [shape = 's32[2]{0}', space=sflag, size = 0x8, scoped, tag = 'scoped memory for _lambda_.1']
    %14 = vsyncpa [#allocation7], 0
    %s15 = scalar_lea.sflag [#allocation7], 1
    %16 = vsyncpa %s15, 0
    loop: start=0, step=1, limit=4
    $region2: #{_lambda_.1} parent=1 // loop_pre_header
      _
    $region3: #{_lambda_.1} parent=1 // loop_header
      %s18 = sphi 0, %s22
      %p19 = scmp.ge.s32.totalorder %s18, 4
      %s28 = sphi 0, %s30
      %s31 = sphi 0, %s28
      %s32 = sphi 0, %s31
      %s48 = sphi 0, %s32
      %s52 = sphi 0, %s52
      %s54 = sphi 0, %s52
      %s55 = sphi 0, %s54
      %s69 = sphi 0, %s55
      %s73 = sphi 0, %s73
      %s75 = sphi 0, %s73
      %s76 = sphi 0, %s75
      %s90 = sphi 0, %s76
      %s94 = sphi 0, %s94
      %s96 = sphi 0, %s94
      %s97 = sphi 0, %s96
      %s111 = sphi 0, %s97
      %s115 = sphi 0, %s115
      %s117 = sphi 0, %s115
      %s118 = sphi 0, %s117
      %s132 = sphi 0, %s118
      %s136 = sphi 0, %s136
      %s138 = sphi 0, %s136
      %s139 = sphi 0, %s138
      %s153 = sphi 0, %s139
      %s157 = sphi 0, %s157
      %s159 = sphi 0, %s157
      %s160 = sphi 0, %s159
      %s174 = sphi 0, %s160
      %s178 = sphi 0, %s178
      %s180 = sphi 0, %s178
      %s181 = sphi 0, %s180
      %s195 = sphi 0, %s181
      %s199 = sphi 0, %s199
      %s201 = sphi 0, %s199
      %s202 = sphi 0, %s201
      %s216 = sphi 0, %s202
      %s222 = sphi 0, %s224
      %s225 = sphi 0, %s222
      %s226 = sphi 0, %s225
      %s242 = sphi 0, %s226
    $region4: #{_lambda_.1} parent=1 // loop_header_branch
      %21 = sbr.rel (%p19) target = $region8
    $region5: #{_lambda_.1} parent=1 // loop_body
      %s23 = ssub.s32 %s18, 1
      %s24 = ssub.s32 %s18, 2
      %s25 = sadd.s32 %s18, 1
      %s26 = ssub.s32 %s18, %s25
      %p27 = scmp.eq.s32.totalorder %s26, 0
      %s29 = sadd.s32 %s28, 1
      %s30 = scalar_select %p27, %s28, %s29
      %p33 = pneg %p27
      %p34 = scmp.eq.s32.totalorder %s18, 1
      %p35 = por %p33, %p34
      %p36 = scmp.ne.s32.totalorder %s28, %s31
      %p37 = scmp.eq.s32.totalorder %s18, 0
      %p38 = por %p36, %p37
      %p39 = scmp.ne.s32.totalorder %s28, %s31
      %p40 = scmp.eq.s32.totalorder %s23, 1
      %p41 = por %p39, %p40
      %p42 = scmp.ne.s32.totalorder %s31, %s32
      %p43 = scmp.eq.s32.totalorder %s23, 0
      %p44 = por %p42, %p43
      %p45 = scmp.ne.s32.totalorder %s31, %s32
      %p46 = scmp.eq.s32.totalorder %s24, 1
      %p47 = por %p45, %p46
      %p49 = scmp.ne.s32.totalorder %s32, %s48
      %p50 = scmp.eq.s32.totalorder %s24, 0
      %p51 = por %p49, %p50
      %s53 = sadd.s32 %s52, 1
      %p56 = scmp.eq.s32.totalorder %s18, 1
      %p57 = scmp.ne.s32.totalorder %s52, %s54
      %p58 = scmp.eq.s32.totalorder %s18, 0
      %p59 = por %p57, %p58
      %p60 = scmp.ne.s32.totalorder %s52, %s54
      %p61 = scmp.eq.s32.totalorder %s23, 1
      %p62 = por %p60, %p61
      %p63 = scmp.ne.s32.totalorder %s54, %s55
      %p64 = scmp.eq.s32.totalorder %s23, 0
      %p65 = por %p63, %p64
      %p66 = scmp.ne.s32.totalorder %s54, %s55
      %p67 = scmp.eq.s32.totalorder %s24, 1
      %p68 = por %p66, %p67
      %p70 = scmp.ne.s32.totalorder %s55, %s69
      %p71 = scmp.eq.s32.totalorder %s24, 0
      %p72 = por %p70, %p71
      %s74 = sadd.s32 %s73, 1
      %p77 = scmp.eq.s32.totalorder %s18, 1
      %p78 = scmp.ne.s32.totalorder %s73, %s75
      %p79 = scmp.eq.s32.totalorder %s18, 0
      %p80 = por %p78, %p79
      %p81 = scmp.ne.s32.totalorder %s73, %s75
      %p82 = scmp.eq.s32.totalorder %s23, 1
      %p83 = por %p81, %p82
      %p84 = scmp.ne.s32.totalorder %s75, %s76
      %p85 = scmp.eq.s32.totalorder %s23, 0
      %p86 = por %p84, %p85
      %p87 = scmp.ne.s32.totalorder %s75, %s76
      %p88 = scmp.eq.s32.totalorder %s24, 1
      %p89 = por %p87, %p88
      %p91 = scmp.ne.s32.totalorder %s76, %s90
      %p92 = scmp.eq.s32.totalorder %s24, 0
      %p93 = por %p91, %p92
      %s95 = sadd.s32 %s94, 1
      %p98 = scmp.eq.s32.totalorder %s18, 1
      %p99 = scmp.ne.s32.totalorder %s94, %s96
      %p100 = scmp.eq.s32.totalorder %s18, 0
      %p101 = por %p99, %p100
      %p102 = scmp.ne.s32.totalorder %s94, %s96
      %p103 = scmp.eq.s32.totalorder %s23, 1
      %p104 = por %p102, %p103
      %p105 = scmp.ne.s32.totalorder %s96, %s97
      %p106 = scmp.eq.s32.totalorder %s23, 0
      %p107 = por %p105, %p106
      %p108 = scmp.ne.s32.totalorder %s96, %s97
      %p109 = scmp.eq.s32.totalorder %s24, 1
      %p110 = por %p108, %p109
      %p112 = scmp.ne.s32.totalorder %s97, %s111
      %p113 = scmp.eq.s32.totalorder %s24, 0
      %p114 = por %p112, %p113
      %s116 = sadd.s32 %s115, 1
      %p119 = scmp.eq.s32.totalorder %s18, 1
      %p120 = scmp.ne.s32.totalorder %s115, %s117
      %p121 = scmp.eq.s32.totalorder %s18, 0
      %p122 = por %p120, %p121
      %p123 = scmp.ne.s32.totalorder %s115, %s117
      %p124 = scmp.eq.s32.totalorder %s23, 1
      %p125 = por %p123, %p124
      %p126 = scmp.ne.s32.totalorder %s117, %s118
      %p127 = scmp.eq.s32.totalorder %s23, 0
      %p128 = por %p126, %p127
      %p129 = scmp.ne.s32.totalorder %s117, %s118
      %p130 = scmp.eq.s32.totalorder %s24, 1
      %p131 = por %p129, %p130
      %p133 = scmp.ne.s32.totalorder %s118, %s132
      %p134 = scmp.eq.s32.totalorder %s24, 0
      %p135 = por %p133, %p134
      %s137 = sadd.s32 %s136, 1
      %p140 = scmp.eq.s32.totalorder %s18, 1
      %p141 = scmp.ne.s32.totalorder %s136, %s138
      %p142 = scmp.eq.s32.totalorder %s18, 0
      %p143 = por %p141, %p142
      %p144 = scmp.ne.s32.totalorder %s136, %s138
      %p145 = scmp.eq.s32.totalorder %s23, 1
      %p146 = por %p144, %p145
      %p147 = scmp.ne.s32.totalorder %s138, %s139
      %p148 = scmp.eq.s32.totalorder %s23, 0
      %p149 = por %p147, %p148
      %p150 = scmp.ne.s32.totalorder %s138, %s139
      %p151 = scmp.eq.s32.totalorder %s24, 1
      %p152 = por %p150, %p151
      %p154 = scmp.ne.s32.totalorder %s139, %s153
      %p155 = scmp.eq.s32.totalorder %s24, 0
      %p156 = por %p154, %p155
      %s158 = sadd.s32 %s157, 1
      %p161 = scmp.eq.s32.totalorder %s18, 1
      %p162 = scmp.ne.s32.totalorder %s157, %s159
      %p163 = scmp.eq.s32.totalorder %s18, 0
      %p164 = por %p162, %p163
      %p165 = scmp.ne.s32.totalorder %s157, %s159
      %p166 = scmp.eq.s32.totalorder %s23, 1
      %p167 = por %p165, %p166
      %p168 = scmp.ne.s32.totalorder %s159, %s160
      %p169 = scmp.eq.s32.totalorder %s23, 0
      %p170 = por %p168, %p169
      %p171 = scmp.ne.s32.totalorder %s159, %s160
      %p172 = scmp.eq.s32.totalorder %s24, 1
      %p173 = por %p171, %p172
      %p175 = scmp.ne.s32.totalorder %s160, %s174
      %p176 = scmp.eq.s32.totalorder %s24, 0
      %p177 = por %p175, %p176
      %s179 = sadd.s32 %s178, 1
      %p182 = scmp.eq.s32.totalorder %s18, 1
      %p183 = scmp.ne.s32.totalorder %s178, %s180
      %p184 = scmp.eq.s32.totalorder %s18, 0
      %p185 = por %p183, %p184
      %p186 = scmp.ne.s32.totalorder %s178, %s180
      %p187 = scmp.eq.s32.totalorder %s23, 1
      %p188 = por %p186, %p187
      %p189 = scmp.ne.s32.totalorder %s180, %s181
      %p190 = scmp.eq.s32.totalorder %s23, 0
      %p191 = por %p189, %p190
      %p192 = scmp.ne.s32.totalorder %s180, %s181
      %p193 = scmp.eq.s32.totalorder %s24, 1
      %p194 = por %p192, %p193
      %p196 = scmp.ne.s32.totalorder %s181, %s195
      %p197 = scmp.eq.s32.totalorder %s24, 0
      %p198 = por %p196, %p197
      %s200 = sadd.s32 %s199, 1
      %p203 = scmp.eq.s32.totalorder %s18, 1
      %p204 = scmp.ne.s32.totalorder %s199, %s201
      %p205 = scmp.eq.s32.totalorder %s18, 0
      %p206 = por %p204, %p205
      %p207 = scmp.ne.s32.totalorder %s199, %s201
      %p208 = scmp.eq.s32.totalorder %s23, 1
      %p209 = por %p207, %p208
      %p210 = scmp.ne.s32.totalorder %s201, %s202
      %p211 = scmp.eq.s32.totalorder %s23, 0
      %p212 = por %p210, %p211
      %p213 = scmp.ne.s32.totalorder %s201, %s202
      %p214 = scmp.eq.s32.totalorder %s24, 1
      %p215 = por %p213, %p214
      %p217 = scmp.ne.s32.totalorder %s202, %s216
      %p218 = scmp.eq.s32.totalorder %s24, 0
      %p219 = por %p217, %p218
      %s220 = ssub.s32 %s18, %s25
      %p221 = scmp.eq.s32.totalorder %s220, 0
      %s223 = sadd.s32 %s222, 1
      %s224 = scalar_select %p221, %s222, %s223
      %p227 = pneg %p221
      %p228 = scmp.eq.s32.totalorder %s18, 1
      %p229 = por %p227, %p228
      %p230 = scmp.ne.s32.totalorder %s222, %s225
      %p231 = scmp.eq.s32.totalorder %s18, 0
      %p232 = por %p230, %p231
      %p233 = scmp.ne.s32.totalorder %s222, %s225
      %p234 = scmp.eq.s32.totalorder %s23, 1
      %p235 = por %p233, %p234
      %p236 = scmp.ne.s32.totalorder %s225, %s226
      %p237 = scmp.eq.s32.totalorder %s23, 0
      %p238 = por %p236, %p237
      %p239 = scmp.ne.s32.totalorder %s225, %s226
      %p240 = scmp.eq.s32.totalorder %s24, 1
      %p241 = por %p239, %p240
      %p243 = scmp.ne.s32.totalorder %s226, %s242
      %p244 = scmp.eq.s32.totalorder %s24, 0
      %p245 = por %p243, %p244
      %p246 = scmp.le.s32.totalorder 1, %s18
      %p247 = scmp.lt.s32.totalorder %s18, 3
      %p248 = pnand %p246, %p247
      %p249 = pneg %p248
      // Predicated region
      $region9: #{_lambda_.1} parent=5 // pred_check
        _
      $region10: #{_lambda_.1} parent=5 // pred_check_branch
        %251 = sbr.rel (%p248) target = $region12
      $region11: #{_lambda_.1} parent=5 // pred_region
        %s252 = ssub.s32 %s18, 1
        // Predicated region
        $region13: #{_lambda_.1} parent=11 // pred_check
          %p253 = pneg %p65
        $region14: #{_lambda_.1} parent=11 // pred_check_branch
          %255 = sbr.rel (%p253) target = $region16
        $region15: #{_lambda_.1} parent=11 // pred_region
          _
        $region16: #{_lambda_.1} parent=11 // pred_fallthru
          _
        // Predicated region
        $region17: #{_lambda_.1} parent=11 // pred_check
          %p256 = pneg %p86
        $region18: #{_lambda_.1} parent=11 // pred_check_branch
          %258 = sbr.rel (%p256) target = $region20
        $region19: #{_lambda_.1} parent=11 // pred_region
          _
        $region20: #{_lambda_.1} parent=11 // pred_fallthru
          _
        // Predicated region
        $region21: #{_lambda_.1} parent=11 // pred_check
          %p259 = pneg %p107
        $region22: #{_lambda_.1} parent=11 // pred_check_branch
          %261 = sbr.rel (%p259) target = $region24
        $region23: #{_lambda_.1} parent=11 // pred_region
          _
        $region24: #{_lambda_.1} parent=11 // pred_fallthru
          _
        // Predicated region
        $region25: #{_lambda_.1} parent=11 // pred_check
          %p262 = pneg %p128
        $region26: #{_lambda_.1} parent=11 // pred_check_branch
          %264 = sbr.rel (%p262) target = $region28
        $region27: #{_lambda_.1} parent=11 // pred_region
          _
        $region28: #{_lambda_.1} parent=11 // pred_fallthru
          _
        // Predicated region
        $region29: #{_lambda_.1} parent=11 // pred_check
          %p265 = pneg %p149
        $region30: #{_lambda_.1} parent=11 // pred_check_branch
          %267 = sbr.rel (%p265) target = $region32
        $region31: #{_lambda_.1} parent=11 // pred_region
          _
        $region32: #{_lambda_.1} parent=11 // pred_fallthru
          _
        // Predicated region
        $region33: #{_lambda_.1} parent=11 // pred_check
          %p268 = pneg %p170
        $region34: #{_lambda_.1} parent=11 // pred_check_branch
          %270 = sbr.rel (%p268) target = $region36
        $region35: #{_lambda_.1} parent=11 // pred_region
          _
        $region36: #{_lambda_.1} parent=11 // pred_fallthru
          _
        // Predicated region
        $region37: #{_lambda_.1} parent=11 // pred_check
          %p271 = pneg %p191
        $region38: #{_lambda_.1} parent=11 // pred_check_branch
          %273 = sbr.rel (%p271) target = $region40
        $region39: #{_lambda_.1} parent=11 // pred_region
          _
        $region40: #{_lambda_.1} parent=11 // pred_fallthru
          _
        // Predicated region
        $region41: #{_lambda_.1} parent=11 // pred_check
          %p274 = pneg %p212
        $region42: #{_lambda_.1} parent=11 // pred_check_branch
          %276 = sbr.rel (%p274) target = $region44
        $region43: #{_lambda_.1} parent=11 // pred_region
          _
        $region44: #{_lambda_.1} parent=11 // pred_fallthru
          _
      $region12: #{_lambda_.1} parent=5 // pred_fallthru
        _
      %p277 = scmp.lt.s32.totalorder %s18, 2
      // Predicated region
      $region45: #{_lambda_.1} parent=5 // pred_check
        %p278 = pneg %p277
      $region46: #{_lambda_.1} parent=5 // pred_check_branch
        %280 = sbr.rel (%p278) target = $region48
      $region47: #{_lambda_.1} parent=5 // pred_region
        // Predicated region
        $region49: #{_lambda_.1} parent=47 // pred_check
          %p281 = pneg %p38
        $region50: #{_lambda_.1} parent=47 // pred_check_branch
          %283 = sbr.rel (%p281) target = $region52
        $region51: #{_lambda_.1} parent=47 // pred_region
          %p284 = scmp.lt.s32.totalorder %s18, 1
          %s285 = scalar_select %p284, %s18, 1
          %s286 = smul.addr %s285, 18
          %s287 = smul.addr %s286, 4
          %s288 = scalar_lea.vmem %s0, %s287
        $region52: #{_lambda_.1} parent=47 // pred_fallthru
          _
      $region48: #{_lambda_.1} parent=5 // pred_fallthru
        _
      %p289 = scmp.le.s32.totalorder 1, %s18
      %p290 = scmp.lt.s32.totalorder %s18, 3
      %p291 = pnand %p289, %p290
      %p292 = pneg %p291
      // Predicated region
      $region53: #{_lambda_.1} parent=5 // pred_check
        _
      $region54: #{_lambda_.1} parent=5 // pred_check_branch
        %294 = sbr.rel (%p291) target = $region56
      $region55: #{_lambda_.1} parent=5 // pred_region
        %s295 = ssub.s32 %s18, 1
        %p296 = scmp.lt.s32.totalorder %s23, 1
        %s297 = scalar_select %p296, %s23, 1
        %s298 = smul.addr %s297, 18
        %s299 = smul.addr %s298, 4
        %s300 = scalar_lea.vmem %s0, %s299
        %p301 = pneg %p44
        %p302 = pneg %p41
        %p303 = pneg %p65
        %p304 = pneg %p62
        %p305 = pneg %p86
        %p306 = pneg %p83
        %p307 = pneg %p107
        %p308 = pneg %p104
        %p309 = pneg %p128
        %p310 = pneg %p125
        %p311 = pneg %p149
        %p312 = pneg %p146
        %p313 = pneg %p170
        %p314 = pneg %p167
        %p315 = pneg %p191
        %p316 = pneg %p188
        %p317 = pneg %p212
        %p318 = pneg %p209
        %p319 = pneg %p238
        %p320 = pneg %p235
        %s321 = sand.u32 %s225, 1
        %s322 = scalar_lea.sflag [#allocation7], %s321
        %s323 = sand.u32 %s225, 1
        %s324 = smul.addr %s323, 8
        %s325 = scalar_lea.vmem [#allocation6], %s324
        %p326 = scmp.lt.s32.totalorder %s23, 1
        %s327 = scalar_select %p326, %s23, 1
        %s328 = smul.addr %s327, 18
        %s329 = smul.addr %s328, 4
        %s330 = scalar_lea.vmem %s0, %s329
        %v332 = vld [vmem:[%s8] ss:$8 sm:$0x3]
        %v333 = vld [vmem:[%s330] sm:$0xf]
        %v334 = vld [vmem:[%s330 + $0x4] sm:$0xf]
        %v335 = vld [vmem:[%s330 + $0x8] sm:$0xf]
        %v336 = vld [vmem:[%s330 + $0xc] sm:$0xf]
        %v337 = vld [vmem:[%s330 + $0x10] sm:$0xf]
        %v338 = vld [vmem:[%s330 + $0x14] sm:$0xf]
        %v339 = vld [vmem:[%s330 + $0x18] sm:$0xf]
        %v340 = vld [vmem:[%s330 + $0x1c] sm:$0xf]
        %v341 = vld [vmem:[%s330 + $0x24] sm:$0xf]
        %v342 = vld [vmem:[%s330 + $0x28] sm:$0xf]
        %v343 = vld [vmem:[%s330 + $0x2c] sm:$0xf]
        %v344 = vld [vmem:[%s330 + $0x30] sm:$0xf]
        %v345 = vld [vmem:[%s330 + $0x34] sm:$0xf]
        %v346 = vld [vmem:[%s330 + $0x38] sm:$0xf]
        %v347 = vld [vmem:[%s330 + $0x3c] sm:$0xf]
        %v348 = vld [vmem:[%s330 + $0x40] sm:$0xf]
        %v349 = vld [vmem:[%s330 + $0x20] sm:$0xf]
        %v350 = vld [vmem:[%s1] sm:$0xff]
        %v351 = vld [vmem:[%s1 + $0x8] sm:$0xff]
        %v352 = vld [vmem:[%s1 + $0x10] sm:$0xff]
        %v353 = vld [vmem:[%s1 + $0x18] sm:$0xff]
        %v354 = vld [vmem:[%s1 + $0x20] sm:$0xff]
        %v355 = vld [vmem:[%s1 + $0x28] sm:$0xff]
        %v356 = vld [vmem:[%s1 + $0x30] sm:$0xff]
        %v357 = vld [vmem:[%s1 + $0x38] sm:$0xff]
        %v358 = vld [vmem:[%s1 + $0x40] sm:$0xff]
        %v359 = vld [vmem:[%s1 + $0x48] sm:$0xff]
        %v360 = vld [vmem:[%s1 + $0x50] sm:$0xff]
        %v361 = vld [vmem:[%s1 + $0x58] sm:$0xff]
        %v362 = vld [vmem:[%s1 + $0x60] sm:$0xff]
        %v363 = vld [vmem:[%s1 + $0x68] sm:$0xff]
        %v364 = vld [vmem:[%s1 + $0x70] sm:$0xff]
        %v365 = vld [vmem:[%s1 + $0x78] sm:$0xff]
        %s366 = scalar_lea.vmem %s1, 128
        %v367 = vld [vmem:[%s366] sm:$0xff]
        %v368 = vld [vmem:[%s366 + $0x8] sm:$0xff]
        %v369 = vld [vmem:[%s366 + $0x10] sm:$0xff]
        %v370 = vld [vmem:[%s366 + $0x18] sm:$0xff]
        %v371 = vld [vmem:[%s366 + $0x20] sm:$0xff]
        %v372 = vld [vmem:[%s366 + $0x28] sm:$0xff]
        %v373 = vld [vmem:[%s366 + $0x30] sm:$0xff]
        %v374 = vld [vmem:[%s366 + $0x38] sm:$0xff]
        %v375 = vld [vmem:[%s366 + $0x40] sm:$0xff]
        %v376 = vld [vmem:[%s366 + $0x48] sm:$0xff]
        %v377 = vld [vmem:[%s366 + $0x50] sm:$0xff]
        %v378 = vld [vmem:[%s366 + $0x58] sm:$0xff]
        %v379 = vld [vmem:[%s366 + $0x60] sm:$0xff]
        %v380 = vld [vmem:[%s366 + $0x68] sm:$0xff]
        %v381 = vld [vmem:[%s366 + $0x70] sm:$0xff]
        %v382 = vld [vmem:[%s366 + $0x78] sm:$0xff]
        %v391 = vunpack.c.l.b16 %v341
        %v392 = vunpack.c.l.b16 %v342
        %v393 = vunpack.c.l.b16 %v343
        %v394 = vunpack.c.l.b16 %v344
        %v395 = vunpack.c.l.b16 %v345
        %v396 = vunpack.c.l.b16 %v346
        %v397 = vunpack.c.l.b16 %v347
        %v398 = vunpack.c.l.b16 %v348
        %v399 = vpack.c.b16 %v392, %v391
        %v400 = vpack.c.b16 %v394, %v393
        %v401 = vpack.c.b16 %v396, %v395
        %v402 = vpack.c.b16 %v398, %v397
        %v423 = vunpack.c.l.b16 %v367
        %v424 = vunpack.c.h.b16 %v367
        %v425 = vunpack.c.l.b16 %v368
        %v426 = vunpack.c.h.b16 %v368
        %v427 = vunpack.c.l.b16 %v369
        %v428 = vunpack.c.h.b16 %v369
        %v429 = vunpack.c.l.b16 %v370
        %v430 = vunpack.c.h.b16 %v370
        %v431 = vunpack.c.l.b16 %v371
        %v432 = vunpack.c.h.b16 %v371
        %v433 = vunpack.c.l.b16 %v372
        %v434 = vunpack.c.h.b16 %v372
        %v435 = vunpack.c.l.b16 %v373
        %v436 = vunpack.c.h.b16 %v373
        %v437 = vunpack.c.l.b16 %v374
        %v438 = vunpack.c.h.b16 %v374
        %v439 = vunpack.c.l.b16 %v375
        %v440 = vunpack.c.h.b16 %v375
        %v441 = vunpack.c.l.b16 %v376
        %v442 = vunpack.c.h.b16 %v376
        %v443 = vunpack.c.l.b16 %v377
        %v444 = vunpack.c.h.b16 %v377
        %v445 = vunpack.c.l.b16 %v378
        %v446 = vunpack.c.h.b16 %v378
        %v447 = vunpack.c.l.b16 %v379
        %v448 = vunpack.c.h.b16 %v379
        %v449 = vunpack.c.l.b16 %v380
        %v450 = vunpack.c.h.b16 %v380
        %v451 = vunpack.c.l.b16 %v381
        %v452 = vunpack.c.h.b16 %v381
        %v453 = vunpack.c.l.b16 %v382
        %v454 = vunpack.c.h.b16 %v382
        %v455 = vpack.c.b16 %v425, %v423
        %v456 = vpack.c.b16 %v426, %v424
        %v457 = vpack.c.b16 %v429, %v427
        %v458 = vpack.c.b16 %v430, %v428
        %v459 = vpack.c.b16 %v433, %v431
        %v460 = vpack.c.b16 %v434, %v432
        %v461 = vpack.c.b16 %v437, %v435
        %v462 = vpack.c.b16 %v438, %v436
        %v463 = vpack.c.b16 %v441, %v439
        %v464 = vpack.c.b16 %v442, %v440
        %v465 = vpack.c.b16 %v445, %v443
        %v466 = vpack.c.b16 %v446, %v444
        %v467 = vpack.c.b16 %v449, %v447
        %v468 = vpack.c.b16 %v450, %v448
        %v469 = vpack.c.b16 %v453, %v451
        %v470 = vpack.c.b16 %v454, %v452
        %487 = vmatprep.subr.bf16.mxu0 %v456
        %488 = vmatpush1.bf16.msra.mxu0 %v455
        %489 = vmatprep.subr.bf16.mxu0 %v458
        %490 = vmatpush1.bf16.msra.mxu0 %v457
        %491 = vmatprep.subr.bf16.mxu0 %v460
        %492 = vmatpush1.bf16.msra.mxu0 %v459
        %493 = vmatprep.subr.bf16.mxu0 %v462
        %494 = vmatpush1.bf16.msra.mxu0 %v461
        %495 = vmatprep.subr.bf16.mxu0 %v464
        %496 = vmatpush1.bf16.msra.mxu0 %v463
        %497 = vmatprep.subr.bf16.mxu0 %v466
        %498 = vmatpush1.bf16.msra.mxu0 %v465
        %499 = vmatprep.subr.bf16.mxu0 %v468
        %500 = vmatpush1.bf16.msra.mxu0 %v467
        %501 = vmatprep.subr.bf16.mxu0 %v470
        %502 = vmatpush1.bf16.msra.mxu0 %v469
        %503 = vmatprep.subr.bf16.mxu0 0
        %504 = vmatpush1.bf16.msra.mxu0 0
        %505 = vmatprep.subr.bf16.mxu0 0
        %506 = vmatpush1.bf16.msra.mxu0 0
        %507 = vmatprep.subr.bf16.mxu0 0
        %508 = vmatpush1.bf16.msra.mxu0 0
        %509 = vmatprep.subr.bf16.mxu0 0
        %510 = vmatpush1.bf16.msra.mxu0 0
        %511 = vmatprep.subr.bf16.mxu0 0
        %512 = vmatpush1.bf16.msra.mxu0 0
        %513 = vmatprep.subr.bf16.mxu0 0
        %514 = vmatpush1.bf16.msra.mxu0 0
        %515 = vmatprep.subr.bf16.mxu0 0
        %516 = vmatpush1.bf16.msra.mxu0 0
        %517 = vmatprep.subr.bf16.mxu0 0
        %518 = vmatpush1.bf16.msra.mxu0 0
        %519 = vmatprep.mubr.bf16.mxu0 0
        %520 = vmatmul.mubr.bf16.gmra.mrb[0].mxu0 %v399
        %v521 = vpop.f32.mrb[0].mxu0
        %v522 = vadd.f32 0.0, %v521
        %v523 = vpop.f32.mrb[0].mxu0
        %v524 = vadd.f32 0.0, %v523
        %v525 = vpop.f32.mrb[0].mxu0
        %v526 = vadd.f32 0.0, %v525
        %v527 = vpop.f32.mrb[0].mxu0
        %v528 = vadd.f32 0.0, %v527
        %529 = vmatprep.mubr.bf16.mxu0 0
        %530 = vmatmul.mubr.bf16.gmra.mrb[0].mxu0 %v400
        %v531 = vpop.f32.mrb[0].mxu0
        %v532 = vadd.f32 0.0, %v531
        %v533 = vpop.f32.mrb[0].mxu0
        %v534 = vadd.f32 0.0, %v533
        %v535 = vpop.f32.mrb[0].mxu0
        %v536 = vadd.f32 0.0, %v535
        %v537 = vpop.f32.mrb[0].mxu0
        %v538 = vadd.f32 0.0, %v537
        %539 = vmatprep.mubr.bf16.mxu0 0
        %540 = vmatmul.mubr.bf16.gmra.mrb[0].mxu0 %v401
        %v541 = vpop.f32.mrb[0].mxu0
        %v542 = vadd.f32 0.0, %v541
        %v543 = vpop.f32.mrb[0].mxu0
        %v544 = vadd.f32 0.0, %v543
        %v545 = vpop.f32.mrb[0].mxu0
        %v546 = vadd.f32 0.0, %v545
        %v547 = vpop.f32.mrb[0].mxu0
        %v548 = vadd.f32 0.0, %v547
        %549 = vmatprep.mubr.bf16.mxu0 0
        %550 = vmatmul.mubr.bf16.gmra.mrb[0].mxu0 %v402
        %v551 = vpop.f32.mrb[0].mxu0
        %v552 = vadd.f32 0.0, %v551
        %v553 = vpop.f32.mrb[0].mxu0
        %v554 = vadd.f32 0.0, %v553
        %v555 = vpop.f32.mrb[0].mxu0
        %v556 = vadd.f32 0.0, %v555
        %v557 = vpop.f32.mrb[0].mxu0
        %v558 = vadd.f32 0.0, %v557
        %559 = vdwg.mxu0
        %v568 = vunpack.c.l.b16 %v333
        %v569 = vunpack.c.l.b16 %v334
        %v570 = vunpack.c.l.b16 %v335
        %v571 = vunpack.c.l.b16 %v336
        %v572 = vunpack.c.l.b16 %v337
        %v573 = vunpack.c.l.b16 %v338
        %v574 = vunpack.c.l.b16 %v339
        %v575 = vunpack.c.l.b16 %v340
        %v576 = vpack.c.b16 %v569, %v568
        %v577 = vpack.c.b16 %v571, %v570
        %v578 = vpack.c.b16 %v573, %v572
        %v579 = vpack.c.b16 %v575, %v574
        %v600 = vunpack.c.l.b16 %v350
        %v601 = vunpack.c.h.b16 %v350
        %v602 = vunpack.c.l.b16 %v351
        %v603 = vunpack.c.h.b16 %v351
        %v604 = vunpack.c.l.b16 %v352
        %v605 = vunpack.c.h.b16 %v352
        %v606 = vunpack.c.l.b16 %v353
        %v607 = vunpack.c.h.b16 %v353
        %v608 = vunpack.c.l.b16 %v354
        %v609 = vunpack.c.h.b16 %v354
        %v610 = vunpack.c.l.b16 %v355
        %v611 = vunpack.c.h.b16 %v355
        %v612 = vunpack.c.l.b16 %v356
        %v613 = vunpack.c.h.b16 %v356
        %v614 = vunpack.c.l.b16 %v357
        %v615 = vunpack.c.h.b16 %v357
        %v616 = vunpack.c.l.b16 %v358
        %v617 = vunpack.c.h.b16 %v358
        %v618 = vunpack.c.l.b16 %v359
        %v619 = vunpack.c.h.b16 %v359
        %v620 = vunpack.c.l.b16 %v360
        %v621 = vunpack.c.h.b16 %v360
        %v622 = vunpack.c.l.b16 %v361
        %v623 = vunpack.c.h.b16 %v361
        %v624 = vunpack.c.l.b16 %v362
        %v625 = vunpack.c.h.b16 %v362
        %v626 = vunpack.c.l.b16 %v363
        %v627 = vunpack.c.h.b16 %v363
        %v628 = vunpack.c.l.b16 %v364
        %v629 = vunpack.c.h.b16 %v364
        %v630 = vunpack.c.l.b16 %v365
        %v631 = vunpack.c.h.b16 %v365
        %v632 = vpack.c.b16 %v602, %v600
        %v633 = vpack.c.b16 %v603, %v601
        %v634 = vpack.c.b16 %v606, %v604
        %v635 = vpack.c.b16 %v607, %v605
        %v636 = vpack.c.b16 %v610, %v608
        %v637 = vpack.c.b16 %v611, %v609
        %v638 = vpack.c.b16 %v614, %v612
        %v639 = vpack.c.b16 %v615, %v613
        %v640 = vpack.c.b16 %v618, %v616
        %v641 = vpack.c.b16 %v619, %v617
        %v642 = vpack.c.b16 %v622, %v620
        %v643 = vpack.c.b16 %v623, %v621
        %v644 = vpack.c.b16 %v626, %v624
        %v645 = vpack.c.b16 %v627, %v625
        %v646 = vpack.c.b16 %v630, %v628
        %v647 = vpack.c.b16 %v631, %v629
        %664 = vmatprep.subr.bf16.mxu0 %v633
        %665 = vmatpush1.bf16.msra.mxu0 %v632
        %666 = vmatprep.subr.bf16.mxu0 %v635
        %667 = vmatpush1.bf16.msra.mxu0 %v634
        %668 = vmatprep.subr.bf16.mxu0 %v637
        %669 = vmatpush1.bf16.msra.mxu0 %v636
        %670 = vmatprep.subr.bf16.mxu0 %v639
        %671 = vmatpush1.bf16.msra.mxu0 %v638
        %672 = vmatprep.subr.bf16.mxu0 %v641
        %673 = vmatpush1.bf16.msra.mxu0 %v640
        %674 = vmatprep.subr.bf16.mxu0 %v643
        %675 = vmatpush1.bf16.msra.mxu0 %v642
        %676 = vmatprep.subr.bf16.mxu0 %v645
        %677 = vmatpush1.bf16.msra.mxu0 %v644
        %678 = vmatprep.subr.bf16.mxu0 %v647
        %679 = vmatpush1.bf16.msra.mxu0 %v646
        %680 = vmatprep.subr.bf16.mxu0 0
        %681 = vmatpush1.bf16.msra.mxu0 0
        %682 = vmatprep.subr.bf16.mxu0 0
        %683 = vmatpush1.bf16.msra.mxu0 0
        %684 = vmatprep.subr.bf16.mxu0 0
        %685 = vmatpush1.bf16.msra.mxu0 0
        %686 = vmatprep.subr.bf16.mxu0 0
        %687 = vmatpush1.bf16.msra.mxu0 0
        %688 = vmatprep.subr.bf16.mxu0 0
        %689 = vmatpush1.bf16.msra.mxu0 0
        %690 = vmatprep.subr.bf16.mxu0 0
        %691 = vmatpush1.bf16.msra.mxu0 0
        %692 = vmatprep.subr.bf16.mxu0 0
        %693 = vmatpush1.bf16.msra.mxu0 0
        %694 = vmatprep.subr.bf16.mxu0 0
        %695 = vmatpush1.bf16.msra.mxu0 0
        %696 = vmatprep.mubr.bf16.mxu0 0
        %697 = vmatmul.mubr.bf16.gmra.mrb[0].mxu0 %v576
        %v698 = vpop.f32.mrb[0].mxu0
        %v699 = vadd.f32 %v522, %v698
        %v700 = vpop.f32.mrb[0].mxu0
        %v701 = vadd.f32 %v524, %v700
        %v702 = vpop.f32.mrb[0].mxu0
        %v703 = vadd.f32 %v526, %v702
        %v704 = vpop.f32.mrb[0].mxu0
        %v705 = vadd.f32 %v528, %v704
        %706 = vmatprep.mubr.bf16.mxu0 0
        %707 = vmatmul.mubr.bf16.gmra.mrb[0].mxu0 %v577
        %v708 = vpop.f32.mrb[0].mxu0
        %v709 = vadd.f32 %v532, %v708
        %v710 = vpop.f32.mrb[0].mxu0
        %v711 = vadd.f32 %v534, %v710
        %v712 = vpop.f32.mrb[0].mxu0
        %v713 = vadd.f32 %v536, %v712
        %v714 = vpop.f32.mrb[0].mxu0
        %v715 = vadd.f32 %v538, %v714
        %716 = vmatprep.mubr.bf16.mxu0 0
        %717 = vmatmul.mubr.bf16.gmra.mrb[0].mxu0 %v578
        %v718 = vpop.f32.mrb[0].mxu0
        %v719 = vadd.f32 %v542, %v718
        %v720 = vpop.f32.mrb[0].mxu0
        %v721 = vadd.f32 %v544, %v720
        %v722 = vpop.f32.mrb[0].mxu0
        %v723 = vadd.f32 %v546, %v722
        %v724 = vpop.f32.mrb[0].mxu0
        %v725 = vadd.f32 %v548, %v724
        %726 = vmatprep.mubr.bf16.mxu0 0
        %727 = vmatmul.mubr.bf16.gmra.mrb[0].mxu0 %v579
        %v728 = vpop.f32.mrb[0].mxu0
        %v729 = vadd.f32 %v552, %v728
        %v730 = vpop.f32.mrb[0].mxu0
        %v731 = vadd.f32 %v554, %v730
        %v732 = vpop.f32.mrb[0].mxu0
        %v733 = vadd.f32 %v556, %v732
        %v734 = vpop.f32.mrb[0].mxu0
        %v735 = vadd.f32 %v558, %v734
        %736 = vdwg.mxu0
        %s737 = scalar_lea.vmem %s1, 256
        %v738 = vld [vmem:[%s737] sm:$0xff]
        %v739 = vld [vmem:[%s737 + $0x8] sm:$0xff]
        %v740 = vld [vmem:[%s737 + $0x10] sm:$0xff]
        %v741 = vld [vmem:[%s737 + $0x18] sm:$0xff]
        %v742 = vld [vmem:[%s737 + $0x20] sm:$0xff]
        %v743 = vld [vmem:[%s737 + $0x28] sm:$0xff]
        %v744 = vld [vmem:[%s737 + $0x30] sm:$0xff]
        %v745 = vld [vmem:[%s737 + $0x38] sm:$0xff]
        %v746 = vld [vmem:[%s737 + $0x40] sm:$0xff]
        %v747 = vld [vmem:[%s737 + $0x48] sm:$0xff]
        %v748 = vld [vmem:[%s737 + $0x50] sm:$0xff]
        %v749 = vld [vmem:[%s737 + $0x58] sm:$0xff]
        %v750 = vld [vmem:[%s737 + $0x60] sm:$0xff]
        %v751 = vld [vmem:[%s737 + $0x68] sm:$0xff]
        %v752 = vld [vmem:[%s737 + $0x70] sm:$0xff]
        %v753 = vld [vmem:[%s737 + $0x78] sm:$0xff]
        %v755 = vunpack.c.l.b16 %v349
        %v756 = vpack.c.b16 %v570, %v569
        %v757 = vpack.c.b16 %v572, %v571
        %v758 = vpack.c.b16 %v574, %v573
        %v759 = vpack.c.b16 %v755, %v575
        %v780 = vunpack.c.l.b16 %v738
        %v781 = vunpack.c.h.b16 %v738
        %v782 = vunpack.c.l.b16 %v739
        %v783 = vunpack.c.h.b16 %v739
        %v784 = vunpack.c.l.b16 %v740
        %v785 = vunpack.c.h.b16 %v740
        %v786 = vunpack.c.l.b16 %v741
        %v787 = vunpack.c.h.b16 %v741
        %v788 = vunpack.c.l.b16 %v742
        %v789 = vunpack.c.h.b16 %v742
        %v790 = vunpack.c.l.b16 %v743
        %v791 = vunpack.c.h.b16 %v743
        %v792 = vunpack.c.l.b16 %v744
        %v793 = vunpack.c.h.b16 %v744
        %v794 = vunpack.c.l.b16 %v745
        %v795 = vunpack.c.h.b16 %v745
        %v796 = vunpack.c.l.b16 %v746
        %v797 = vunpack.c.h.b16 %v746
        %v798 = vunpack.c.l.b16 %v747
        %v799 = vunpack.c.h.b16 %v747
        %v800 = vunpack.c.l.b16 %v748
        %v801 = vunpack.c.h.b16 %v748
        %v802 = vunpack.c.l.b16 %v749
        %v803 = vunpack.c.h.b16 %v749
        %v804 = vunpack.c.l.b16 %v750
        %v805 = vunpack.c.h.b16 %v750
        %v806 = vunpack.c.l.b16 %v751
        %v807 = vunpack.c.h.b16 %v751
        %v808 = vunpack.c.l.b16 %v752
        %v809 = vunpack.c.h.b16 %v752
        %v810 = vunpack.c.l.b16 %v753
        %v811 = vunpack.c.h.b16 %v753
        %v812 = vpack.c.b16 %v782, %v780
        %v813 = vpack.c.b16 %v783, %v781
        %v814 = vpack.c.b16 %v786, %v784
        %v815 = vpack.c.b16 %v787, %v785
        %v816 = vpack.c.b16 %v790, %v788
        %v817 = vpack.c.b16 %v791, %v789
        %v818 = vpack.c.b16 %v794, %v792
        %v819 = vpack.c.b16 %v795, %v793
        %v820 = vpack.c.b16 %v798, %v796
        %v821 = vpack.c.b16 %v799, %v797
        %v822 = vpack.c.b16 %v802, %v800
        %v823 = vpack.c.b16 %v803, %v801
        %v824 = vpack.c.b16 %v806, %v804
        %v825 = vpack.c.b16 %v807, %v805
        %v826 = vpack.c.b16 %v810, %v808
        %v827 = vpack.c.b16 %v811, %v809
        %844 = vmatprep.subr.bf16.mxu0 %v813
        %845 = vmatpush1.bf16.msra.mxu0 %v812
        %846 = vmatprep.subr.bf16.mxu0 %v815
        %847 = vmatpush1.bf16.msra.mxu0 %v814
        %848 = vmatprep.subr.bf16.mxu0 %v817
        %849 = vmatpush1.bf16.msra.mxu0 %v816
        %850 = vmatprep.subr.bf16.mxu0 %v819
        %851 = vmatpush1.bf16.msra.mxu0 %v818
        %852 = vmatprep.subr.bf16.mxu0 %v821
        %853 = vmatpush1.bf16.msra.mxu0 %v820
        %854 = vmatprep.subr.bf16.mxu0 %v823
        %855 = vmatpush1.bf16.msra.mxu0 %v822
        %856 = vmatprep.subr.bf16.mxu0 %v825
        %857 = vmatpush1.bf16.msra.mxu0 %v824
        %858 = vmatprep.subr.bf16.mxu0 %v827
        %859 = vmatpush1.bf16.msra.mxu0 %v826
        %860 = vmatprep.subr.bf16.mxu0 0
        %861 = vmatpush1.bf16.msra.mxu0 0
        %862 = vmatprep.subr.bf16.mxu0 0
        %863 = vmatpush1.bf16.msra.mxu0 0
        %864 = vmatprep.subr.bf16.mxu0 0
        %865 = vmatpush1.bf16.msra.mxu0 0
        %866 = vmatprep.subr.bf16.mxu0 0
        %867 = vmatpush1.bf16.msra.mxu0 0
        %868 = vmatprep.subr.bf16.mxu0 0
        %869 = vmatpush1.bf16.msra.mxu0 0
        %870 = vmatprep.subr.bf16.mxu0 0
        %871 = vmatpush1.bf16.msra.mxu0 0
        %872 = vmatprep.subr.bf16.mxu0 0
        %873 = vmatpush1.bf16.msra.mxu0 0
        %874 = vmatprep.subr.bf16.mxu0 0
        %875 = vmatpush1.bf16.msra.mxu0 0
        %876 = vmatprep.mubr.bf16.mxu0 0
        %877 = vmatmul.mubr.bf16.gmra.mrb[0].mxu0 %v756
        %v878 = vpop.f32.mrb[0].mxu0
        %v879 = vadd.f32 0.0, %v878
        %v880 = vpop.f32.mrb[0].mxu0
        %v881 = vadd.f32 0.0, %v880
        %v882 = vpop.f32.mrb[0].mxu0
        %v883 = vadd.f32 0.0, %v882
        %v884 = vpop.f32.mrb[0].mxu0
        %v885 = vadd.f32 0.0, %v884
        %886 = vmatprep.mubr.bf16.mxu0 0
        %887 = vmatmul.mubr.bf16.gmra.mrb[0].mxu0 %v757
        %v888 = vpop.f32.mrb[0].mxu0
        %v889 = vadd.f32 0.0, %v888
        %v890 = vpop.f32.mrb[0].mxu0
        %v891 = vadd.f32 0.0, %v890
        %v892 = vpop.f32.mrb[0].mxu0
        %v893 = vadd.f32 0.0, %v892
        %v894 = vpop.f32.mrb[0].mxu0
        %v895 = vadd.f32 0.0, %v894
        %896 = vmatprep.mubr.bf16.mxu0 0
        %897 = vmatmul.mubr.bf16.gmra.mrb[0].mxu0 %v758
        %v898 = vpop.f32.mrb[0].mxu0
        %v899 = vadd.f32 0.0, %v898
        %v900 = vpop.f32.mrb[0].mxu0
        %v901 = vadd.f32 0.0, %v900
        %v902 = vpop.f32.mrb[0].mxu0
        %v903 = vadd.f32 0.0, %v902
        %v904 = vpop.f32.mrb[0].mxu0
        %v905 = vadd.f32 0.0, %v904
        %906 = vmatprep.mubr.bf16.mxu0 0
        %907 = vmatmul.mubr.bf16.gmra.mrb[0].mxu0 %v759
        %v908 = vpop.f32.mrb[0].mxu0
        %v909 = vadd.f32 0.0, %v908
        %v910 = vpop.f32.mrb[0].mxu0
        %v911 = vadd.f32 0.0, %v910
        %v912 = vpop.f32.mrb[0].mxu0
        %v913 = vadd.f32 0.0, %v912
        %v914 = vpop.f32.mrb[0].mxu0
        %v915 = vadd.f32 0.0, %v914
        %916 = vdwg.mxu0
        %v917 = vadd.f32 %v699, %v879
        %v918 = vadd.f32 %v701, %v881
        %v919 = vadd.f32 %v703, %v883
        %v920 = vadd.f32 %v705, %v885
        %v921 = vadd.f32 %v709, %v889
        %v922 = vadd.f32 %v711, %v891
        %v923 = vadd.f32 %v713, %v893
        %v924 = vadd.f32 %v715, %v895
        %v925 = vadd.f32 %v719, %v899
        %v926 = vadd.f32 %v721, %v901
        %v927 = vadd.f32 %v723, %v903
        %v928 = vadd.f32 %v725, %v905
        %v929 = vadd.f32 %v729, %v909
        %v930 = vadd.f32 %v731, %v911
        %v931 = vadd.f32 %v733, %v913
        %v932 = vadd.f32 %v735, %v915
        %v934 = vlaneseq
        %v935 = vshrl.u32 %v934, 7
        %v936 = vsub.s32 0, %v935
        %v937 = vrot.slane %v332, %v936
        %v938 = vlaneseq
        %v939 = vshrl.u32 %v938, 7
        %v940 = vsub.s32 1, %v939
        %v941 = vrot.slane %v332, %v940
        %v944 = vadd.f32 %v917, %v937
        %v945 = vadd.f32 %v918, %v941
        %v946 = vadd.f32 %v919, %v937
        %v947 = vadd.f32 %v920, %v941
        %v948 = vadd.f32 %v921, %v937
        %v949 = vadd.f32 %v922, %v941
        %v950 = vadd.f32 %v923, %v937
        %v951 = vadd.f32 %v924, %v941
        %v952 = vadd.f32 %v925, %v937
        %v953 = vadd.f32 %v926, %v941
        %v954 = vadd.f32 %v927, %v937
        %v955 = vadd.f32 %v928, %v941
        %v956 = vadd.f32 %v929, %v937
        %v957 = vadd.f32 %v930, %v941
        %v958 = vadd.f32 %v931, %v937
        %v959 = vadd.f32 %v932, %v941
        %v960 = vmax.f32 %v944, 0.0
        %v961 = vmax.f32 %v945, 0.0
        %v962 = vmax.f32 %v946, 0.0
        %v963 = vmax.f32 %v947, 0.0
        %v964 = vmax.f32 %v948, 0.0
        %v965 = vmax.f32 %v949, 0.0
        %v966 = vmax.f32 %v950, 0.0
        %v967 = vmax.f32 %v951, 0.0
        %v968 = vmax.f32 %v952, 0.0
        %v969 = vmax.f32 %v953, 0.0
        %v970 = vmax.f32 %v954, 0.0
        %v971 = vmax.f32 %v955, 0.0
        %v972 = vmax.f32 %v956, 0.0
        %v973 = vmax.f32 %v957, 0.0
        %v974 = vmax.f32 %v958, 0.0
        %v975 = vmax.f32 %v959, 0.0
        %v976 = vpack.c.bf16 %v962, %v960
        %v977 = vpack.c.bf16 %v963, %v961
        %v978 = vpack.c.bf16 %v966, %v964
        %v979 = vpack.c.bf16 %v967, %v965
        %v980 = vpack.c.bf16 %v970, %v968
        %v981 = vpack.c.bf16 %v971, %v969
        %v982 = vpack.c.bf16 %v974, %v972
        %v983 = vpack.c.bf16 %v975, %v973
        %984 = vst [vmem:[#allocation2] sm:$0xf] 0
        %985 = vst [vmem:[#allocation2 + $0x8] sm:$0xf] 0
        %986 = vst [vmem:[#allocation2 + $0x40] sm:$0xf0] 0
        %987 = vst [vmem:[#allocation2 + $0x48] sm:$0xf0] 0
        %v990 = vrot.slane %v976, 4
        %v991 = vrot.slane %v977, 4
        %994 = vst [vmem:[#allocation2 + $0x20] sm:$0xf0] %v990
        %995 = vst [vmem:[#allocation2 + $0x28] sm:$0xf0] %v991
        %996 = vst [vmem:[#allocation2] sm:$0xf0] %v976
        %997 = vst [vmem:[#allocation2 + $0x8] sm:$0xf0] %v977
        %998 = vst [vmem:[#allocation2 + $0x30] sm:$0xf] %v978
        %999 = vst [vmem:[#allocation2 + $0x38] sm:$0xf] %v979
        %v1002 = vrot.slane %v978, 4
        %v1003 = vrot.slane %v979, 4
        %1006 = vst [vmem:[#allocation2 + $0x10] sm:$0xf] %v1002
        %1007 = vst [vmem:[#allocation2 + $0x18] sm:$0xf] %v1003
        %v1010 = vrot.slane %v980, 4
        %v1011 = vrot.slane %v981, 4
        %1014 = vst [vmem:[#allocation2 + $0x30] sm:$0xf0] %v1010
        %1015 = vst [vmem:[#allocation2 + $0x38] sm:$0xf0] %v1011
        %1016 = vst [vmem:[#allocation2 + $0x10] sm:$0xf0] %v980
        %1017 = vst [vmem:[#allocation2 + $0x18] sm:$0xf0] %v981
        %1018 = vst [vmem:[#allocation2 + $0x40] sm:$0xf] %v982
        %1019 = vst [vmem:[#allocation2 + $0x48] sm:$0xf] %v983
        %v1022 = vrot.slane %v982, 4
        %v1023 = vrot.slane %v983, 4
        %1026 = vst [vmem:[#allocation2 + $0x20] sm:$0xf] %v1022
        %1027 = vst [vmem:[#allocation2 + $0x28] sm:$0xf] %v1023
        %s1028 = scalar_lea.vmem %s8, 1
        %v1029 = vld [vmem:[%s1028] ss:$8 sm:$0x3]
        %v1030 = vld [vmem:[#allocation2] sm:$0xff]
        %v1031 = vld [vmem:[#allocation2 + $0x8] sm:$0xff]
        %v1032 = vld [vmem:[#allocation2 + $0x10] sm:$0xff]
        %v1033 = vld [vmem:[#allocation2 + $0x18] sm:$0xff]
        %v1034 = vld [vmem:[#allocation2 + $0x20] sm:$0xf0]
        %v1035 = vld [vmem:[#allocation2 + $0x28] sm:$0xf0]
        %v1036 = vld [vmem:[#allocation2 + $0x30] sm:$0xff]
        %v1037 = vld [vmem:[#allocation2 + $0x38] sm:$0xff]
        %v1038 = vld [vmem:[#allocation2 + $0x40] sm:$0xf]
        %v1039 = vld [vmem:[#allocation2 + $0x48] sm:$0xf]
        %v1040 = vld [vmem:[#allocation2] sm:$0xf0]
        %v1041 = vld [vmem:[#allocation2 + $0x8] sm:$0xf0]
        %v1042 = vld [vmem:[#allocation2 + $0x20] sm:$0xf]
        %v1043 = vld [vmem:[#allocation2 + $0x28] sm:$0xf]
        %v1044 = vld [vmem:[%s2] sm:$0xff]
        %v1045 = vld [vmem:[%s2 + $0x8] sm:$0xff]
        %v1046 = vld [vmem:[%s2 + $0x10] sm:$0xff]
        %v1047 = vld [vmem:[%s2 + $0x18] sm:$0xff]
        %v1048 = vld [vmem:[%s2 + $0x20] sm:$0xff]
        %v1049 = vld [vmem:[%s2 + $0x28] sm:$0xff]
        %v1050 = vld [vmem:[%s2 + $0x30] sm:$0xff]
        %v1051 = vld [vmem:[%s2 + $0x38] sm:$0xff]
        %v1052 = vld [vmem:[%s2 + $0x40] sm:$0xff]
        %v1053 = vld [vmem:[%s2 + $0x48] sm:$0xff]
        %v1054 = vld [vmem:[%s2 + $0x50] sm:$0xff]
        %v1055 = vld [vmem:[%s2 + $0x58] sm:$0xff]
        %v1056 = vld [vmem:[%s2 + $0x60] sm:$0xff]
        %v1057 = vld [vmem:[%s2 + $0x68] sm:$0xff]
        %v1058 = vld [vmem:[%s2 + $0x70] sm:$0xff]
        %v1059 = vld [vmem:[%s2 + $0x78] sm:$0xff]
        %v1060 = vld [vmem:[%s2 + $0x80] sm:$0xff]
        %v1061 = vld [vmem:[%s2 + $0x88] sm:$0xff]
        %v1062 = vld [vmem:[%s2 + $0x90] sm:$0xff]
        %v1063 = vld [vmem:[%s2 + $0x98] sm:$0xff]
        %v1064 = vld [vmem:[%s2 + $0xa0] sm:$0xff]
        %v1065 = vld [vmem:[%s2 + $0xa8] sm:$0xff]
        %v1066 = vld [vmem:[%s2 + $0xb0] sm:$0xff]
        %v1067 = vld [vmem:[%s2 + $0xb8] sm:$0xff]
        %v1068 = vld [vmem:[%s2 + $0xc0] sm:$0xff]
        %v1069 = vld [vmem:[%s2 + $0xc8] sm:$0xff]
        %v1070 = vld [vmem:[%s2 + $0xd0] sm:$0xff]
        %v1071 = vld [vmem:[%s2 + $0xd8] sm:$0xff]
        %v1072 = vld [vmem:[%s2 + $0xe0] sm:$0xff]
        %v1073 = vld [vmem:[%s2 + $0xe8] sm:$0xff]
        %v1074 = vld [vmem:[%s2 + $0xf0] sm:$0xff]
        %v1075 = vld [vmem:[%s2 + $0xf8] sm:$0xff]
        %s1076 = scalar_lea.vmem %s2, 256
        %v1077 = vld [vmem:[%s1076] sm:$0xff]
        %v1078 = vld [vmem:[%s1076 + $0x8] sm:$0xff]
        %v1079 = vld [vmem:[%s1076 + $0x10] sm:$0xff]
        %v1080 = vld [vmem:[%s1076 + $0x18] sm:$0xff]
        %v1081 = vld [vmem:[%s1076 + $0x20] sm:$0xff]
        %v1082 = vld [vmem:[%s1076 + $0x28] sm:$0xff]
        %v1083 = vld [vmem:[%s1076 + $0x30] sm:$0xff]
        %v1084 = vld [vmem:[%s1076 + $0x38] sm:$0xff]
        %v1085 = vld [vmem:[%s1076 + $0x40] sm:$0xff]
        %v1086 = vld [vmem:[%s1076 + $0x48] sm:$0xff]
        %v1087 = vld [vmem:[%s1076 + $0x50] sm:$0xff]
        %v1088 = vld [vmem:[%s1076 + $0x58] sm:$0xff]
        %v1089 = vld [vmem:[%s1076 + $0x60] sm:$0xff]
        %v1090 = vld [vmem:[%s1076 + $0x68] sm:$0xff]
        %v1091 = vld [vmem:[%s1076 + $0x70] sm:$0xff]
        %v1092 = vld [vmem:[%s1076 + $0x78] sm:$0xff]
        %v1093 = vld [vmem:[%s1076 + $0x80] sm:$0xff]
        %v1094 = vld [vmem:[%s1076 + $0x88] sm:$0xff]
        %v1095 = vld [vmem:[%s1076 + $0x90] sm:$0xff]
        %v1096 = vld [vmem:[%s1076 + $0x98] sm:$0xff]
        %v1097 = vld [vmem:[%s1076 + $0xa0] sm:$0xff]
        %v1098 = vld [vmem:[%s1076 + $0xa8] sm:$0xff]
        %v1099 = vld [vmem:[%s1076 + $0xb0] sm:$0xff]
        %v1100 = vld [vmem:[%s1076 + $0xb8] sm:$0xff]
        %v1101 = vld [vmem:[%s1076 + $0xc0] sm:$0xff]
        %v1102 = vld [vmem:[%s1076 + $0xc8] sm:$0xff]
        %v1103 = vld [vmem:[%s1076 + $0xd0] sm:$0xff]
        %v1104 = vld [vmem:[%s1076 + $0xd8] sm:$0xff]
        %v1105 = vld [vmem:[%s1076 + $0xe0] sm:$0xff]
        %v1106 = vld [vmem:[%s1076 + $0xe8] sm:$0xff]
        %v1107 = vld [vmem:[%s1076 + $0xf0] sm:$0xff]
        %v1108 = vld [vmem:[%s1076 + $0xf8] sm:$0xff]
        %vm1115 = vcmask 1043456
        %v1116 = vrot.slane %v1034, 4
        %v1117 = vrot.slane %v1036, 4
        %v1118 = vsel %vm1115, %v1116, %v1117
        %v1119 = vrot.slane %v1035, 4
        %v1120 = vrot.slane %v1037, 4
        %v1121 = vsel %vm1115, %v1119, %v1120
        %v1122 = vrot.slane %v1038, 4
        %v1123 = vsel %vm1115, %v1117, %v1122
        %v1124 = vrot.slane %v1039, 4
        %v1125 = vsel %vm1115, %v1120, %v1124
        %v1162 = vunpack.c.l.b16 %v1077
        %v1163 = vunpack.c.h.b16 %v1077
        %v1164 = vunpack.c.l.b16 %v1078
        %v1165 = vunpack.c.h.b16 %v1078
        %v1166 = vunpack.c.l.b16 %v1079
        %v1167 = vunpack.c.h.b16 %v1079
        %v1168 = vunpack.c.l.b16 %v1080
        %v1169 = vunpack.c.h.b16 %v1080
        %v1170 = vunpack.c.l.b16 %v1081
        %v1171 = vunpack.c.h.b16 %v1081
        %v1172 = vunpack.c.l.b16 %v1082
        %v1173 = vunpack.c.h.b16 %v1082
        %v1174 = vunpack.c.l.b16 %v1083
        %v1175 = vunpack.c.h.b16 %v1083
        %v1176 = vunpack.c.l.b16 %v1084
        %v1177 = vunpack.c.h.b16 %v1084
        %v1178 = vunpack.c.l.b16 %v1085
        %v1179 = vunpack.c.h.b16 %v1085
        %v1180 = vunpack.c.l.b16 %v1086
        %v1181 = vunpack.c.h.b16 %v1086
        %v1182 = vunpack.c.l.b16 %v1087
        %v1183 = vunpack.c.h.b16 %v1087
        %v1184 = vunpack.c.l.b16 %v1088
        %v1185 = vunpack.c.h.b16 %v1088
        %v1186 = vunpack.c.l.b16 %v1089
        %v1187 = vunpack.c.h.b16 %v1089
        %v1188 = vunpack.c.l.b16 %v1090
        %v1189 = vunpack.c.h.b16 %v1090
        %v1190 = vunpack.c.l.b16 %v1091
        %v1191 = vunpack.c.h.b16 %v1091
        %v1192 = vunpack.c.l.b16 %v1092
        %v1193 = vunpack.c.h.b16 %v1092
        %v1194 = vunpack.c.l.b16 %v1093
        %v1195 = vunpack.c.h.b16 %v1093
        %v1196 = vunpack.c.l.b16 %v1094
        %v1197 = vunpack.c.h.b16 %v1094
        %v1198 = vunpack.c.l.b16 %v1095
        %v1199 = vunpack.c.h.b16 %v1095
        %v1200 = vunpack.c.l.b16 %v1096
        %v1201 = vunpack.c.h.b16 %v1096
        %v1202 = vunpack.c.l.b16 %v1097
        %v1203 = vunpack.c.h.b16 %v1097
        %v1204 = vunpack.c.l.b16 %v1098
        %v1205 = vunpack.c.h.b16 %v1098
        %v1206 = vunpack.c.l.b16 %v1099
        %v1207 = vunpack.c.h.b16 %v1099
        %v1208 = vunpack.c.l.b16 %v1100
        %v1209 = vunpack.c.h.b16 %v1100
        %v1210 = vunpack.c.l.b16 %v1101
        %v1211 = vunpack.c.h.b16 %v1101
        %v1212 = vunpack.c.l.b16 %v1102
        %v1213 = vunpack.c.h.b16 %v1102
        %v1214 = vunpack.c.l.b16 %v1103
        %v1215 = vunpack.c.h.b16 %v1103
        %v1216 = vunpack.c.l.b16 %v1104
        %v1217 = vunpack.c.h.b16 %v1104
        %v1218 = vunpack.c.l.b16 %v1105
        %v1219 = vunpack.c.h.b16 %v1105
        %v1220 = vunpack.c.l.b16 %v1106
        %v1221 = vunpack.c.h.b16 %v1106
        %v1222 = vunpack.c.l.b16 %v1107
        %v1223 = vunpack.c.h.b16 %v1107
        %v1224 = vunpack.c.l.b16 %v1108
        %v1225 = vunpack.c.h.b16 %v1108
        %v1226 = vpack.c.b16 %v1164, %v1162
        %v1227 = vpack.c.b16 %v1165, %v1163
        %v1228 = vpack.c.b16 %v1168, %v1166
        %v1229 = vpack.c.b16 %v1169, %v1167
        %v1230 = vpack.c.b16 %v1172, %v1170
        %v1231 = vpack.c.b16 %v1173, %v1171
        %v1232 = vpack.c.b16 %v1176, %v1174
        %v1233 = vpack.c.b16 %v1177, %v1175
        %v1234 = vpack.c.b16 %v1180, %v1178
        %v1235 = vpack.c.b16 %v1181, %v1179
        %v1236 = vpack.c.b16 %v1184, %v1182
        %v1237 = vpack.c.b16 %v1185, %v1183
        %v1238 = vpack.c.b16 %v1188, %v1186
        %v1239 = vpack.c.b16 %v1189, %v1187
        %v1240 = vpack.c.b16 %v1192, %v1190
        %v1241 = vpack.c.b16 %v1193, %v1191
        %v1242 = vpack.c.b16 %v1196, %v1194
        %v1243 = vpack.c.b16 %v1197, %v1195
        %v1244 = vpack.c.b16 %v1200, %v1198
        %v1245 = vpack.c.b16 %v1201, %v1199
        %v1246 = vpack.c.b16 %v1204, %v1202
        %v1247 = vpack.c.b16 %v1205, %v1203
        %v1248 = vpack.c.b16 %v1208, %v1206
        %v1249 = vpack.c.b16 %v1209, %v1207
        %v1250 = vpack.c.b16 %v1212, %v1210
        %v1251 = vpack.c.b16 %v1213, %v1211
        %v1252 = vpack.c.b16 %v1216, %v1214
        %v1253 = vpack.c.b16 %v1217, %v1215
        %v1254 = vpack.c.b16 %v1220, %v1218
        %v1255 = vpack.c.b16 %v1221, %v1219
        %v1256 = vpack.c.b16 %v1224, %v1222
        %v1257 = vpack.c.b16 %v1225, %v1223
        %1290 = vmatprep.subr.bf16.mxu0 %v1227
        %1291 = vmatpush1.bf16.msra.mxu0 %v1226
        %1292 = vmatprep.subr.bf16.mxu0 %v1229
        %1293 = vmatpush1.bf16.msra.mxu0 %v1228
        %1294 = vmatprep.subr.bf16.mxu0 %v1231
        %1295 = vmatpush1.bf16.msra.mxu0 %v1230
        %1296 = vmatprep.subr.bf16.mxu0 %v1233
        %1297 = vmatpush1.bf16.msra.mxu0 %v1232
        %1298 = vmatprep.subr.bf16.mxu0 %v1235
        %1299 = vmatpush1.bf16.msra.mxu0 %v1234
        %1300 = vmatprep.subr.bf16.mxu0 %v1237
        %1301 = vmatpush1.bf16.msra.mxu0 %v1236
        %1302 = vmatprep.subr.bf16.mxu0 %v1239
        %1303 = vmatpush1.bf16.msra.mxu0 %v1238
        %1304 = vmatprep.subr.bf16.mxu0 %v1241
        %1305 = vmatpush1.bf16.msra.mxu0 %v1240
        %1306 = vmatprep.subr.bf16.mxu0 %v1243
        %1307 = vmatpush1.bf16.msra.mxu0 %v1242
        %1308 = vmatprep.subr.bf16.mxu0 %v1245
        %1309 = vmatpush1.bf16.msra.mxu0 %v1244
        %1310 = vmatprep.subr.bf16.mxu0 %v1247
        %1311 = vmatpush1.bf16.msra.mxu0 %v1246
        %1312 = vmatprep.subr.bf16.mxu0 %v1249
        %1313 = vmatpush1.bf16.msra.mxu0 %v1248
        %1314 = vmatprep.subr.bf16.mxu0 %v1251
        %1315 = vmatpush1.bf16.msra.mxu0 %v1250
        %1316 = vmatprep.subr.bf16.mxu0 %v1253
        %1317 = vmatpush1.bf16.msra.mxu0 %v1252
        %1318 = vmatprep.subr.bf16.mxu0 %v1255
        %1319 = vmatpush1.bf16.msra.mxu0 %v1254
        %1320 = vmatprep.subr.bf16.mxu0 %v1257
        %1321 = vmatpush1.bf16.msra.mxu0 %v1256
        %1322 = vmatprep.mubr.bf16.mxu0 %v1121
        %1323 = vmatmul.mubr.bf16.gmra.mrb[0].mxu0 %v1118
        %v1324 = vpop.f32.mrb[0].mxu0
        %v1325 = vadd.f32 0.0, %v1324
        %v1326 = vpop.f32.mrb[0].mxu0
        %v1327 = vadd.f32 0.0, %v1326
        %v1328 = vpop.f32.mrb[0].mxu0
        %v1329 = vadd.f32 0.0, %v1328
        %v1330 = vpop.f32.mrb[0].mxu0
        %v1331 = vadd.f32 0.0, %v1330
        %1332 = vmatprep.mubr.bf16.mxu0 %v1125
        %1333 = vmatmul.mubr.bf16.gmra.mrb[0].mxu0 %v1123
        %v1334 = vpop.f32.mrb[0].mxu0
        %v1335 = vadd.f32 0.0, %v1334
        %v1336 = vpop.f32.mrb[0].mxu0
        %v1337 = vadd.f32 0.0, %v1336
        %v1338 = vpop.f32.mrb[0].mxu0
        %v1339 = vadd.f32 0.0, %v1338
        %v1340 = vpop.f32.mrb[0].mxu0
        %v1341 = vadd.f32 0.0, %v1340
        %1342 = vdwg.mxu0
        %v1375 = vunpack.c.l.b16 %v1044
        %v1376 = vunpack.c.h.b16 %v1044
        %v1377 = vunpack.c.l.b16 %v1045
        %v1378 = vunpack.c.h.b16 %v1045
        %v1379 = vunpack.c.l.b16 %v1046
        %v1380 = vunpack.c.h.b16 %v1046
        %v1381 = vunpack.c.l.b16 %v1047
        %v1382 = vunpack.c.h.b16 %v1047
        %v1383 = vunpack.c.l.b16 %v1048
        %v1384 = vunpack.c.h.b16 %v1048
        %v1385 = vunpack.c.l.b16 %v1049
        %v1386 = vunpack.c.h.b16 %v1049
        %v1387 = vunpack.c.l.b16 %v1050
        %v1388 = vunpack.c.h.b16 %v1050
        %v1389 = vunpack.c.l.b16 %v1051
        %v1390 = vunpack.c.h.b16 %v1051
        %v1391 = vunpack.c.l.b16 %v1052
        %v1392 = vunpack.c.h.b16 %v1052
        %v1393 = vunpack.c.l.b16 %v1053
        %v1394 = vunpack.c.h.b16 %v1053
        %v1395 = vunpack.c.l.b16 %v1054
        %v1396 = vunpack.c.h.b16 %v1054
        %v1397 = vunpack.c.l.b16 %v1055
        %v1398 = vunpack.c.h.b16 %v1055
        %v1399 = vunpack.c.l.b16 %v1056
        %v1400 = vunpack.c.h.b16 %v1056
        %v1401 = vunpack.c.l.b16 %v1057
        %v1402 = vunpack.c.h.b16 %v1057
        %v1403 = vunpack.c.l.b16 %v1058
        %v1404 = vunpack.c.h.b16 %v1058
        %v1405 = vunpack.c.l.b16 %v1059
        %v1406 = vunpack.c.h.b16 %v1059
        %v1407 = vunpack.c.l.b16 %v1060
        %v1408 = vunpack.c.h.b16 %v1060
        %v1409 = vunpack.c.l.b16 %v1061
        %v1410 = vunpack.c.h.b16 %v1061
        %v1411 = vunpack.c.l.b16 %v1062
        %v1412 = vunpack.c.h.b16 %v1062
        %v1413 = vunpack.c.l.b16 %v1063
        %v1414 = vunpack.c.h.b16 %v1063
        %v1415 = vunpack.c.l.b16 %v1064
        %v1416 = vunpack.c.h.b16 %v1064
        %v1417 = vunpack.c.l.b16 %v1065
        %v1418 = vunpack.c.h.b16 %v1065
        %v1419 = vunpack.c.l.b16 %v1066
        %v1420 = vunpack.c.h.b16 %v1066
        %v1421 = vunpack.c.l.b16 %v1067
        %v1422 = vunpack.c.h.b16 %v1067
        %v1423 = vunpack.c.l.b16 %v1068
        %v1424 = vunpack.c.h.b16 %v1068
        %v1425 = vunpack.c.l.b16 %v1069
        %v1426 = vunpack.c.h.b16 %v1069
        %v1427 = vunpack.c.l.b16 %v1070
        %v1428 = vunpack.c.h.b16 %v1070
        %v1429 = vunpack.c.l.b16 %v1071
        %v1430 = vunpack.c.h.b16 %v1071
        %v1431 = vunpack.c.l.b16 %v1072
        %v1432 = vunpack.c.h.b16 %v1072
        %v1433 = vunpack.c.l.b16 %v1073
        %v1434 = vunpack.c.h.b16 %v1073
        %v1435 = vunpack.c.l.b16 %v1074
        %v1436 = vunpack.c.h.b16 %v1074
        %v1437 = vunpack.c.l.b16 %v1075
        %v1438 = vunpack.c.h.b16 %v1075
        %v1439 = vpack.c.b16 %v1377, %v1375
        %v1440 = vpack.c.b16 %v1378, %v1376
        %v1441 = vpack.c.b16 %v1381, %v1379
        %v1442 = vpack.c.b16 %v1382, %v1380
        %v1443 = vpack.c.b16 %v1385, %v1383
        %v1444 = vpack.c.b16 %v1386, %v1384
        %v1445 = vpack.c.b16 %v1389, %v1387
        %v1446 = vpack.c.b16 %v1390, %v1388
        %v1447 = vpack.c.b16 %v1393, %v1391
        %v1448 = vpack.c.b16 %v1394, %v1392
        %v1449 = vpack.c.b16 %v1397, %v1395
        %v1450 = vpack.c.b16 %v1398, %v1396
        %v1451 = vpack.c.b16 %v1401, %v1399
        %v1452 = vpack.c.b16 %v1402, %v1400
        %v1453 = vpack.c.b16 %v1405, %v1403
        %v1454 = vpack.c.b16 %v1406, %v1404
        %v1455 = vpack.c.b16 %v1409, %v1407
        %v1456 = vpack.c.b16 %v1410, %v1408
        %v1457 = vpack.c.b16 %v1413, %v1411
        %v1458 = vpack.c.b16 %v1414, %v1412
        %v1459 = vpack.c.b16 %v1417, %v1415
        %v1460 = vpack.c.b16 %v1418, %v1416
        %v1461 = vpack.c.b16 %v1421, %v1419
        %v1462 = vpack.c.b16 %v1422, %v1420
        %v1463 = vpack.c.b16 %v1425, %v1423
        %v1464 = vpack.c.b16 %v1426, %v1424
        %v1465 = vpack.c.b16 %v1429, %v1427
        %v1466 = vpack.c.b16 %v1430, %v1428
        %v1467 = vpack.c.b16 %v1433, %v1431
        %v1468 = vpack.c.b16 %v1434, %v1432
        %v1469 = vpack.c.b16 %v1437, %v1435
        %v1470 = vpack.c.b16 %v1438, %v1436
        %1503 = vmatprep.subr.bf16.mxu0 %v1440
        %1504 = vmatpush1.bf16.msra.mxu0 %v1439
        %1505 = vmatprep.subr.bf16.mxu0 %v1442
        %1506 = vmatpush1.bf16.msra.mxu0 %v1441
        %1507 = vmatprep.subr.bf16.mxu0 %v1444
        %1508 = vmatpush1.bf16.msra.mxu0 %v1443
        %1509 = vmatprep.subr.bf16.mxu0 %v1446
        %1510 = vmatpush1.bf16.msra.mxu0 %v1445
        %1511 = vmatprep.subr.bf16.mxu0 %v1448
        %1512 = vmatpush1.bf16.msra.mxu0 %v1447
        %1513 = vmatprep.subr.bf16.mxu0 %v1450
        %1514 = vmatpush1.bf16.msra.mxu0 %v1449
        %1515 = vmatprep.subr.bf16.mxu0 %v1452
        %1516 = vmatpush1.bf16.msra.mxu0 %v1451
        %1517 = vmatprep.subr.bf16.mxu0 %v1454
        %1518 = vmatpush1.bf16.msra.mxu0 %v1453
        %1519 = vmatprep.subr.bf16.mxu0 %v1456
        %1520 = vmatpush1.bf16.msra.mxu0 %v1455
        %1521 = vmatprep.subr.bf16.mxu0 %v1458
        %1522 = vmatpush1.bf16.msra.mxu0 %v1457
        %1523 = vmatprep.subr.bf16.mxu0 %v1460
        %1524 = vmatpush1.bf16.msra.mxu0 %v1459
        %1525 = vmatprep.subr.bf16.mxu0 %v1462
        %1526 = vmatpush1.bf16.msra.mxu0 %v1461
        %1527 = vmatprep.subr.bf16.mxu0 %v1464
        %1528 = vmatpush1.bf16.msra.mxu0 %v1463
        %1529 = vmatprep.subr.bf16.mxu0 %v1466
        %1530 = vmatpush1.bf16.msra.mxu0 %v1465
        %1531 = vmatprep.subr.bf16.mxu0 %v1468
        %1532 = vmatpush1.bf16.msra.mxu0 %v1467
        %1533 = vmatprep.subr.bf16.mxu0 %v1470
        %1534 = vmatpush1.bf16.msra.mxu0 %v1469
        %1535 = vmatprep.mubr.bf16.mxu0 %v1031
        %1536 = vmatmul.mubr.bf16.gmra.mrb[0].mxu0 %v1030
        %v1537 = vpop.f32.mrb[0].mxu0
        %v1538 = vadd.f32 %v1325, %v1537
        %v1539 = vpop.f32.mrb[0].mxu0
        %v1540 = vadd.f32 %v1327, %v1539
        %v1541 = vpop.f32.mrb[0].mxu0
        %v1542 = vadd.f32 %v1329, %v1541
        %v1543 = vpop.f32.mrb[0].mxu0
        %v1544 = vadd.f32 %v1331, %v1543
        %1545 = vmatprep.mubr.bf16.mxu0 %v1033
        %1546 = vmatmul.mubr.bf16.gmra.mrb[0].mxu0 %v1032
        %v1547 = vpop.f32.mrb[0].mxu0
        %v1548 = vadd.f32 %v1335, %v1547
        %v1549 = vpop.f32.mrb[0].mxu0
        %v1550 = vadd.f32 %v1337, %v1549
        %v1551 = vpop.f32.mrb[0].mxu0
        %v1552 = vadd.f32 %v1339, %v1551
        %v1553 = vpop.f32.mrb[0].mxu0
        %v1554 = vadd.f32 %v1341, %v1553
        %1555 = vdwg.mxu0
        %s1556 = scalar_lea.vmem %s2, 512
        %v1557 = vld [vmem:[%s1556] sm:$0xff]
        %v1558 = vld [vmem:[%s1556 + $0x8] sm:$0xff]
        %v1559 = vld [vmem:[%s1556 + $0x10] sm:$0xff]
        %v1560 = vld [vmem:[%s1556 + $0x18] sm:$0xff]
        %v1561 = vld [vmem:[%s1556 + $0x20] sm:$0xff]
        %v1562 = vld [vmem:[%s1556 + $0x28] sm:$0xff]
        %v1563 = vld [vmem:[%s1556 + $0x30] sm:$0xff]
        %v1564 = vld [vmem:[%s1556 + $0x38] sm:$0xff]
        %v1565 = vld [vmem:[%s1556 + $0x40] sm:$0xff]
        %v1566 = vld [vmem:[%s1556 + $0x48] sm:$0xff]
        %v1567 = vld [vmem:[%s1556 + $0x50] sm:$0xff]
        %v1568 = vld [vmem:[%s1556 + $0x58] sm:$0xff]
        %v1569 = vld [vmem:[%s1556 + $0x60] sm:$0xff]
        %v1570 = vld [vmem:[%s1556 + $0x68] sm:$0xff]
        %v1571 = vld [vmem:[%s1556 + $0x70] sm:$0xff]
        %v1572 = vld [vmem:[%s1556 + $0x78] sm:$0xff]
        %v1573 = vld [vmem:[%s1556 + $0x80] sm:$0xff]
        %v1574 = vld [vmem:[%s1556 + $0x88] sm:$0xff]
        %v1575 = vld [vmem:[%s1556 + $0x90] sm:$0xff]
        %v1576 = vld [vmem:[%s1556 + $0x98] sm:$0xff]
        %v1577 = vld [vmem:[%s1556 + $0xa0] sm:$0xff]
        %v1578 = vld [vmem:[%s1556 + $0xa8] sm:$0xff]
        %v1579 = vld [vmem:[%s1556 + $0xb0] sm:$0xff]
        %v1580 = vld [vmem:[%s1556 + $0xb8] sm:$0xff]
        %v1581 = vld [vmem:[%s1556 + $0xc0] sm:$0xff]
        %v1582 = vld [vmem:[%s1556 + $0xc8] sm:$0xff]
        %v1583 = vld [vmem:[%s1556 + $0xd0] sm:$0xff]
        %v1584 = vld [vmem:[%s1556 + $0xd8] sm:$0xff]
        %v1585 = vld [vmem:[%s1556 + $0xe0] sm:$0xff]
        %v1586 = vld [vmem:[%s1556 + $0xe8] sm:$0xff]
        %v1587 = vld [vmem:[%s1556 + $0xf0] sm:$0xff]
        %v1588 = vld [vmem:[%s1556 + $0xf8] sm:$0xff]
        %v1595 = vrot.slane %v1040, 4
        %v1596 = vrot.slane %v1032, 4
        %v1597 = vsel %vm1115, %v1595, %v1596
        %v1598 = vrot.slane %v1041, 4
        %v1599 = vrot.slane %v1033, 4
        %v1600 = vsel %vm1115, %v1598, %v1599
        %v1601 = vrot.slane %v1042, 4
        %v1602 = vsel %vm1115, %v1596, %v1601
        %v1603 = vrot.slane %v1043, 4
        %v1604 = vsel %vm1115, %v1599, %v1603
        %v1641 = vunpack.c.l.b16 %v1557
        %v1642 = vunpack.c.h.b16 %v1557
        %v1643 = vunpack.c.l.b16 %v1558
        %v1644 = vunpack.c.h.b16 %v1558
        %v1645 = vunpack.c.l.b16 %v1559
        %v1646 = vunpack.c.h.b16 %v1559
        %v1647 = vunpack.c.l.b16 %v1560
        %v1648 = vunpack.c.h.b16 %v1560
        %v1649 = vunpack.c.l.b16 %v1561
        %v1650 = vunpack.c.h.b16 %v1561
        %v1651 = vunpack.c.l.b16 %v1562
        %v1652 = vunpack.c.h.b16 %v1562
        %v1653 = vunpack.c.l.b16 %v1563
        %v1654 = vunpack.c.h.b16 %v1563
        %v1655 = vunpack.c.l.b16 %v1564
        %v1656 = vunpack.c.h.b16 %v1564
        %v1657 = vunpack.c.l.b16 %v1565
        %v1658 = vunpack.c.h.b16 %v1565
        %v1659 = vunpack.c.l.b16 %v1566
        %v1660 = vunpack.c.h.b16 %v1566
        %v1661 = vunpack.c.l.b16 %v1567
        %v1662 = vunpack.c.h.b16 %v1567
        %v1663 = vunpack.c.l.b16 %v1568
        %v1664 = vunpack.c.h.b16 %v1568
        %v1665 = vunpack.c.l.b16 %v1569
        %v1666 = vunpack.c.h.b16 %v1569
        %v1667 = vunpack.c.l.b16 %v1570
        %v1668 = vunpack.c.h.b16 %v1570
        %v1669 = vunpack.c.l.b16 %v1571
        %v1670 = vunpack.c.h.b16 %v1571
        %v1671 = vunpack.c.l.b16 %v1572
        %v1672 = vunpack.c.h.b16 %v1572
        %v1673 = vunpack.c.l.b16 %v1573
        %v1674 = vunpack.c.h.b16 %v1573
        %v1675 = vunpack.c.l.b16 %v1574
        %v1676 = vunpack.c.h.b16 %v1574
        %v1677 = vunpack.c.l.b16 %v1575
        %v1678 = vunpack.c.h.b16 %v1575
        %v1679 = vunpack.c.l.b16 %v1576
        %v1680 = vunpack.c.h.b16 %v1576
        %v1681 = vunpack.c.l.b16 %v1577
        %v1682 = vunpack.c.h.b16 %v1577
        %v1683 = vunpack.c.l.b16 %v1578
        %v1684 = vunpack.c.h.b16 %v1578
        %v1685 = vunpack.c.l.b16 %v1579
        %v1686 = vunpack.c.h.b16 %v1579
        %v1687 = vunpack.c.l.b16 %v1580
        %v1688 = vunpack.c.h.b16 %v1580
        %v1689 = vunpack.c.l.b16 %v1581
        %v1690 = vunpack.c.h.b16 %v1581
        %v1691 = vunpack.c.l.b16 %v1582
        %v1692 = vunpack.c.h.b16 %v1582
        %v1693 = vunpack.c.l.b16 %v1583
        %v1694 = vunpack.c.h.b16 %v1583
        %v1695 = vunpack.c.l.b16 %v1584
        %v1696 = vunpack.c.h.b16 %v1584
        %v1697 = vunpack.c.l.b16 %v1585
        %v1698 = vunpack.c.h.b16 %v1585
        %v1699 = vunpack.c.l.b16 %v1586
        %v1700 = vunpack.c.h.b16 %v1586
        %v1701 = vunpack.c.l.b16 %v1587
        %v1702 = vunpack.c.h.b16 %v1587
        %v1703 = vunpack.c.l.b16 %v1588
        %v1704 = vunpack.c.h.b16 %v1588
        %v1705 = vpack.c.b16 %v1643, %v1641
        %v1706 = vpack.c.b16 %v1644, %v1642
        %v1707 = vpack.c.b16 %v1647, %v1645
        %v1708 = vpack.c.b16 %v1648, %v1646
        %v1709 = vpack.c.b16 %v1651, %v1649
        %v1710 = vpack.c.b16 %v1652, %v1650
        %v1711 = vpack.c.b16 %v1655, %v1653
        %v1712 = vpack.c.b16 %v1656, %v1654
        %v1713 = vpack.c.b16 %v1659, %v1657
        %v1714 = vpack.c.b16 %v1660, %v1658
        %v1715 = vpack.c.b16 %v1663, %v1661
        %v1716 = vpack.c.b16 %v1664, %v1662
        %v1717 = vpack.c.b16 %v1667, %v1665
        %v1718 = vpack.c.b16 %v1668, %v1666
        %v1719 = vpack.c.b16 %v1671, %v1669
        %v1720 = vpack.c.b16 %v1672, %v1670
        %v1721 = vpack.c.b16 %v1675, %v1673
        %v1722 = vpack.c.b16 %v1676, %v1674
        %v1723 = vpack.c.b16 %v1679, %v1677
        %v1724 = vpack.c.b16 %v1680, %v1678
        %v1725 = vpack.c.b16 %v1683, %v1681
        %v1726 = vpack.c.b16 %v1684, %v1682
        %v1727 = vpack.c.b16 %v1687, %v1685
        %v1728 = vpack.c.b16 %v1688, %v1686
        %v1729 = vpack.c.b16 %v1691, %v1689
        %v1730 = vpack.c.b16 %v1692, %v1690
        %v1731 = vpack.c.b16 %v1695, %v1693
        %v1732 = vpack.c.b16 %v1696, %v1694
        %v1733 = vpack.c.b16 %v1699, %v1697
        %v1734 = vpack.c.b16 %v1700, %v1698
        %v1735 = vpack.c.b16 %v1703, %v1701
        %v1736 = vpack.c.b16 %v1704, %v1702
        %1769 = vmatprep.subr.bf16.mxu0 %v1706
        %1770 = vmatpush1.bf16.msra.mxu0 %v1705
        %1771 = vmatprep.subr.bf16.mxu0 %v1708
        %1772 = vmatpush1.bf16.msra.mxu0 %v1707
        %1773 = vmatprep.subr.bf16.mxu0 %v1710
        %1774 = vmatpush1.bf16.msra.mxu0 %v1709
        %1775 = vmatprep.subr.bf16.mxu0 %v1712
        %1776 = vmatpush1.bf16.msra.mxu0 %v1711
        %1777 = vmatprep.subr.bf16.mxu0 %v1714
        %1778 = vmatpush1.bf16.msra.mxu0 %v1713
        %1779 = vmatprep.subr.bf16.mxu0 %v1716
        %1780 = vmatpush1.bf16.msra.mxu0 %v1715
        %1781 = vmatprep.subr.bf16.mxu0 %v1718
        %1782 = vmatpush1.bf16.msra.mxu0 %v1717
        %1783 = vmatprep.subr.bf16.mxu0 %v1720
        %1784 = vmatpush1.bf16.msra.mxu0 %v1719
        %1785 = vmatprep.subr.bf16.mxu0 %v1722
        %1786 = vmatpush1.bf16.msra.mxu0 %v1721
        %1787 = vmatprep.subr.bf16.mxu0 %v1724
        %1788 = vmatpush1.bf16.msra.mxu0 %v1723
        %1789 = vmatprep.subr.bf16.mxu0 %v1726
        %1790 = vmatpush1.bf16.msra.mxu0 %v1725
        %1791 = vmatprep.subr.bf16.mxu0 %v1728
        %1792 = vmatpush1.bf16.msra.mxu0 %v1727
        %1793 = vmatprep.subr.bf16.mxu0 %v1730
        %1794 = vmatpush1.bf16.msra.mxu0 %v1729
        %1795 = vmatprep.subr.bf16.mxu0 %v1732
        %1796 = vmatpush1.bf16.msra.mxu0 %v1731
        %1797 = vmatprep.subr.bf16.mxu0 %v1734
        %1798 = vmatpush1.bf16.msra.mxu0 %v1733
        %1799 = vmatprep.subr.bf16.mxu0 %v1736
        %1800 = vmatpush1.bf16.msra.mxu0 %v1735
        %1801 = vmatprep.mubr.bf16.mxu0 %v1600
        %1802 = vmatmul.mubr.bf16.gmra.mrb[0].mxu0 %v1597
        %v1803 = vpop.f32.mrb[0].mxu0
        %v1804 = vadd.f32 0.0, %v1803
        %v1805 = vpop.f32.mrb[0].mxu0
        %v1806 = vadd.f32 0.0, %v1805
        %v1807 = vpop.f32.mrb[0].mxu0
        %v1808 = vadd.f32 0.0, %v1807
        %v1809 = vpop.f32.mrb[0].mxu0
        %v1810 = vadd.f32 0.0, %v1809
        %1811 = vmatprep.mubr.bf16.mxu0 %v1604
        %1812 = vmatmul.mubr.bf16.gmra.mrb[0].mxu0 %v1602
        %v1813 = vpop.f32.mrb[0].mxu0
        %v1814 = vadd.f32 0.0, %v1813
        %v1815 = vpop.f32.mrb[0].mxu0
        %v1816 = vadd.f32 0.0, %v1815
        %v1817 = vpop.f32.mrb[0].mxu0
        %v1818 = vadd.f32 0.0, %v1817
        %v1819 = vpop.f32.mrb[0].mxu0
        %v1820 = vadd.f32 0.0, %v1819
        %1821 = vdwg.mxu0
        %v1822 = vadd.f32 %v1538, %v1804
        %v1823 = vadd.f32 %v1540, %v1806
        %v1824 = vadd.f32 %v1542, %v1808
        %v1825 = vadd.f32 %v1544, %v1810
        %v1826 = vadd.f32 %v1548, %v1814
        %v1827 = vadd.f32 %v1550, %v1816
        %v1828 = vadd.f32 %v1552, %v1818
        %v1829 = vadd.f32 %v1554, %v1820
        %v1831 = vlaneseq
        %v1832 = vshrl.u32 %v1831, 7
        %v1833 = vsub.s32 0, %v1832
        %v1834 = vrot.slane %v1029, %v1833
        %v1835 = vlaneseq
        %v1836 = vshrl.u32 %v1835, 7
        %v1837 = vsub.s32 1, %v1836
        %v1838 = vrot.slane %v1029, %v1837
        %v1841 = vadd.f32 %v1822, %v1834
        %v1842 = vadd.f32 %v1823, %v1838
        %v1843 = vadd.f32 %v1824, %v1834
        %v1844 = vadd.f32 %v1825, %v1838
        %v1845 = vadd.f32 %v1826, %v1834
        %v1846 = vadd.f32 %v1827, %v1838
        %v1847 = vadd.f32 %v1828, %v1834
        %v1848 = vadd.f32 %v1829, %v1838
        %v1849 = vmax.f32 %v1841, 0.0
        %v1850 = vmax.f32 %v1842, 0.0
        %v1851 = vmax.f32 %v1843, 0.0
        %v1852 = vmax.f32 %v1844, 0.0
        %v1853 = vmax.f32 %v1845, 0.0
        %v1854 = vmax.f32 %v1846, 0.0
        %v1855 = vmax.f32 %v1847, 0.0
        %v1856 = vmax.f32 %v1848, 0.0
        %v1857 = vpack.c.bf16 %v1851, %v1849
        %v1858 = vpack.c.bf16 %v1852, %v1850
        %v1859 = vpack.c.bf16 %v1855, %v1853
        %v1860 = vpack.c.bf16 %v1856, %v1854
        %1861 = vst [vmem:[#allocation3] sm:$0xf] 0
        %1862 = vst [vmem:[#allocation3 + $0x8] sm:$0xf] 0
        %1863 = vst [vmem:[#allocation3 + $0x20] sm:$0xf0] 0
        %1864 = vst [vmem:[#allocation3 + $0x28] sm:$0xf0] 0
        %v1867 = vrot.slane %v1857, 4
        %v1868 = vrot.slane %v1858, 4
        %1871 = vst [vmem:[#allocation3 + $0x10] sm:$0xf0] %v1867
        %1872 = vst [vmem:[#allocation3 + $0x18] sm:$0xf0] %v1868
        %1873 = vst [vmem:[#allocation3] sm:$0xf0] %v1857
        %1874 = vst [vmem:[#allocation3 + $0x8] sm:$0xf0] %v1858
        %1875 = vst [vmem:[#allocation3 + $0x20] sm:$0xf] %v1859
        %1876 = vst [vmem:[#allocation3 + $0x28] sm:$0xf] %v1860
        %v1879 = vrot.slane %v1859, 4
        %v1880 = vrot.slane %v1860, 4
        %1883 = vst [vmem:[#allocation3 + $0x10] sm:$0xf] %v1879
        %1884 = vst [vmem:[#allocation3 + $0x18] sm:$0xf] %v1880
        %s1885 = scalar_lea.vmem %s8, 2
        %v1886 = vld [vmem:[%s1885] ss:$8 sm:$0x3]
        %v1887 = vld [vmem:[#allocation3] sm:$0xff]
        %v1888 = vld [vmem:[#allocation3 + $0x8] sm:$0xff]
        %v1889 = vld [vmem:[#allocation3 + $0x10] sm:$0xf0]
        %v1890 = vld [vmem:[#allocation3 + $0x18] sm:$0xf0]
        %v1891 = vld [vmem:[#allocation3 + $0x20] sm:$0xf]
        %v1892 = vld [vmem:[#allocation3 + $0x28] sm:$0xf]
        %v1893 = vld [vmem:[#allocation3] sm:$0xf0]
        %v1894 = vld [vmem:[#allocation3 + $0x8] sm:$0xf0]
        %v1895 = vld [vmem:[#allocation3 + $0x10] sm:$0xf]
        %v1896 = vld [vmem:[#allocation3 + $0x18] sm:$0xf]
        %v1897 = vld [vmem:[%s3] sm:$0xff]
        %v1898 = vld [vmem:[%s3 + $0x8] sm:$0xff]
        %v1899 = vld [vmem:[%s3 + $0x10] sm:$0xff]
        %v1900 = vld [vmem:[%s3 + $0x18] sm:$0xff]
        %v1901 = vld [vmem:[%s3 + $0x20] sm:$0xff]
        %v1902 = vld [vmem:[%s3 + $0x28] sm:$0xff]
        %v1903 = vld [vmem:[%s3 + $0x30] sm:$0xff]
        %v1904 = vld [vmem:[%s3 + $0x38] sm:$0xff]
        %v1905 = vld [vmem:[%s3 + $0x40] sm:$0xff]
        %v1906 = vld [vmem:[%s3 + $0x48] sm:$0xff]
        %v1907 = vld [vmem:[%s3 + $0x50] sm:$0xff]
        %v1908 = vld [vmem:[%s3 + $0x58] sm:$0xff]
        %v1909 = vld [vmem:[%s3 + $0x60] sm:$0xff]
        %v1910 = vld [vmem:[%s3 + $0x68] sm:$0xff]
        %v1911 = vld [vmem:[%s3 + $0x70] sm:$0xff]
        %v1912 = vld [vmem:[%s3 + $0x78] sm:$0xff]
        %v1913 = vld [vmem:[%s3 + $0x80] sm:$0xff]
        %v1914 = vld [vmem:[%s3 + $0x88] sm:$0xff]
        %v1915 = vld [vmem:[%s3 + $0x90] sm:$0xff]
        %v1916 = vld [vmem:[%s3 + $0x98] sm:$0xff]
        %v1917 = vld [vmem:[%s3 + $0xa0] sm:$0xff]
        %v1918 = vld [vmem:[%s3 + $0xa8] sm:$0xff]
        %v1919 = vld [vmem:[%s3 + $0xb0] sm:$0xff]
        %v1920 = vld [vmem:[%s3 + $0xb8] sm:$0xff]
        %v1921 = vld [vmem:[%s3 + $0xc0] sm:$0xff]
        %v1922 = vld [vmem:[%s3 + $0xc8] sm:$0xff]
        %v1923 = vld [vmem:[%s3 + $0xd0] sm:$0xff]
        %v1924 = vld [vmem:[%s3 + $0xd8] sm:$0xff]
        %v1925 = vld [vmem:[%s3 + $0xe0] sm:$0xff]
        %v1926 = vld [vmem:[%s3 + $0xe8] sm:$0xff]
        %v1927 = vld [vmem:[%s3 + $0xf0] sm:$0xff]
        %v1928 = vld [vmem:[%s3 + $0xf8] sm:$0xff]
        %s1929 = scalar_lea.vmem %s3, 256
        %v1930 = vld [vmem:[%s1929] sm:$0xff]
        %v1931 = vld [vmem:[%s1929 + $0x8] sm:$0xff]
        %v1932 = vld [vmem:[%s1929 + $0x10] sm:$0xff]
        %v1933 = vld [vmem:[%s1929 + $0x18] sm:$0xff]
        %v1934 = vld [vmem:[%s1929 + $0x20] sm:$0xff]
        %v1935 = vld [vmem:[%s1929 + $0x28] sm:$0xff]
        %v1936 = vld [vmem:[%s1929 + $0x30] sm:$0xff]
        %v1937 = vld [vmem:[%s1929 + $0x38] sm:$0xff]
        %v1938 = vld [vmem:[%s1929 + $0x40] sm:$0xff]
        %v1939 = vld [vmem:[%s1929 + $0x48] sm:$0xff]
        %v1940 = vld [vmem:[%s1929 + $0x50] sm:$0xff]
        %v1941 = vld [vmem:[%s1929 + $0x58] sm:$0xff]
        %v1942 = vld [vmem:[%s1929 + $0x60] sm:$0xff]
        %v1943 = vld [vmem:[%s1929 + $0x68] sm:$0xff]
        %v1944 = vld [vmem:[%s1929 + $0x70] sm:$0xff]
        %v1945 = vld [vmem:[%s1929 + $0x78] sm:$0xff]
        %v1946 = vld [vmem:[%s1929 + $0x80] sm:$0xff]
        %v1947 = vld [vmem:[%s1929 + $0x88] sm:$0xff]
        %v1948 = vld [vmem:[%s1929 + $0x90] sm:$0xff]
        %v1949 = vld [vmem:[%s1929 + $0x98] sm:$0xff]
        %v1950 = vld [vmem:[%s1929 + $0xa0] sm:$0xff]
        %v1951 = vld [vmem:[%s1929 + $0xa8] sm:$0xff]
        %v1952 = vld [vmem:[%s1929 + $0xb0] sm:$0xff]
        %v1953 = vld [vmem:[%s1929 + $0xb8] sm:$0xff]
        %v1954 = vld [vmem:[%s1929 + $0xc0] sm:$0xff]
        %v1955 = vld [vmem:[%s1929 + $0xc8] sm:$0xff]
        %v1956 = vld [vmem:[%s1929 + $0xd0] sm:$0xff]
        %v1957 = vld [vmem:[%s1929 + $0xd8] sm:$0xff]
        %v1958 = vld [vmem:[%s1929 + $0xe0] sm:$0xff]
        %v1959 = vld [vmem:[%s1929 + $0xe8] sm:$0xff]
        %v1960 = vld [vmem:[%s1929 + $0xf0] sm:$0xff]
        %v1961 = vld [vmem:[%s1929 + $0xf8] sm:$0xff]
        %v1966 = vrot.slane %v1889, 4
        %v1967 = vrot.slane %v1891, 4
        %v1968 = vsel %vm1115, %v1966, %v1967
        %v1969 = vrot.slane %v1890, 4
        %v1970 = vrot.slane %v1892, 4
        %v1971 = vsel %vm1115, %v1969, %v1970
        %v2006 = vunpack.c.l.b16 %v1930
        %v2007 = vunpack.c.h.b16 %v1930
        %v2008 = vunpack.c.l.b16 %v1931
        %v2009 = vunpack.c.h.b16 %v1931
        %v2010 = vunpack.c.l.b16 %v1932
        %v2011 = vunpack.c.h.b16 %v1932
        %v2012 = vunpack.c.l.b16 %v1933
        %v2013 = vunpack.c.h.b16 %v1933
        %v2014 = vunpack.c.l.b16 %v1934
        %v2015 = vunpack.c.h.b16 %v1934
        %v2016 = vunpack.c.l.b16 %v1935
        %v2017 = vunpack.c.h.b16 %v1935
        %v2018 = vunpack.c.l.b16 %v1936
        %v2019 = vunpack.c.h.b16 %v1936
        %v2020 = vunpack.c.l.b16 %v1937
        %v2021 = vunpack.c.h.b16 %v1937
        %v2022 = vunpack.c.l.b16 %v1938
        %v2023 = vunpack.c.h.b16 %v1938
        %v2024 = vunpack.c.l.b16 %v1939
        %v2025 = vunpack.c.h.b16 %v1939
        %v2026 = vunpack.c.l.b16 %v1940
        %v2027 = vunpack.c.h.b16 %v1940
        %v2028 = vunpack.c.l.b16 %v1941
        %v2029 = vunpack.c.h.b16 %v1941
        %v2030 = vunpack.c.l.b16 %v1942
        %v2031 = vunpack.c.h.b16 %v1942
        %v2032 = vunpack.c.l.b16 %v1943
        %v2033 = vunpack.c.h.b16 %v1943
        %v2034 = vunpack.c.l.b16 %v1944
        %v2035 = vunpack.c.h.b16 %v1944
        %v2036 = vunpack.c.l.b16 %v1945
        %v2037 = vunpack.c.h.b16 %v1945
        %v2038 = vunpack.c.l.b16 %v1946
        %v2039 = vunpack.c.h.b16 %v1946
        %v2040 = vunpack.c.l.b16 %v1947
        %v2041 = vunpack.c.h.b16 %v1947
        %v2042 = vunpack.c.l.b16 %v1948
        %v2043 = vunpack.c.h.b16 %v1948
        %v2044 = vunpack.c.l.b16 %v1949
        %v2045 = vunpack.c.h.b16 %v1949
        %v2046 = vunpack.c.l.b16 %v1950
        %v2047 = vunpack.c.h.b16 %v1950
        %v2048 = vunpack.c.l.b16 %v1951
        %v2049 = vunpack.c.h.b16 %v1951
        %v2050 = vunpack.c.l.b16 %v1952
        %v2051 = vunpack.c.h.b16 %v1952
        %v2052 = vunpack.c.l.b16 %v1953
        %v2053 = vunpack.c.h.b16 %v1953
        %v2054 = vunpack.c.l.b16 %v1954
        %v2055 = vunpack.c.h.b16 %v1954
        %v2056 = vunpack.c.l.b16 %v1955
        %v2057 = vunpack.c.h.b16 %v1955
        %v2058 = vunpack.c.l.b16 %v1956
        %v2059 = vunpack.c.h.b16 %v1956
        %v2060 = vunpack.c.l.b16 %v1957
        %v2061 = vunpack.c.h.b16 %v1957
        %v2062 = vunpack.c.l.b16 %v1958
        %v2063 = vunpack.c.h.b16 %v1958
        %v2064 = vunpack.c.l.b16 %v1959
        %v2065 = vunpack.c.h.b16 %v1959
        %v2066 = vunpack.c.l.b16 %v1960
        %v2067 = vunpack.c.h.b16 %v1960
        %v2068 = vunpack.c.l.b16 %v1961
        %v2069 = vunpack.c.h.b16 %v1961
        %v2070 = vpack.c.b16 %v2008, %v2006
        %v2071 = vpack.c.b16 %v2009, %v2007
        %v2072 = vpack.c.b16 %v2012, %v2010
        %v2073 = vpack.c.b16 %v2013, %v2011
        %v2074 = vpack.c.b16 %v2016, %v2014
        %v2075 = vpack.c.b16 %v2017, %v2015
        %v2076 = vpack.c.b16 %v2020, %v2018
        %v2077 = vpack.c.b16 %v2021, %v2019
        %v2078 = vpack.c.b16 %v2024, %v2022
        %v2079 = vpack.c.b16 %v2025, %v2023
        %v2080 = vpack.c.b16 %v2028, %v2026
        %v2081 = vpack.c.b16 %v2029, %v2027
        %v2082 = vpack.c.b16 %v2032, %v2030
        %v2083 = vpack.c.b16 %v2033, %v2031
        %v2084 = vpack.c.b16 %v2036, %v2034
        %v2085 = vpack.c.b16 %v2037, %v2035
        %v2086 = vpack.c.b16 %v2040, %v2038
        %v2087 = vpack.c.b16 %v2041, %v2039
        %v2088 = vpack.c.b16 %v2044, %v2042
        %v2089 = vpack.c.b16 %v2045, %v2043
        %v2090 = vpack.c.b16 %v2048, %v2046
        %v2091 = vpack.c.b16 %v2049, %v2047
        %v2092 = vpack.c.b16 %v2052, %v2050
        %v2093 = vpack.c.b16 %v2053, %v2051
        %v2094 = vpack.c.b16 %v2056, %v2054
        %v2095 = vpack.c.b16 %v2057, %v2055
        %v2096 = vpack.c.b16 %v2060, %v2058
        %v2097 = vpack.c.b16 %v2061, %v2059
        %v2098 = vpack.c.b16 %v2064, %v2062
        %v2099 = vpack.c.b16 %v2065, %v2063
        %v2100 = vpack.c.b16 %v2068, %v2066
        %v2101 = vpack.c.b16 %v2069, %v2067
        %2134 = vmatprep.subr.bf16.mxu0 %v2071
        %2135 = vmatpush1.bf16.msra.mxu0 %v2070
        %2136 = vmatprep.subr.bf16.mxu0 %v2073
        %2137 = vmatpush1.bf16.msra.mxu0 %v2072
        %2138 = vmatprep.subr.bf16.mxu0 %v2075
        %2139 = vmatpush1.bf16.msra.mxu0 %v2074
        %2140 = vmatprep.subr.bf16.mxu0 %v2077
        %2141 = vmatpush1.bf16.msra.mxu0 %v2076
        %2142 = vmatprep.subr.bf16.mxu0 %v2079
        %2143 = vmatpush1.bf16.msra.mxu0 %v2078
        %2144 = vmatprep.subr.bf16.mxu0 %v2081
        %2145 = vmatpush1.bf16.msra.mxu0 %v2080
        %2146 = vmatprep.subr.bf16.mxu0 %v2083
        %2147 = vmatpush1.bf16.msra.mxu0 %v2082
        %2148 = vmatprep.subr.bf16.mxu0 %v2085
        %2149 = vmatpush1.bf16.msra.mxu0 %v2084
        %2150 = vmatprep.subr.bf16.mxu0 %v2087
        %2151 = vmatpush1.bf16.msra.mxu0 %v2086
        %2152 = vmatprep.subr.bf16.mxu0 %v2089
        %2153 = vmatpush1.bf16.msra.mxu0 %v2088
        %2154 = vmatprep.subr.bf16.mxu0 %v2091
        %2155 = vmatpush1.bf16.msra.mxu0 %v2090
        %2156 = vmatprep.subr.bf16.mxu0 %v2093
        %2157 = vmatpush1.bf16.msra.mxu0 %v2092
        %2158 = vmatprep.subr.bf16.mxu0 %v2095
        %2159 = vmatpush1.bf16.msra.mxu0 %v2094
        %2160 = vmatprep.subr.bf16.mxu0 %v2097
        %2161 = vmatpush1.bf16.msra.mxu0 %v2096
        %2162 = vmatprep.subr.bf16.mxu0 %v2099
        %2163 = vmatpush1.bf16.msra.mxu0 %v2098
        %2164 = vmatprep.subr.bf16.mxu0 %v2101
        %2165 = vmatpush1.bf16.msra.mxu0 %v2100
        %2166 = vmatprep.mubr.bf16.mxu0 %v1971
        %2167 = vmatmul.mubr.bf16.gmra.mrb[0].mxu0 %v1968
        %v2168 = vpop.f32.mrb[0].mxu0
        %v2169 = vadd.f32 0.0, %v2168
        %v2170 = vpop.f32.mrb[0].mxu0
        %v2171 = vadd.f32 0.0, %v2170
        %v2172 = vpop.f32.mrb[0].mxu0
        %v2173 = vadd.f32 0.0, %v2172
        %v2174 = vpop.f32.mrb[0].mxu0
        %v2175 = vadd.f32 0.0, %v2174
        %2176 = vdwg.mxu0
        %v2209 = vunpack.c.l.b16 %v1897
        %v2210 = vunpack.c.h.b16 %v1897
        %v2211 = vunpack.c.l.b16 %v1898
        %v2212 = vunpack.c.h.b16 %v1898
        %v2213 = vunpack.c.l.b16 %v1899
        %v2214 = vunpack.c.h.b16 %v1899
        %v2215 = vunpack.c.l.b16 %v1900
        %v2216 = vunpack.c.h.b16 %v1900
        %v2217 = vunpack.c.l.b16 %v1901
        %v2218 = vunpack.c.h.b16 %v1901
        %v2219 = vunpack.c.l.b16 %v1902
        %v2220 = vunpack.c.h.b16 %v1902
        %v2221 = vunpack.c.l.b16 %v1903
        %v2222 = vunpack.c.h.b16 %v1903
        %v2223 = vunpack.c.l.b16 %v1904
        %v2224 = vunpack.c.h.b16 %v1904
        %v2225 = vunpack.c.l.b16 %v1905
        %v2226 = vunpack.c.h.b16 %v1905
        %v2227 = vunpack.c.l.b16 %v1906
        %v2228 = vunpack.c.h.b16 %v1906
        %v2229 = vunpack.c.l.b16 %v1907
        %v2230 = vunpack.c.h.b16 %v1907
        %v2231 = vunpack.c.l.b16 %v1908
        %v2232 = vunpack.c.h.b16 %v1908
        %v2233 = vunpack.c.l.b16 %v1909
        %v2234 = vunpack.c.h.b16 %v1909
        %v2235 = vunpack.c.l.b16 %v1910
        %v2236 = vunpack.c.h.b16 %v1910
        %v2237 = vunpack.c.l.b16 %v1911
        %v2238 = vunpack.c.h.b16 %v1911
        %v2239 = vunpack.c.l.b16 %v1912
        %v2240 = vunpack.c.h.b16 %v1912
        %v2241 = vunpack.c.l.b16 %v1913
        %v2242 = vunpack.c.h.b16 %v1913
        %v2243 = vunpack.c.l.b16 %v1914
        %v2244 = vunpack.c.h.b16 %v1914
        %v2245 = vunpack.c.l.b16 %v1915
        %v2246 = vunpack.c.h.b16 %v1915
        %v2247 = vunpack.c.l.b16 %v1916
        %v2248 = vunpack.c.h.b16 %v1916
        %v2249 = vunpack.c.l.b16 %v1917
        %v2250 = vunpack.c.h.b16 %v1917
        %v2251 = vunpack.c.l.b16 %v1918
        %v2252 = vunpack.c.h.b16 %v1918
        %v2253 = vunpack.c.l.b16 %v1919
        %v2254 = vunpack.c.h.b16 %v1919
        %v2255 = vunpack.c.l.b16 %v1920
        %v2256 = vunpack.c.h.b16 %v1920
        %v2257 = vunpack.c.l.b16 %v1921
        %v2258 = vunpack.c.h.b16 %v1921
        %v2259 = vunpack.c.l.b16 %v1922
        %v2260 = vunpack.c.h.b16 %v1922
        %v2261 = vunpack.c.l.b16 %v1923
        %v2262 = vunpack.c.h.b16 %v1923
        %v2263 = vunpack.c.l.b16 %v1924
        %v2264 = vunpack.c.h.b16 %v1924
        %v2265 = vunpack.c.l.b16 %v1925
        %v2266 = vunpack.c.h.b16 %v1925
        %v2267 = vunpack.c.l.b16 %v1926
        %v2268 = vunpack.c.h.b16 %v1926
        %v2269 = vunpack.c.l.b16 %v1927
        %v2270 = vunpack.c.h.b16 %v1927
        %v2271 = vunpack.c.l.b16 %v1928
        %v2272 = vunpack.c.h.b16 %v1928
        %v2273 = vpack.c.b16 %v2211, %v2209
        %v2274 = vpack.c.b16 %v2212, %v2210
        %v2275 = vpack.c.b16 %v2215, %v2213
        %v2276 = vpack.c.b16 %v2216, %v2214
        %v2277 = vpack.c.b16 %v2219, %v2217
        %v2278 = vpack.c.b16 %v2220, %v2218
        %v2279 = vpack.c.b16 %v2223, %v2221
        %v2280 = vpack.c.b16 %v2224, %v2222
        %v2281 = vpack.c.b16 %v2227, %v2225
        %v2282 = vpack.c.b16 %v2228, %v2226
        %v2283 = vpack.c.b16 %v2231, %v2229
        %v2284 = vpack.c.b16 %v2232, %v2230
        %v2285 = vpack.c.b16 %v2235, %v2233
        %v2286 = vpack.c.b16 %v2236, %v2234
        %v2287 = vpack.c.b16 %v2239, %v2237
        %v2288 = vpack.c.b16 %v2240, %v2238
        %v2289 = vpack.c.b16 %v2243, %v2241
        %v2290 = vpack.c.b16 %v2244, %v2242
        %v2291 = vpack.c.b16 %v2247, %v2245
        %v2292 = vpack.c.b16 %v2248, %v2246
        %v2293 = vpack.c.b16 %v2251, %v2249
        %v2294 = vpack.c.b16 %v2252, %v2250
        %v2295 = vpack.c.b16 %v2255, %v2253
        %v2296 = vpack.c.b16 %v2256, %v2254
        %v2297 = vpack.c.b16 %v2259, %v2257
        %v2298 = vpack.c.b16 %v2260, %v2258
        %v2299 = vpack.c.b16 %v2263, %v2261
        %v2300 = vpack.c.b16 %v2264, %v2262
        %v2301 = vpack.c.b16 %v2267, %v2265
        %v2302 = vpack.c.b16 %v2268, %v2266
        %v2303 = vpack.c.b16 %v2271, %v2269
        %v2304 = vpack.c.b16 %v2272, %v2270
        %2337 = vmatprep.subr.bf16.mxu0 %v2274
        %2338 = vmatpush1.bf16.msra.mxu0 %v2273
        %2339 = vmatprep.subr.bf16.mxu0 %v2276
        %2340 = vmatpush1.bf16.msra.mxu0 %v2275
        %2341 = vmatprep.subr.bf16.mxu0 %v2278
        %2342 = vmatpush1.bf16.msra.mxu0 %v2277
        %2343 = vmatprep.subr.bf16.mxu0 %v2280
        %2344 = vmatpush1.bf16.msra.mxu0 %v2279
        %2345 = vmatprep.subr.bf16.mxu0 %v2282
        %2346 = vmatpush1.bf16.msra.mxu0 %v2281
        %2347 = vmatprep.subr.bf16.mxu0 %v2284
        %2348 = vmatpush1.bf16.msra.mxu0 %v2283
        %2349 = vmatprep.subr.bf16.mxu0 %v2286
        %2350 = vmatpush1.bf16.msra.mxu0 %v2285
        %2351 = vmatprep.subr.bf16.mxu0 %v2288
        %2352 = vmatpush1.bf16.msra.mxu0 %v2287
        %2353 = vmatprep.subr.bf16.mxu0 %v2290
        %2354 = vmatpush1.bf16.msra.mxu0 %v2289
        %2355 = vmatprep.subr.bf16.mxu0 %v2292
        %2356 = vmatpush1.bf16.msra.mxu0 %v2291
        %2357 = vmatprep.subr.bf16.mxu0 %v2294
        %2358 = vmatpush1.bf16.msra.mxu0 %v2293
        %2359 = vmatprep.subr.bf16.mxu0 %v2296
        %2360 = vmatpush1.bf16.msra.mxu0 %v2295
        %2361 = vmatprep.subr.bf16.mxu0 %v2298
        %2362 = vmatpush1.bf16.msra.mxu0 %v2297
        %2363 = vmatprep.subr.bf16.mxu0 %v2300
        %2364 = vmatpush1.bf16.msra.mxu0 %v2299
        %2365 = vmatprep.subr.bf16.mxu0 %v2302
        %2366 = vmatpush1.bf16.msra.mxu0 %v2301
        %2367 = vmatprep.subr.bf16.mxu0 %v2304
        %2368 = vmatpush1.bf16.msra.mxu0 %v2303
        %2369 = vmatprep.mubr.bf16.mxu0 %v1888
        %2370 = vmatmul.mubr.bf16.gmra.mrb[0].mxu0 %v1887
        %v2371 = vpop.f32.mrb[0].mxu0
        %v2372 = vadd.f32 %v2169, %v2371
        %v2373 = vpop.f32.mrb[0].mxu0
        %v2374 = vadd.f32 %v2171, %v2373
        %v2375 = vpop.f32.mrb[0].mxu0
        %v2376 = vadd.f32 %v2173, %v2375
        %v2377 = vpop.f32.mrb[0].mxu0
        %v2378 = vadd.f32 %v2175, %v2377
        %2379 = vdwg.mxu0
        %s2380 = scalar_lea.vmem %s3, 512
        %v2381 = vld [vmem:[%s2380] sm:$0xff]
        %v2382 = vld [vmem:[%s2380 + $0x8] sm:$0xff]
        %v2383 = vld [vmem:[%s2380 + $0x10] sm:$0xff]
        %v2384 = vld [vmem:[%s2380 + $0x18] sm:$0xff]
        %v2385 = vld [vmem:[%s2380 + $0x20] sm:$0xff]
        %v2386 = vld [vmem:[%s2380 + $0x28] sm:$0xff]
        %v2387 = vld [vmem:[%s2380 + $0x30] sm:$0xff]
        %v2388 = vld [vmem:[%s2380 + $0x38] sm:$0xff]
        %v2389 = vld [vmem:[%s2380 + $0x40] sm:$0xff]
        %v2390 = vld [vmem:[%s2380 + $0x48] sm:$0xff]
        %v2391 = vld [vmem:[%s2380 + $0x50] sm:$0xff]
        %v2392 = vld [vmem:[%s2380 + $0x58] sm:$0xff]
        %v2393 = vld [vmem:[%s2380 + $0x60] sm:$0xff]
        %v2394 = vld [vmem:[%s2380 + $0x68] sm:$0xff]
        %v2395 = vld [vmem:[%s2380 + $0x70] sm:$0xff]
        %v2396 = vld [vmem:[%s2380 + $0x78] sm:$0xff]
        %v2397 = vld [vmem:[%s2380 + $0x80] sm:$0xff]
        %v2398 = vld [vmem:[%s2380 + $0x88] sm:$0xff]
        %v2399 = vld [vmem:[%s2380 + $0x90] sm:$0xff]
        %v2400 = vld [vmem:[%s2380 + $0x98] sm:$0xff]
        %v2401 = vld [vmem:[%s2380 + $0xa0] sm:$0xff]
        %v2402 = vld [vmem:[%s2380 + $0xa8] sm:$0xff]
        %v2403 = vld [vmem:[%s2380 + $0xb0] sm:$0xff]
        %v2404 = vld [vmem:[%s2380 + $0xb8] sm:$0xff]
        %v2405 = vld [vmem:[%s2380 + $0xc0] sm:$0xff]
        %v2406 = vld [vmem:[%s2380 + $0xc8] sm:$0xff]
        %v2407 = vld [vmem:[%s2380 + $0xd0] sm:$0xff]
        %v2408 = vld [vmem:[%s2380 + $0xd8] sm:$0xff]
        %v2409 = vld [vmem:[%s2380 + $0xe0] sm:$0xff]
        %v2410 = vld [vmem:[%s2380 + $0xe8] sm:$0xff]
        %v2411 = vld [vmem:[%s2380 + $0xf0] sm:$0xff]
        %v2412 = vld [vmem:[%s2380 + $0xf8] sm:$0xff]
        %v2417 = vrot.slane %v1893, 4
        %v2418 = vrot.slane %v1895, 4
        %v2419 = vsel %vm1115, %v2417, %v2418
        %v2420 = vrot.slane %v1894, 4
        %v2421 = vrot.slane %v1896, 4
        %v2422 = vsel %vm1115, %v2420, %v2421
        %v2457 = vunpack.c.l.b16 %v2381
        %v2458 = vunpack.c.h.b16 %v2381
        %v2459 = vunpack.c.l.b16 %v2382
        %v2460 = vunpack.c.h.b16 %v2382
        %v2461 = vunpack.c.l.b16 %v2383
        %v2462 = vunpack.c.h.b16 %v2383
        %v2463 = vunpack.c.l.b16 %v2384
        %v2464 = vunpack.c.h.b16 %v2384
        %v2465 = vunpack.c.l.b16 %v2385
        %v2466 = vunpack.c.h.b16 %v2385
        %v2467 = vunpack.c.l.b16 %v2386
        %v2468 = vunpack.c.h.b16 %v2386
        %v2469 = vunpack.c.l.b16 %v2387
        %v2470 = vunpack.c.h.b16 %v2387
        %v2471 = vunpack.c.l.b16 %v2388
        %v2472 = vunpack.c.h.b16 %v2388
        %v2473 = vunpack.c.l.b16 %v2389
        %v2474 = vunpack.c.h.b16 %v2389
        %v2475 = vunpack.c.l.b16 %v2390
        %v2476 = vunpack.c.h.b16 %v2390
        %v2477 = vunpack.c.l.b16 %v2391
        %v2478 = vunpack.c.h.b16 %v2391
        %v2479 = vunpack.c.l.b16 %v2392
        %v2480 = vunpack.c.h.b16 %v2392
        %v2481 = vunpack.c.l.b16 %v2393
        %v2482 = vunpack.c.h.b16 %v2393
        %v2483 = vunpack.c.l.b16 %v2394
        %v2484 = vunpack.c.h.b16 %v2394
        %v2485 = vunpack.c.l.b16 %v2395
        %v2486 = vunpack.c.h.b16 %v2395
        %v2487 = vunpack.c.l.b16 %v2396
        %v2488 = vunpack.c.h.b16 %v2396
        %v2489 = vunpack.c.l.b16 %v2397
        %v2490 = vunpack.c.h.b16 %v2397
        %v2491 = vunpack.c.l.b16 %v2398
        %v2492 = vunpack.c.h.b16 %v2398
        %v2493 = vunpack.c.l.b16 %v2399
        %v2494 = vunpack.c.h.b16 %v2399
        %v2495 = vunpack.c.l.b16 %v2400
        %v2496 = vunpack.c.h.b16 %v2400
        %v2497 = vunpack.c.l.b16 %v2401
        %v2498 = vunpack.c.h.b16 %v2401
        %v2499 = vunpack.c.l.b16 %v2402
        %v2500 = vunpack.c.h.b16 %v2402
        %v2501 = vunpack.c.l.b16 %v2403
        %v2502 = vunpack.c.h.b16 %v2403
        %v2503 = vunpack.c.l.b16 %v2404
        %v2504 = vunpack.c.h.b16 %v2404
        %v2505 = vunpack.c.l.b16 %v2405
        %v2506 = vunpack.c.h.b16 %v2405
        %v2507 = vunpack.c.l.b16 %v2406
        %v2508 = vunpack.c.h.b16 %v2406
        %v2509 = vunpack.c.l.b16 %v2407
        %v2510 = vunpack.c.h.b16 %v2407
        %v2511 = vunpack.c.l.b16 %v2408
        %v2512 = vunpack.c.h.b16 %v2408
        %v2513 = vunpack.c.l.b16 %v2409
        %v2514 = vunpack.c.h.b16 %v2409
        %v2515 = vunpack.c.l.b16 %v2410
        %v2516 = vunpack.c.h.b16 %v2410
        %v2517 = vunpack.c.l.b16 %v2411
        %v2518 = vunpack.c.h.b16 %v2411
        %v2519 = vunpack.c.l.b16 %v2412
        %v2520 = vunpack.c.h.b16 %v2412
        %v2521 = vpack.c.b16 %v2459, %v2457
        %v2522 = vpack.c.b16 %v2460, %v2458
        %v2523 = vpack.c.b16 %v2463, %v2461
        %v2524 = vpack.c.b16 %v2464, %v2462
        %v2525 = vpack.c.b16 %v2467, %v2465
        %v2526 = vpack.c.b16 %v2468, %v2466
        %v2527 = vpack.c.b16 %v2471, %v2469
        %v2528 = vpack.c.b16 %v2472, %v2470
        %v2529 = vpack.c.b16 %v2475, %v2473
        %v2530 = vpack.c.b16 %v2476, %v2474
        %v2531 = vpack.c.b16 %v2479, %v2477
        %v2532 = vpack.c.b16 %v2480, %v2478
        %v2533 = vpack.c.b16 %v2483, %v2481
        %v2534 = vpack.c.b16 %v2484, %v2482
        %v2535 = vpack.c.b16 %v2487, %v2485
        %v2536 = vpack.c.b16 %v2488, %v2486
        %v2537 = vpack.c.b16 %v2491, %v2489
        %v2538 = vpack.c.b16 %v2492, %v2490
        %v2539 = vpack.c.b16 %v2495, %v2493
        %v2540 = vpack.c.b16 %v2496, %v2494
        %v2541 = vpack.c.b16 %v2499, %v2497
        %v2542 = vpack.c.b16 %v2500, %v2498
        %v2543 = vpack.c.b16 %v2503, %v2501
        %v2544 = vpack.c.b16 %v2504, %v2502
        %v2545 = vpack.c.b16 %v2507, %v2505
        %v2546 = vpack.c.b16 %v2508, %v2506
        %v2547 = vpack.c.b16 %v2511, %v2509
        %v2548 = vpack.c.b16 %v2512, %v2510
        %v2549 = vpack.c.b16 %v2515, %v2513
        %v2550 = vpack.c.b16 %v2516, %v2514
        %v2551 = vpack.c.b16 %v2519, %v2517
        %v2552 = vpack.c.b16 %v2520, %v2518
        %2585 = vmatprep.subr.bf16.mxu0 %v2522
        %2586 = vmatpush1.bf16.msra.mxu0 %v2521
        %2587 = vmatprep.subr.bf16.mxu0 %v2524
        %2588 = vmatpush1.bf16.msra.mxu0 %v2523
        %2589 = vmatprep.subr.bf16.mxu0 %v2526
        %2590 = vmatpush1.bf16.msra.mxu0 %v2525
        %2591 = vmatprep.subr.bf16.mxu0 %v2528
        %2592 = vmatpush1.bf16.msra.mxu0 %v2527
        %2593 = vmatprep.subr.bf16.mxu0 %v2530
        %2594 = vmatpush1.bf16.msra.mxu0 %v2529
        %2595 = vmatprep.subr.bf16.mxu0 %v2532
        %2596 = vmatpush1.bf16.msra.mxu0 %v2531
        %2597 = vmatprep.subr.bf16.mxu0 %v2534
        %2598 = vmatpush1.bf16.msra.mxu0 %v2533
        %2599 = vmatprep.subr.bf16.mxu0 %v2536
        %2600 = vmatpush1.bf16.msra.mxu0 %v2535
        %2601 = vmatprep.subr.bf16.mxu0 %v2538
        %2602 = vmatpush1.bf16.msra.mxu0 %v2537
        %2603 = vmatprep.subr.bf16.mxu0 %v2540
        %2604 = vmatpush1.bf16.msra.mxu0 %v2539
        %2605 = vmatprep.subr.bf16.mxu0 %v2542
        %2606 = vmatpush1.bf16.msra.mxu0 %v2541
        %2607 = vmatprep.subr.bf16.mxu0 %v2544
        %2608 = vmatpush1.bf16.msra.mxu0 %v2543
        %2609 = vmatprep.subr.bf16.mxu0 %v2546
        %2610 = vmatpush1.bf16.msra.mxu0 %v2545
        %2611 = vmatprep.subr.bf16.mxu0 %v2548
        %2612 = vmatpush1.bf16.msra.mxu0 %v2547
        %2613 = vmatprep.subr.bf16.mxu0 %v2550
        %2614 = vmatpush1.bf16.msra.mxu0 %v2549
        %2615 = vmatprep.subr.bf16.mxu0 %v2552
        %2616 = vmatpush1.bf16.msra.mxu0 %v2551
        %2617 = vmatprep.mubr.bf16.mxu0 %v2422
        %2618 = vmatmul.mubr.bf16.gmra.mrb[0].mxu0 %v2419
        %v2619 = vpop.f32.mrb[0].mxu0
        %v2620 = vadd.f32 0.0, %v2619
        %v2621 = vpop.f32.mrb[0].mxu0
        %v2622 = vadd.f32 0.0, %v2621
        %v2623 = vpop.f32.mrb[0].mxu0
        %v2624 = vadd.f32 0.0, %v2623
        %v2625 = vpop.f32.mrb[0].mxu0
        %v2626 = vadd.f32 0.0, %v2625
        %2627 = vdwg.mxu0
        %v2628 = vadd.f32 %v2372, %v2620
        %v2629 = vadd.f32 %v2374, %v2622
        %v2630 = vadd.f32 %v2376, %v2624
        %v2631 = vadd.f32 %v2378, %v2626
        %v2633 = vlaneseq
        %v2634 = vshrl.u32 %v2633, 7
        %v2635 = vsub.s32 0, %v2634
        %v2636 = vrot.slane %v1886, %v2635
        %v2637 = vlaneseq
        %v2638 = vshrl.u32 %v2637, 7
        %v2639 = vsub.s32 1, %v2638
        %v2640 = vrot.slane %v1886, %v2639
        %v2643 = vadd.f32 %v2628, %v2636
        %v2644 = vadd.f32 %v2629, %v2640
        %v2645 = vadd.f32 %v2630, %v2636
        %v2646 = vadd.f32 %v2631, %v2640
        %v2647 = vmax.f32 %v2643, 0.0
        %v2648 = vmax.f32 %v2644, 0.0
        %v2649 = vmax.f32 %v2645, 0.0
        %v2650 = vmax.f32 %v2646, 0.0
        %v2651 = vpack.c.bf16 %v2649, %v2647
        %v2652 = vpack.c.bf16 %v2650, %v2648
        %2653 = vst [vmem:[#allocation4] sm:$0xf] 0
        %2654 = vst [vmem:[#allocation4 + $0x8] sm:$0xf] 0
        %2655 = vst [vmem:[#allocation4 + $0x10] sm:$0xf0] 0
        %2656 = vst [vmem:[#allocation4 + $0x18] sm:$0xf0] 0
        %2657 = vst [vmem:[#allocation4 + $0x10] sm:$0xf] %v2651
        %2658 = vst [vmem:[#allocation4 + $0x18] sm:$0xf] %v2652
        %2659 = vst [vmem:[#allocation4] sm:$0xf0] %v2651
        %2660 = vst [vmem:[#allocation4 + $0x8] sm:$0xf0] %v2652
        %s2661 = scalar_lea.vmem %s8, 3
        %v2662 = vld [vmem:[%s2661] ss:$8 sm:$0x3]
        %v2663 = vld [vmem:[#allocation4] sm:$0xf]
        %v2664 = vld [vmem:[#allocation4 + $0x8] sm:$0xf]
        %v2665 = vld [vmem:[#allocation4 + $0x10] sm:$0xf]
        %v2666 = vld [vmem:[#allocation4 + $0x18] sm:$0xf]
        %v2667 = vld [vmem:[#allocation4] sm:$0xf0]
        %v2668 = vld [vmem:[#allocation4 + $0x8] sm:$0xf0]
        %v2669 = vld [vmem:[%s4] sm:$0xff]
        %v2670 = vld [vmem:[%s4 + $0x8] sm:$0xff]
        %v2671 = vld [vmem:[%s4 + $0x10] sm:$0xff]
        %v2672 = vld [vmem:[%s4 + $0x18] sm:$0xff]
        %v2673 = vld [vmem:[%s4 + $0x20] sm:$0xff]
        %v2674 = vld [vmem:[%s4 + $0x28] sm:$0xff]
        %v2675 = vld [vmem:[%s4 + $0x30] sm:$0xff]
        %v2676 = vld [vmem:[%s4 + $0x38] sm:$0xff]
        %v2677 = vld [vmem:[%s4 + $0x40] sm:$0xff]
        %v2678 = vld [vmem:[%s4 + $0x48] sm:$0xff]
        %v2679 = vld [vmem:[%s4 + $0x50] sm:$0xff]
        %v2680 = vld [vmem:[%s4 + $0x58] sm:$0xff]
        %v2681 = vld [vmem:[%s4 + $0x60] sm:$0xff]
        %v2682 = vld [vmem:[%s4 + $0x68] sm:$0xff]
        %v2683 = vld [vmem:[%s4 + $0x70] sm:$0xff]
        %v2684 = vld [vmem:[%s4 + $0x78] sm:$0xff]
        %v2685 = vld [vmem:[%s4 + $0x80] sm:$0xff]
        %v2686 = vld [vmem:[%s4 + $0x88] sm:$0xff]
        %v2687 = vld [vmem:[%s4 + $0x90] sm:$0xff]
        %v2688 = vld [vmem:[%s4 + $0x98] sm:$0xff]
        %v2689 = vld [vmem:[%s4 + $0xa0] sm:$0xff]
        %v2690 = vld [vmem:[%s4 + $0xa8] sm:$0xff]
        %v2691 = vld [vmem:[%s4 + $0xb0] sm:$0xff]
        %v2692 = vld [vmem:[%s4 + $0xb8] sm:$0xff]
        %v2693 = vld [vmem:[%s4 + $0xc0] sm:$0xff]
        %v2694 = vld [vmem:[%s4 + $0xc8] sm:$0xff]
        %v2695 = vld [vmem:[%s4 + $0xd0] sm:$0xff]
        %v2696 = vld [vmem:[%s4 + $0xd8] sm:$0xff]
        %v2697 = vld [vmem:[%s4 + $0xe0] sm:$0xff]
        %v2698 = vld [vmem:[%s4 + $0xe8] sm:$0xff]
        %v2699 = vld [vmem:[%s4 + $0xf0] sm:$0xff]
        %v2700 = vld [vmem:[%s4 + $0xf8] sm:$0xff]
        %s2701 = scalar_lea.vmem %s4, 256
        %v2702 = vld [vmem:[%s2701] sm:$0xff]
        %v2703 = vld [vmem:[%s2701 + $0x8] sm:$0xff]
        %v2704 = vld [vmem:[%s2701 + $0x10] sm:$0xff]
        %v2705 = vld [vmem:[%s2701 + $0x18] sm:$0xff]
        %v2706 = vld [vmem:[%s2701 + $0x20] sm:$0xff]
        %v2707 = vld [vmem:[%s2701 + $0x28] sm:$0xff]
        %v2708 = vld [vmem:[%s2701 + $0x30] sm:$0xff]
        %v2709 = vld [vmem:[%s2701 + $0x38] sm:$0xff]
        %v2710 = vld [vmem:[%s2701 + $0x40] sm:$0xff]
        %v2711 = vld [vmem:[%s2701 + $0x48] sm:$0xff]
        %v2712 = vld [vmem:[%s2701 + $0x50] sm:$0xff]
        %v2713 = vld [vmem:[%s2701 + $0x58] sm:$0xff]
        %v2714 = vld [vmem:[%s2701 + $0x60] sm:$0xff]
        %v2715 = vld [vmem:[%s2701 + $0x68] sm:$0xff]
        %v2716 = vld [vmem:[%s2701 + $0x70] sm:$0xff]
        %v2717 = vld [vmem:[%s2701 + $0x78] sm:$0xff]
        %v2718 = vld [vmem:[%s2701 + $0x80] sm:$0xff]
        %v2719 = vld [vmem:[%s2701 + $0x88] sm:$0xff]
        %v2720 = vld [vmem:[%s2701 + $0x90] sm:$0xff]
        %v2721 = vld [vmem:[%s2701 + $0x98] sm:$0xff]
        %v2722 = vld [vmem:[%s2701 + $0xa0] sm:$0xff]
        %v2723 = vld [vmem:[%s2701 + $0xa8] sm:$0xff]
        %v2724 = vld [vmem:[%s2701 + $0xb0] sm:$0xff]
        %v2725 = vld [vmem:[%s2701 + $0xb8] sm:$0xff]
        %v2726 = vld [vmem:[%s2701 + $0xc0] sm:$0xff]
        %v2727 = vld [vmem:[%s2701 + $0xc8] sm:$0xff]
        %v2728 = vld [vmem:[%s2701 + $0xd0] sm:$0xff]
        %v2729 = vld [vmem:[%s2701 + $0xd8] sm:$0xff]
        %v2730 = vld [vmem:[%s2701 + $0xe0] sm:$0xff]
        %v2731 = vld [vmem:[%s2701 + $0xe8] sm:$0xff]
        %v2732 = vld [vmem:[%s2701 + $0xf0] sm:$0xff]
        %v2733 = vld [vmem:[%s2701 + $0xf8] sm:$0xff]
        %v2766 = vunpack.c.l.b16 %v2702
        %v2767 = vunpack.c.h.b16 %v2702
        %v2768 = vunpack.c.l.b16 %v2703
        %v2769 = vunpack.c.h.b16 %v2703
        %v2770 = vunpack.c.l.b16 %v2704
        %v2771 = vunpack.c.h.b16 %v2704
        %v2772 = vunpack.c.l.b16 %v2705
        %v2773 = vunpack.c.h.b16 %v2705
        %v2774 = vunpack.c.l.b16 %v2706
        %v2775 = vunpack.c.h.b16 %v2706
        %v2776 = vunpack.c.l.b16 %v2707
        %v2777 = vunpack.c.h.b16 %v2707
        %v2778 = vunpack.c.l.b16 %v2708
        %v2779 = vunpack.c.h.b16 %v2708
        %v2780 = vunpack.c.l.b16 %v2709
        %v2781 = vunpack.c.h.b16 %v2709
        %v2782 = vunpack.c.l.b16 %v2710
        %v2783 = vunpack.c.h.b16 %v2710
        %v2784 = vunpack.c.l.b16 %v2711
        %v2785 = vunpack.c.h.b16 %v2711
        %v2786 = vunpack.c.l.b16 %v2712
        %v2787 = vunpack.c.h.b16 %v2712
        %v2788 = vunpack.c.l.b16 %v2713
        %v2789 = vunpack.c.h.b16 %v2713
        %v2790 = vunpack.c.l.b16 %v2714
        %v2791 = vunpack.c.h.b16 %v2714
        %v2792 = vunpack.c.l.b16 %v2715
        %v2793 = vunpack.c.h.b16 %v2715
        %v2794 = vunpack.c.l.b16 %v2716
        %v2795 = vunpack.c.h.b16 %v2716
        %v2796 = vunpack.c.l.b16 %v2717
        %v2797 = vunpack.c.h.b16 %v2717
        %v2798 = vunpack.c.l.b16 %v2718
        %v2799 = vunpack.c.h.b16 %v2718
        %v2800 = vunpack.c.l.b16 %v2719
        %v2801 = vunpack.c.h.b16 %v2719
        %v2802 = vunpack.c.l.b16 %v2720
        %v2803 = vunpack.c.h.b16 %v2720
        %v2804 = vunpack.c.l.b16 %v2721
        %v2805 = vunpack.c.h.b16 %v2721
        %v2806 = vunpack.c.l.b16 %v2722
        %v2807 = vunpack.c.h.b16 %v2722
        %v2808 = vunpack.c.l.b16 %v2723
        %v2809 = vunpack.c.h.b16 %v2723
        %v2810 = vunpack.c.l.b16 %v2724
        %v2811 = vunpack.c.h.b16 %v2724
        %v2812 = vunpack.c.l.b16 %v2725
        %v2813 = vunpack.c.h.b16 %v2725
        %v2814 = vunpack.c.l.b16 %v2726
        %v2815 = vunpack.c.h.b16 %v2726
        %v2816 = vunpack.c.l.b16 %v2727
        %v2817 = vunpack.c.h.b16 %v2727
        %v2818 = vunpack.c.l.b16 %v2728
        %v2819 = vunpack.c.h.b16 %v2728
        %v2820 = vunpack.c.l.b16 %v2729
        %v2821 = vunpack.c.h.b16 %v2729
        %v2822 = vunpack.c.l.b16 %v2730
        %v2823 = vunpack.c.h.b16 %v2730
        %v2824 = vunpack.c.l.b16 %v2731
        %v2825 = vunpack.c.h.b16 %v2731
        %v2826 = vunpack.c.l.b16 %v2732
        %v2827 = vunpack.c.h.b16 %v2732
        %v2828 = vunpack.c.l.b16 %v2733
        %v2829 = vunpack.c.h.b16 %v2733
        %v2830 = vpack.c.b16 %v2768, %v2766
        %v2831 = vpack.c.b16 %v2769, %v2767
        %v2832 = vpack.c.b16 %v2772, %v2770
        %v2833 = vpack.c.b16 %v2773, %v2771
        %v2834 = vpack.c.b16 %v2776, %v2774
        %v2835 = vpack.c.b16 %v2777, %v2775
        %v2836 = vpack.c.b16 %v2780, %v2778
        %v2837 = vpack.c.b16 %v2781, %v2779
        %v2838 = vpack.c.b16 %v2784, %v2782
        %v2839 = vpack.c.b16 %v2785, %v2783
        %v2840 = vpack.c.b16 %v2788, %v2786
        %v2841 = vpack.c.b16 %v2789, %v2787
        %v2842 = vpack.c.b16 %v2792, %v2790
        %v2843 = vpack.c.b16 %v2793, %v2791
        %v2844 = vpack.c.b16 %v2796, %v2794
        %v2845 = vpack.c.b16 %v2797, %v2795
        %v2846 = vpack.c.b16 %v2800, %v2798
        %v2847 = vpack.c.b16 %v2801, %v2799
        %v2848 = vpack.c.b16 %v2804, %v2802
        %v2849 = vpack.c.b16 %v2805, %v2803
        %v2850 = vpack.c.b16 %v2808, %v2806
        %v2851 = vpack.c.b16 %v2809, %v2807
        %v2852 = vpack.c.b16 %v2812, %v2810
        %v2853 = vpack.c.b16 %v2813, %v2811
        %v2854 = vpack.c.b16 %v2816, %v2814
        %v2855 = vpack.c.b16 %v2817, %v2815
        %v2856 = vpack.c.b16 %v2820, %v2818
        %v2857 = vpack.c.b16 %v2821, %v2819
        %v2858 = vpack.c.b16 %v2824, %v2822
        %v2859 = vpack.c.b16 %v2825, %v2823
        %v2860 = vpack.c.b16 %v2828, %v2826
        %v2861 = vpack.c.b16 %v2829, %v2827
        %2894 = vmatprep.subr.bf16.mxu0 %v2831
        %2895 = vmatpush1.bf16.msra.mxu0 %v2830
        %2896 = vmatprep.subr.bf16.mxu0 %v2833
        %2897 = vmatpush1.bf16.msra.mxu0 %v2832
        %2898 = vmatprep.subr.bf16.mxu0 %v2835
        %2899 = vmatpush1.bf16.msra.mxu0 %v2834
        %2900 = vmatprep.subr.bf16.mxu0 %v2837
        %2901 = vmatpush1.bf16.msra.mxu0 %v2836
        %2902 = vmatprep.subr.bf16.mxu0 %v2839
        %2903 = vmatpush1.bf16.msra.mxu0 %v2838
        %2904 = vmatprep.subr.bf16.mxu0 %v2841
        %2905 = vmatpush1.bf16.msra.mxu0 %v2840
        %2906 = vmatprep.subr.bf16.mxu0 %v2843
        %2907 = vmatpush1.bf16.msra.mxu0 %v2842
        %2908 = vmatprep.subr.bf16.mxu0 %v2845
        %2909 = vmatpush1.bf16.msra.mxu0 %v2844
        %2910 = vmatprep.subr.bf16.mxu0 %v2847
        %2911 = vmatpush1.bf16.msra.mxu0 %v2846
        %2912 = vmatprep.subr.bf16.mxu0 %v2849
        %2913 = vmatpush1.bf16.msra.mxu0 %v2848
        %2914 = vmatprep.subr.bf16.mxu0 %v2851
        %2915 = vmatpush1.bf16.msra.mxu0 %v2850
        %2916 = vmatprep.subr.bf16.mxu0 %v2853
        %2917 = vmatpush1.bf16.msra.mxu0 %v2852
        %2918 = vmatprep.subr.bf16.mxu0 %v2855
        %2919 = vmatpush1.bf16.msra.mxu0 %v2854
        %2920 = vmatprep.subr.bf16.mxu0 %v2857
        %2921 = vmatpush1.bf16.msra.mxu0 %v2856
        %2922 = vmatprep.subr.bf16.mxu0 %v2859
        %2923 = vmatpush1.bf16.msra.mxu0 %v2858
        %2924 = vmatprep.subr.bf16.mxu0 %v2861
        %2925 = vmatpush1.bf16.msra.mxu0 %v2860
        %2926 = vmatprep.mubr.bf16.mxu0 %v2666
        %2927 = vmatmul.mubr.bf16.gmra.mrb[0].mxu0 %v2665
        %v2928 = vpop.f32.mrb[0].mxu0
        %v2929 = vadd.f32 0.0, %v2928
        %v2930 = vpop.f32.mrb[0].mxu0
        %v2931 = vadd.f32 0.0, %v2930
        %v2932 = vpop.f32.mrb[0].mxu0
        %v2933 = vpop.f32.mrb[0].mxu0
        %2934 = vdwg.mxu0
        %v2967 = vunpack.c.l.b16 %v2669
        %v2968 = vunpack.c.h.b16 %v2669
        %v2969 = vunpack.c.l.b16 %v2670
        %v2970 = vunpack.c.h.b16 %v2670
        %v2971 = vunpack.c.l.b16 %v2671
        %v2972 = vunpack.c.h.b16 %v2671
        %v2973 = vunpack.c.l.b16 %v2672
        %v2974 = vunpack.c.h.b16 %v2672
        %v2975 = vunpack.c.l.b16 %v2673
        %v2976 = vunpack.c.h.b16 %v2673
        %v2977 = vunpack.c.l.b16 %v2674
        %v2978 = vunpack.c.h.b16 %v2674
        %v2979 = vunpack.c.l.b16 %v2675
        %v2980 = vunpack.c.h.b16 %v2675
        %v2981 = vunpack.c.l.b16 %v2676
        %v2982 = vunpack.c.h.b16 %v2676
        %v2983 = vunpack.c.l.b16 %v2677
        %v2984 = vunpack.c.h.b16 %v2677
        %v2985 = vunpack.c.l.b16 %v2678
        %v2986 = vunpack.c.h.b16 %v2678
        %v2987 = vunpack.c.l.b16 %v2679
        %v2988 = vunpack.c.h.b16 %v2679
        %v2989 = vunpack.c.l.b16 %v2680
        %v2990 = vunpack.c.h.b16 %v2680
        %v2991 = vunpack.c.l.b16 %v2681
        %v2992 = vunpack.c.h.b16 %v2681
        %v2993 = vunpack.c.l.b16 %v2682
        %v2994 = vunpack.c.h.b16 %v2682
        %v2995 = vunpack.c.l.b16 %v2683
        %v2996 = vunpack.c.h.b16 %v2683
        %v2997 = vunpack.c.l.b16 %v2684
        %v2998 = vunpack.c.h.b16 %v2684
        %v2999 = vunpack.c.l.b16 %v2685
        %v3000 = vunpack.c.h.b16 %v2685
        %v3001 = vunpack.c.l.b16 %v2686
        %v3002 = vunpack.c.h.b16 %v2686
        %v3003 = vunpack.c.l.b16 %v2687
        %v3004 = vunpack.c.h.b16 %v2687
        %v3005 = vunpack.c.l.b16 %v2688
        %v3006 = vunpack.c.h.b16 %v2688
        %v3007 = vunpack.c.l.b16 %v2689
        %v3008 = vunpack.c.h.b16 %v2689
        %v3009 = vunpack.c.l.b16 %v2690
        %v3010 = vunpack.c.h.b16 %v2690
        %v3011 = vunpack.c.l.b16 %v2691
        %v3012 = vunpack.c.h.b16 %v2691
        %v3013 = vunpack.c.l.b16 %v2692
        %v3014 = vunpack.c.h.b16 %v2692
        %v3015 = vunpack.c.l.b16 %v2693
        %v3016 = vunpack.c.h.b16 %v2693
        %v3017 = vunpack.c.l.b16 %v2694
        %v3018 = vunpack.c.h.b16 %v2694
        %v3019 = vunpack.c.l.b16 %v2695
        %v3020 = vunpack.c.h.b16 %v2695
        %v3021 = vunpack.c.l.b16 %v2696
        %v3022 = vunpack.c.h.b16 %v2696
        %v3023 = vunpack.c.l.b16 %v2697
        %v3024 = vunpack.c.h.b16 %v2697
        %v3025 = vunpack.c.l.b16 %v2698
        %v3026 = vunpack.c.h.b16 %v2698
        %v3027 = vunpack.c.l.b16 %v2699
        %v3028 = vunpack.c.h.b16 %v2699
        %v3029 = vunpack.c.l.b16 %v2700
        %v3030 = vunpack.c.h.b16 %v2700
        %v3031 = vpack.c.b16 %v2969, %v2967
        %v3032 = vpack.c.b16 %v2970, %v2968
        %v3033 = vpack.c.b16 %v2973, %v2971
        %v3034 = vpack.c.b16 %v2974, %v2972
        %v3035 = vpack.c.b16 %v2977, %v2975
        %v3036 = vpack.c.b16 %v2978, %v2976
        %v3037 = vpack.c.b16 %v2981, %v2979
        %v3038 = vpack.c.b16 %v2982, %v2980
        %v3039 = vpack.c.b16 %v2985, %v2983
        %v3040 = vpack.c.b16 %v2986, %v2984
        %v3041 = vpack.c.b16 %v2989, %v2987
        %v3042 = vpack.c.b16 %v2990, %v2988
        %v3043 = vpack.c.b16 %v2993, %v2991
        %v3044 = vpack.c.b16 %v2994, %v2992
        %v3045 = vpack.c.b16 %v2997, %v2995
        %v3046 = vpack.c.b16 %v2998, %v2996
        %v3047 = vpack.c.b16 %v3001, %v2999
        %v3048 = vpack.c.b16 %v3002, %v3000
        %v3049 = vpack.c.b16 %v3005, %v3003
        %v3050 = vpack.c.b16 %v3006, %v3004
        %v3051 = vpack.c.b16 %v3009, %v3007
        %v3052 = vpack.c.b16 %v3010, %v3008
        %v3053 = vpack.c.b16 %v3013, %v3011
        %v3054 = vpack.c.b16 %v3014, %v3012
        %v3055 = vpack.c.b16 %v3017, %v3015
        %v3056 = vpack.c.b16 %v3018, %v3016
        %v3057 = vpack.c.b16 %v3021, %v3019
        %v3058 = vpack.c.b16 %v3022, %v3020
        %v3059 = vpack.c.b16 %v3025, %v3023
        %v3060 = vpack.c.b16 %v3026, %v3024
        %v3061 = vpack.c.b16 %v3029, %v3027
        %v3062 = vpack.c.b16 %v3030, %v3028
        %3095 = vmatprep.subr.bf16.mxu0 %v3032
        %3096 = vmatpush1.bf16.msra.mxu0 %v3031
        %3097 = vmatprep.subr.bf16.mxu0 %v3034
        %3098 = vmatpush1.bf16.msra.mxu0 %v3033
        %3099 = vmatprep.subr.bf16.mxu0 %v3036
        %3100 = vmatpush1.bf16.msra.mxu0 %v3035
        %3101 = vmatprep.subr.bf16.mxu0 %v3038
        %3102 = vmatpush1.bf16.msra.mxu0 %v3037
        %3103 = vmatprep.subr.bf16.mxu0 %v3040
        %3104 = vmatpush1.bf16.msra.mxu0 %v3039
        %3105 = vmatprep.subr.bf16.mxu0 %v3042
        %3106 = vmatpush1.bf16.msra.mxu0 %v3041
        %3107 = vmatprep.subr.bf16.mxu0 %v3044
        %3108 = vmatpush1.bf16.msra.mxu0 %v3043
        %3109 = vmatprep.subr.bf16.mxu0 %v3046
        %3110 = vmatpush1.bf16.msra.mxu0 %v3045
        %3111 = vmatprep.subr.bf16.mxu0 %v3048
        %3112 = vmatpush1.bf16.msra.mxu0 %v3047
        %3113 = vmatprep.subr.bf16.mxu0 %v3050
        %3114 = vmatpush1.bf16.msra.mxu0 %v3049
        %3115 = vmatprep.subr.bf16.mxu0 %v3052
        %3116 = vmatpush1.bf16.msra.mxu0 %v3051
        %3117 = vmatprep.subr.bf16.mxu0 %v3054
        %3118 = vmatpush1.bf16.msra.mxu0 %v3053
        %3119 = vmatprep.subr.bf16.mxu0 %v3056
        %3120 = vmatpush1.bf16.msra.mxu0 %v3055
        %3121 = vmatprep.subr.bf16.mxu0 %v3058
        %3122 = vmatpush1.bf16.msra.mxu0 %v3057
        %3123 = vmatprep.subr.bf16.mxu0 %v3060
        %3124 = vmatpush1.bf16.msra.mxu0 %v3059
        %3125 = vmatprep.subr.bf16.mxu0 %v3062
        %3126 = vmatpush1.bf16.msra.mxu0 %v3061
        %3127 = vmatprep.mubr.bf16.mxu0 %v2664
        %3128 = vmatmul.mubr.bf16.gmra.mrb[0].mxu0 %v2663
        %v3129 = vpop.f32.mrb[0].mxu0
        %v3130 = vadd.f32 %v2929, %v3129
        %v3131 = vpop.f32.mrb[0].mxu0
        %v3132 = vadd.f32 %v2931, %v3131
        %v3133 = vpop.f32.mrb[0].mxu0
        %v3134 = vpop.f32.mrb[0].mxu0
        %3135 = vdwg.mxu0
        %s3136 = scalar_lea.vmem %s4, 512
        %v3137 = vld [vmem:[%s3136] sm:$0xff]
        %v3138 = vld [vmem:[%s3136 + $0x8] sm:$0xff]
        %v3139 = vld [vmem:[%s3136 + $0x10] sm:$0xff]
        %v3140 = vld [vmem:[%s3136 + $0x18] sm:$0xff]
        %v3141 = vld [vmem:[%s3136 + $0x20] sm:$0xff]
        %v3142 = vld [vmem:[%s3136 + $0x28] sm:$0xff]
        %v3143 = vld [vmem:[%s3136 + $0x30] sm:$0xff]
        %v3144 = vld [vmem:[%s3136 + $0x38] sm:$0xff]
        %v3145 = vld [vmem:[%s3136 + $0x40] sm:$0xff]
        %v3146 = vld [vmem:[%s3136 + $0x48] sm:$0xff]
        %v3147 = vld [vmem:[%s3136 + $0x50] sm:$0xff]
        %v3148 = vld [vmem:[%s3136 + $0x58] sm:$0xff]
        %v3149 = vld [vmem:[%s3136 + $0x60] sm:$0xff]
        %v3150 = vld [vmem:[%s3136 + $0x68] sm:$0xff]
        %v3151 = vld [vmem:[%s3136 + $0x70] sm:$0xff]
        %v3152 = vld [vmem:[%s3136 + $0x78] sm:$0xff]
        %v3153 = vld [vmem:[%s3136 + $0x80] sm:$0xff]
        %v3154 = vld [vmem:[%s3136 + $0x88] sm:$0xff]
        %v3155 = vld [vmem:[%s3136 + $0x90] sm:$0xff]
        %v3156 = vld [vmem:[%s3136 + $0x98] sm:$0xff]
        %v3157 = vld [vmem:[%s3136 + $0xa0] sm:$0xff]
        %v3158 = vld [vmem:[%s3136 + $0xa8] sm:$0xff]
        %v3159 = vld [vmem:[%s3136 + $0xb0] sm:$0xff]
        %v3160 = vld [vmem:[%s3136 + $0xb8] sm:$0xff]
        %v3161 = vld [vmem:[%s3136 + $0xc0] sm:$0xff]
        %v3162 = vld [vmem:[%s3136 + $0xc8] sm:$0xff]
        %v3163 = vld [vmem:[%s3136 + $0xd0] sm:$0xff]
        %v3164 = vld [vmem:[%s3136 + $0xd8] sm:$0xff]
        %v3165 = vld [vmem:[%s3136 + $0xe0] sm:$0xff]
        %v3166 = vld [vmem:[%s3136 + $0xe8] sm:$0xff]
        %v3167 = vld [vmem:[%s3136 + $0xf0] sm:$0xff]
        %v3168 = vld [vmem:[%s3136 + $0xf8] sm:$0xff]
        %v3171 = vrot.slane %v2667, 4
        %v3172 = vrot.slane %v2668, 4
        %v3207 = vunpack.c.l.b16 %v3137
        %v3208 = vunpack.c.h.b16 %v3137
        %v3209 = vunpack.c.l.b16 %v3138
        %v3210 = vunpack.c.h.b16 %v3138
        %v3211 = vunpack.c.l.b16 %v3139
        %v3212 = vunpack.c.h.b16 %v3139
        %v3213 = vunpack.c.l.b16 %v3140
        %v3214 = vunpack.c.h.b16 %v3140
        %v3215 = vunpack.c.l.b16 %v3141
        %v3216 = vunpack.c.h.b16 %v3141
        %v3217 = vunpack.c.l.b16 %v3142
        %v3218 = vunpack.c.h.b16 %v3142
        %v3219 = vunpack.c.l.b16 %v3143
        %v3220 = vunpack.c.h.b16 %v3143
        %v3221 = vunpack.c.l.b16 %v3144
        %v3222 = vunpack.c.h.b16 %v3144
        %v3223 = vunpack.c.l.b16 %v3145
        %v3224 = vunpack.c.h.b16 %v3145
        %v3225 = vunpack.c.l.b16 %v3146
        %v3226 = vunpack.c.h.b16 %v3146
        %v3227 = vunpack.c.l.b16 %v3147
        %v3228 = vunpack.c.h.b16 %v3147
        %v3229 = vunpack.c.l.b16 %v3148
        %v3230 = vunpack.c.h.b16 %v3148
        %v3231 = vunpack.c.l.b16 %v3149
        %v3232 = vunpack.c.h.b16 %v3149
        %v3233 = vunpack.c.l.b16 %v3150
        %v3234 = vunpack.c.h.b16 %v3150
        %v3235 = vunpack.c.l.b16 %v3151
        %v3236 = vunpack.c.h.b16 %v3151
        %v3237 = vunpack.c.l.b16 %v3152
        %v3238 = vunpack.c.h.b16 %v3152
        %v3239 = vunpack.c.l.b16 %v3153
        %v3240 = vunpack.c.h.b16 %v3153
        %v3241 = vunpack.c.l.b16 %v3154
        %v3242 = vunpack.c.h.b16 %v3154
        %v3243 = vunpack.c.l.b16 %v3155
        %v3244 = vunpack.c.h.b16 %v3155
        %v3245 = vunpack.c.l.b16 %v3156
        %v3246 = vunpack.c.h.b16 %v3156
        %v3247 = vunpack.c.l.b16 %v3157
        %v3248 = vunpack.c.h.b16 %v3157
        %v3249 = vunpack.c.l.b16 %v3158
        %v3250 = vunpack.c.h.b16 %v3158
        %v3251 = vunpack.c.l.b16 %v3159
        %v3252 = vunpack.c.h.b16 %v3159
        %v3253 = vunpack.c.l.b16 %v3160
        %v3254 = vunpack.c.h.b16 %v3160
        %v3255 = vunpack.c.l.b16 %v3161
        %v3256 = vunpack.c.h.b16 %v3161
        %v3257 = vunpack.c.l.b16 %v3162
        %v3258 = vunpack.c.h.b16 %v3162
        %v3259 = vunpack.c.l.b16 %v3163
        %v3260 = vunpack.c.h.b16 %v3163
        %v3261 = vunpack.c.l.b16 %v3164
        %v3262 = vunpack.c.h.b16 %v3164
        %v3263 = vunpack.c.l.b16 %v3165
        %v3264 = vunpack.c.h.b16 %v3165
        %v3265 = vunpack.c.l.b16 %v3166
        %v3266 = vunpack.c.h.b16 %v3166
        %v3267 = vunpack.c.l.b16 %v3167
        %v3268 = vunpack.c.h.b16 %v3167
        %v3269 = vunpack.c.l.b16 %v3168
        %v3270 = vunpack.c.h.b16 %v3168
        %v3271 = vpack.c.b16 %v3209, %v3207
        %v3272 = vpack.c.b16 %v3210, %v3208
        %v3273 = vpack.c.b16 %v3213, %v3211
        %v3274 = vpack.c.b16 %v3214, %v3212
        %v3275 = vpack.c.b16 %v3217, %v3215
        %v3276 = vpack.c.b16 %v3218, %v3216
        %v3277 = vpack.c.b16 %v3221, %v3219
        %v3278 = vpack.c.b16 %v3222, %v3220
        %v3279 = vpack.c.b16 %v3225, %v3223
        %v3280 = vpack.c.b16 %v3226, %v3224
        %v3281 = vpack.c.b16 %v3229, %v3227
        %v3282 = vpack.c.b16 %v3230, %v3228
        %v3283 = vpack.c.b16 %v3233, %v3231
        %v3284 = vpack.c.b16 %v3234, %v3232
        %v3285 = vpack.c.b16 %v3237, %v3235
        %v3286 = vpack.c.b16 %v3238, %v3236
        %v3287 = vpack.c.b16 %v3241, %v3239
        %v3288 = vpack.c.b16 %v3242, %v3240
        %v3289 = vpack.c.b16 %v3245, %v3243
        %v3290 = vpack.c.b16 %v3246, %v3244
        %v3291 = vpack.c.b16 %v3249, %v3247
        %v3292 = vpack.c.b16 %v3250, %v3248
        %v3293 = vpack.c.b16 %v3253, %v3251
        %v3294 = vpack.c.b16 %v3254, %v3252
        %v3295 = vpack.c.b16 %v3257, %v3255
        %v3296 = vpack.c.b16 %v3258, %v3256
        %v3297 = vpack.c.b16 %v3261, %v3259
        %v3298 = vpack.c.b16 %v3262, %v3260
        %v3299 = vpack.c.b16 %v3265, %v3263
        %v3300 = vpack.c.b16 %v3266, %v3264
        %v3301 = vpack.c.b16 %v3269, %v3267
        %v3302 = vpack.c.b16 %v3270, %v3268
        %3335 = vmatprep.subr.bf16.mxu0 %v3272
        %3336 = vmatpush1.bf16.msra.mxu0 %v3271
        %3337 = vmatprep.subr.bf16.mxu0 %v3274
        %3338 = vmatpush1.bf16.msra.mxu0 %v3273
        %3339 = vmatprep.subr.bf16.mxu0 %v3276
        %3340 = vmatpush1.bf16.msra.mxu0 %v3275
        %3341 = vmatprep.subr.bf16.mxu0 %v3278
        %3342 = vmatpush1.bf16.msra.mxu0 %v3277
        %3343 = vmatprep.subr.bf16.mxu0 %v3280
        %3344 = vmatpush1.bf16.msra.mxu0 %v3279
        %3345 = vmatprep.subr.bf16.mxu0 %v3282
        %3346 = vmatpush1.bf16.msra.mxu0 %v3281
        %3347 = vmatprep.subr.bf16.mxu0 %v3284
        %3348 = vmatpush1.bf16.msra.mxu0 %v3283
        %3349 = vmatprep.subr.bf16.mxu0 %v3286
        %3350 = vmatpush1.bf16.msra.mxu0 %v3285
        %3351 = vmatprep.subr.bf16.mxu0 %v3288
        %3352 = vmatpush1.bf16.msra.mxu0 %v3287
        %3353 = vmatprep.subr.bf16.mxu0 %v3290
        %3354 = vmatpush1.bf16.msra.mxu0 %v3289
        %3355 = vmatprep.subr.bf16.mxu0 %v3292
        %3356 = vmatpush1.bf16.msra.mxu0 %v3291
        %3357 = vmatprep.subr.bf16.mxu0 %v3294
        %3358 = vmatpush1.bf16.msra.mxu0 %v3293
        %3359 = vmatprep.subr.bf16.mxu0 %v3296
        %3360 = vmatpush1.bf16.msra.mxu0 %v3295
        %3361 = vmatprep.subr.bf16.mxu0 %v3298
        %3362 = vmatpush1.bf16.msra.mxu0 %v3297
        %3363 = vmatprep.subr.bf16.mxu0 %v3300
        %3364 = vmatpush1.bf16.msra.mxu0 %v3299
        %3365 = vmatprep.subr.bf16.mxu0 %v3302
        %3366 = vmatpush1.bf16.msra.mxu0 %v3301
        %3367 = vmatprep.mubr.bf16.mxu0 %v3172
        %3368 = vmatmul.mubr.bf16.gmra.mrb[0].mxu0 %v3171
        %v3369 = vpop.f32.mrb[0].mxu0
        %v3370 = vadd.f32 0.0, %v3369
        %v3371 = vpop.f32.mrb[0].mxu0
        %v3372 = vadd.f32 0.0, %v3371
        %v3373 = vpop.f32.mrb[0].mxu0
        %v3374 = vpop.f32.mrb[0].mxu0
        %3375 = vdwg.mxu0
        %v3376 = vadd.f32 %v3130, %v3370
        %v3377 = vadd.f32 %v3132, %v3372
        %v3379 = vlaneseq
        %v3380 = vshrl.u32 %v3379, 7
        %v3381 = vsub.s32 0, %v3380
        %v3382 = vrot.slane %v2662, %v3381
        %v3383 = vlaneseq
        %v3384 = vshrl.u32 %v3383, 7
        %v3385 = vsub.s32 1, %v3384
        %v3386 = vrot.slane %v2662, %v3385
        %v3389 = vadd.f32 %v3376, %v3382
        %v3390 = vadd.f32 %v3377, %v3386
        %v3391 = vmax.f32 %v3389, 0.0
        %v3392 = vmax.f32 %v3390, 0.0
        %v3393 = vpack.c.bf16 %v3391, %v3391
        %v3394 = vpack.c.bf16 %v3392, %v3392
        %3395 = vst [vmem:[#allocation5] sm:$0xff] 0
        %3396 = vst [vmem:[#allocation5 + $0x8] sm:$0xff] 0
        %v3399 = vunpack.c.l.b16 %v3393
        %v3400 = vunpack.c.l.b16 %v3394
        %v3401 = vpack.c.b16 %v3400, %v3399
        %3403 = vst [vmem:[#allocation5 + $0x10] sm:$0xff] %v3401
        %s3404 = scalar_lea.vmem %s8, 4
        %v3405 = vld [vmem:[%s3404] ss:$8 sm:$0xf]
        %v3406 = vld [vmem:[#allocation5] sm:$0xff]
        %v3407 = vld [vmem:[#allocation5 + $0x10] sm:$0xff]
        %v3408 = vld [vmem:[#allocation5 + $0x8] sm:$0xff]
        %v3409 = vld [vmem:[%s5] sm:$0xff]
        %v3410 = vld [vmem:[%s5 + $0x8] sm:$0xff]
        %v3411 = vld [vmem:[%s5 + $0x10] sm:$0xff]
        %v3412 = vld [vmem:[%s5 + $0x18] sm:$0xff]
        %v3413 = vld [vmem:[%s5 + $0x20] sm:$0xff]
        %v3414 = vld [vmem:[%s5 + $0x28] sm:$0xff]
        %v3415 = vld [vmem:[%s5 + $0x30] sm:$0xff]
        %v3416 = vld [vmem:[%s5 + $0x38] sm:$0xff]
        %v3417 = vld [vmem:[%s5 + $0x40] sm:$0xff]
        %v3418 = vld [vmem:[%s5 + $0x48] sm:$0xff]
        %v3419 = vld [vmem:[%s5 + $0x50] sm:$0xff]
        %v3420 = vld [vmem:[%s5 + $0x58] sm:$0xff]
        %v3421 = vld [vmem:[%s5 + $0x60] sm:$0xff]
        %v3422 = vld [vmem:[%s5 + $0x68] sm:$0xff]
        %v3423 = vld [vmem:[%s5 + $0x70] sm:$0xff]
        %v3424 = vld [vmem:[%s5 + $0x78] sm:$0xff]
        %v3425 = vld [vmem:[%s5 + $0x80] sm:$0xff]
        %v3426 = vld [vmem:[%s5 + $0x88] sm:$0xff]
        %v3427 = vld [vmem:[%s5 + $0x90] sm:$0xff]
        %v3428 = vld [vmem:[%s5 + $0x98] sm:$0xff]
        %v3429 = vld [vmem:[%s5 + $0xa0] sm:$0xff]
        %v3430 = vld [vmem:[%s5 + $0xa8] sm:$0xff]
        %v3431 = vld [vmem:[%s5 + $0xb0] sm:$0xff]
        %v3432 = vld [vmem:[%s5 + $0xb8] sm:$0xff]
        %v3433 = vld [vmem:[%s5 + $0xc0] sm:$0xff]
        %v3434 = vld [vmem:[%s5 + $0xc8] sm:$0xff]
        %v3435 = vld [vmem:[%s5 + $0xd0] sm:$0xff]
        %v3436 = vld [vmem:[%s5 + $0xd8] sm:$0xff]
        %v3437 = vld [vmem:[%s5 + $0xe0] sm:$0xff]
        %v3438 = vld [vmem:[%s5 + $0xe8] sm:$0xff]
        %v3439 = vld [vmem:[%s5 + $0xf0] sm:$0xff]
        %v3440 = vld [vmem:[%s5 + $0xf8] sm:$0xff]
        %v3441 = vld [vmem:[%s5 + $0x100] sm:$0xff]
        %v3442 = vld [vmem:[%s5 + $0x108] sm:$0xff]
        %v3443 = vld [vmem:[%s5 + $0x110] sm:$0xff]
        %v3444 = vld [vmem:[%s5 + $0x118] sm:$0xff]
        %v3445 = vld [vmem:[%s5 + $0x120] sm:$0xff]
        %v3446 = vld [vmem:[%s5 + $0x128] sm:$0xff]
        %v3447 = vld [vmem:[%s5 + $0x130] sm:$0xff]
        %v3448 = vld [vmem:[%s5 + $0x138] sm:$0xff]
        %v3449 = vld [vmem:[%s5 + $0x140] sm:$0xff]
        %v3450 = vld [vmem:[%s5 + $0x148] sm:$0xff]
        %v3451 = vld [vmem:[%s5 + $0x150] sm:$0xff]
        %v3452 = vld [vmem:[%s5 + $0x158] sm:$0xff]
        %v3453 = vld [vmem:[%s5 + $0x160] sm:$0xff]
        %v3454 = vld [vmem:[%s5 + $0x168] sm:$0xff]
        %v3455 = vld [vmem:[%s5 + $0x170] sm:$0xff]
        %v3456 = vld [vmem:[%s5 + $0x178] sm:$0xff]
        %v3457 = vld [vmem:[%s5 + $0x180] sm:$0xff]
        %v3458 = vld [vmem:[%s5 + $0x188] sm:$0xff]
        %v3459 = vld [vmem:[%s5 + $0x190] sm:$0xff]
        %v3460 = vld [vmem:[%s5 + $0x198] sm:$0xff]
        %v3461 = vld [vmem:[%s5 + $0x1a0] sm:$0xff]
        %v3462 = vld [vmem:[%s5 + $0x1a8] sm:$0xff]
        %v3463 = vld [vmem:[%s5 + $0x1b0] sm:$0xff]
        %v3464 = vld [vmem:[%s5 + $0x1b8] sm:$0xff]
        %v3465 = vld [vmem:[%s5 + $0x1c0] sm:$0xff]
        %v3466 = vld [vmem:[%s5 + $0x1c8] sm:$0xff]
        %v3467 = vld [vmem:[%s5 + $0x1d0] sm:$0xff]
        %v3468 = vld [vmem:[%s5 + $0x1d8] sm:$0xff]
        %v3469 = vld [vmem:[%s5 + $0x1e0] sm:$0xff]
        %v3470 = vld [vmem:[%s5 + $0x1e8] sm:$0xff]
        %v3471 = vld [vmem:[%s5 + $0x1f0] sm:$0xff]
        %v3472 = vld [vmem:[%s5 + $0x1f8] sm:$0xff]
        %s3473 = scalar_lea.vmem %s5, 512
        %v3474 = vld [vmem:[%s3473] sm:$0xff]
        %v3475 = vld [vmem:[%s3473 + $0x8] sm:$0xff]
        %v3476 = vld [vmem:[%s3473 + $0x10] sm:$0xff]
        %v3477 = vld [vmem:[%s3473 + $0x18] sm:$0xff]
        %v3478 = vld [vmem:[%s3473 + $0x20] sm:$0xff]
        %v3479 = vld [vmem:[%s3473 + $0x28] sm:$0xff]
        %v3480 = vld [vmem:[%s3473 + $0x30] sm:$0xff]
        %v3481 = vld [vmem:[%s3473 + $0x38] sm:$0xff]
        %v3482 = vld [vmem:[%s3473 + $0x40] sm:$0xff]
        %v3483 = vld [vmem:[%s3473 + $0x48] sm:$0xff]
        %v3484 = vld [vmem:[%s3473 + $0x50] sm:$0xff]
        %v3485 = vld [vmem:[%s3473 + $0x58] sm:$0xff]
        %v3486 = vld [vmem:[%s3473 + $0x60] sm:$0xff]
        %v3487 = vld [vmem:[%s3473 + $0x68] sm:$0xff]
        %v3488 = vld [vmem:[%s3473 + $0x70] sm:$0xff]
        %v3489 = vld [vmem:[%s3473 + $0x78] sm:$0xff]
        %v3490 = vld [vmem:[%s3473 + $0x80] sm:$0xff]
        %v3491 = vld [vmem:[%s3473 + $0x88] sm:$0xff]
        %v3492 = vld [vmem:[%s3473 + $0x90] sm:$0xff]
        %v3493 = vld [vmem:[%s3473 + $0x98] sm:$0xff]
        %v3494 = vld [vmem:[%s3473 + $0xa0] sm:$0xff]
        %v3495 = vld [vmem:[%s3473 + $0xa8] sm:$0xff]
        %v3496 = vld [vmem:[%s3473 + $0xb0] sm:$0xff]
        %v3497 = vld [vmem:[%s3473 + $0xb8] sm:$0xff]
        %v3498 = vld [vmem:[%s3473 + $0xc0] sm:$0xff]
        %v3499 = vld [vmem:[%s3473 + $0xc8] sm:$0xff]
        %v3500 = vld [vmem:[%s3473 + $0xd0] sm:$0xff]
        %v3501 = vld [vmem:[%s3473 + $0xd8] sm:$0xff]
        %v3502 = vld [vmem:[%s3473 + $0xe0] sm:$0xff]
        %v3503 = vld [vmem:[%s3473 + $0xe8] sm:$0xff]
        %v3504 = vld [vmem:[%s3473 + $0xf0] sm:$0xff]
        %v3505 = vld [vmem:[%s3473 + $0xf8] sm:$0xff]
        %v3506 = vld [vmem:[%s3473 + $0x100] sm:$0xff]
        %v3507 = vld [vmem:[%s3473 + $0x108] sm:$0xff]
        %v3508 = vld [vmem:[%s3473 + $0x110] sm:$0xff]
        %v3509 = vld [vmem:[%s3473 + $0x118] sm:$0xff]
        %v3510 = vld [vmem:[%s3473 + $0x120] sm:$0xff]
        %v3511 = vld [vmem:[%s3473 + $0x128] sm:$0xff]
        %v3512 = vld [vmem:[%s3473 + $0x130] sm:$0xff]
        %v3513 = vld [vmem:[%s3473 + $0x138] sm:$0xff]
        %v3514 = vld [vmem:[%s3473 + $0x140] sm:$0xff]
        %v3515 = vld [vmem:[%s3473 + $0x148] sm:$0xff]
        %v3516 = vld [vmem:[%s3473 + $0x150] sm:$0xff]
        %v3517 = vld [vmem:[%s3473 + $0x158] sm:$0xff]
        %v3518 = vld [vmem:[%s3473 + $0x160] sm:$0xff]
        %v3519 = vld [vmem:[%s3473 + $0x168] sm:$0xff]
        %v3520 = vld [vmem:[%s3473 + $0x170] sm:$0xff]
        %v3521 = vld [vmem:[%s3473 + $0x178] sm:$0xff]
        %v3522 = vld [vmem:[%s3473 + $0x180] sm:$0xff]
        %v3523 = vld [vmem:[%s3473 + $0x188] sm:$0xff]
        %v3524 = vld [vmem:[%s3473 + $0x190] sm:$0xff]
        %v3525 = vld [vmem:[%s3473 + $0x198] sm:$0xff]
        %v3526 = vld [vmem:[%s3473 + $0x1a0] sm:$0xff]
        %v3527 = vld [vmem:[%s3473 + $0x1a8] sm:$0xff]
        %v3528 = vld [vmem:[%s3473 + $0x1b0] sm:$0xff]
        %v3529 = vld [vmem:[%s3473 + $0x1b8] sm:$0xff]
        %v3530 = vld [vmem:[%s3473 + $0x1c0] sm:$0xff]
        %v3531 = vld [vmem:[%s3473 + $0x1c8] sm:$0xff]
        %v3532 = vld [vmem:[%s3473 + $0x1d0] sm:$0xff]
        %v3533 = vld [vmem:[%s3473 + $0x1d8] sm:$0xff]
        %v3534 = vld [vmem:[%s3473 + $0x1e0] sm:$0xff]
        %v3535 = vld [vmem:[%s3473 + $0x1e8] sm:$0xff]
        %v3536 = vld [vmem:[%s3473 + $0x1f0] sm:$0xff]
        %v3537 = vld [vmem:[%s3473 + $0x1f8] sm:$0xff]
        %v3539 = vunpack.c.l.b16 %v3407
        %v3540 = vunpack.c.h.b16 %v3407
        %v3541 = vpack.c.b16 %v3539, %v3539
        %v3542 = vpack.c.b16 %v3540, %v3540
        %v3609 = vunpack.c.l.b16 %v3474
        %v3610 = vunpack.c.h.b16 %v3474
        %v3611 = vunpack.c.l.b16 %v3475
        %v3612 = vunpack.c.h.b16 %v3475
        %v3613 = vunpack.c.l.b16 %v3476
        %v3614 = vunpack.c.h.b16 %v3476
        %v3615 = vunpack.c.l.b16 %v3477
        %v3616 = vunpack.c.h.b16 %v3477
        %v3617 = vunpack.c.l.b16 %v3478
        %v3618 = vunpack.c.h.b16 %v3478
        %v3619 = vunpack.c.l.b16 %v3479
        %v3620 = vunpack.c.h.b16 %v3479
        %v3621 = vunpack.c.l.b16 %v3480
        %v3622 = vunpack.c.h.b16 %v3480
        %v3623 = vunpack.c.l.b16 %v3481
        %v3624 = vunpack.c.h.b16 %v3481
        %v3625 = vunpack.c.l.b16 %v3482
        %v3626 = vunpack.c.h.b16 %v3482
        %v3627 = vunpack.c.l.b16 %v3483
        %v3628 = vunpack.c.h.b16 %v3483
        %v3629 = vunpack.c.l.b16 %v3484
        %v3630 = vunpack.c.h.b16 %v3484
        %v3631 = vunpack.c.l.b16 %v3485
        %v3632 = vunpack.c.h.b16 %v3485
        %v3633 = vunpack.c.l.b16 %v3486
        %v3634 = vunpack.c.h.b16 %v3486
        %v3635 = vunpack.c.l.b16 %v3487
        %v3636 = vunpack.c.h.b16 %v3487
        %v3637 = vunpack.c.l.b16 %v3488
        %v3638 = vunpack.c.h.b16 %v3488
        %v3639 = vunpack.c.l.b16 %v3489
        %v3640 = vunpack.c.h.b16 %v3489
        %v3641 = vunpack.c.l.b16 %v3490
        %v3642 = vunpack.c.h.b16 %v3490
        %v3643 = vunpack.c.l.b16 %v3491
        %v3644 = vunpack.c.h.b16 %v3491
        %v3645 = vunpack.c.l.b16 %v3492
        %v3646 = vunpack.c.h.b16 %v3492
        %v3647 = vunpack.c.l.b16 %v3493
        %v3648 = vunpack.c.h.b16 %v3493
        %v3649 = vunpack.c.l.b16 %v3494
        %v3650 = vunpack.c.h.b16 %v3494
        %v3651 = vunpack.c.l.b16 %v3495
        %v3652 = vunpack.c.h.b16 %v3495
        %v3653 = vunpack.c.l.b16 %v3496
        %v3654 = vunpack.c.h.b16 %v3496
        %v3655 = vunpack.c.l.b16 %v3497
        %v3656 = vunpack.c.h.b16 %v3497
        %v3657 = vunpack.c.l.b16 %v3498
        %v3658 = vunpack.c.h.b16 %v3498
        %v3659 = vunpack.c.l.b16 %v3499
        %v3660 = vunpack.c.h.b16 %v3499
        %v3661 = vunpack.c.l.b16 %v3500
        %v3662 = vunpack.c.h.b16 %v3500
        %v3663 = vunpack.c.l.b16 %v3501
        %v3664 = vunpack.c.h.b16 %v3501
        %v3665 = vunpack.c.l.b16 %v3502
        %v3666 = vunpack.c.h.b16 %v3502
        %v3667 = vunpack.c.l.b16 %v3503
        %v3668 = vunpack.c.h.b16 %v3503
        %v3669 = vunpack.c.l.b16 %v3504
        %v3670 = vunpack.c.h.b16 %v3504
        %v3671 = vunpack.c.l.b16 %v3505
        %v3672 = vunpack.c.h.b16 %v3505
        %v3673 = vunpack.c.l.b16 %v3506
        %v3674 = vunpack.c.h.b16 %v3506
        %v3675 = vunpack.c.l.b16 %v3507
        %v3676 = vunpack.c.h.b16 %v3507
        %v3677 = vunpack.c.l.b16 %v3508
        %v3678 = vunpack.c.h.b16 %v3508
        %v3679 = vunpack.c.l.b16 %v3509
        %v3680 = vunpack.c.h.b16 %v3509
        %v3681 = vunpack.c.l.b16 %v3510
        %v3682 = vunpack.c.h.b16 %v3510
        %v3683 = vunpack.c.l.b16 %v3511
        %v3684 = vunpack.c.h.b16 %v3511
        %v3685 = vunpack.c.l.b16 %v3512
        %v3686 = vunpack.c.h.b16 %v3512
        %v3687 = vunpack.c.l.b16 %v3513
        %v3688 = vunpack.c.h.b16 %v3513
        %v3689 = vunpack.c.l.b16 %v3514
        %v3690 = vunpack.c.h.b16 %v3514
        %v3691 = vunpack.c.l.b16 %v3515
        %v3692 = vunpack.c.h.b16 %v3515
        %v3693 = vunpack.c.l.b16 %v3516
        %v3694 = vunpack.c.h.b16 %v3516
        %v3695 = vunpack.c.l.b16 %v3517
        %v3696 = vunpack.c.h.b16 %v3517
        %v3697 = vunpack.c.l.b16 %v3518
        %v3698 = vunpack.c.h.b16 %v3518
        %v3699 = vunpack.c.l.b16 %v3519
        %v3700 = vunpack.c.h.b16 %v3519
        %v3701 = vunpack.c.l.b16 %v3520
        %v3702 = vunpack.c.h.b16 %v3520
        %v3703 = vunpack.c.l.b16 %v3521
        %v3704 = vunpack.c.h.b16 %v3521
        %v3705 = vunpack.c.l.b16 %v3522
        %v3706 = vunpack.c.h.b16 %v3522
        %v3707 = vunpack.c.l.b16 %v3523
        %v3708 = vunpack.c.h.b16 %v3523
        %v3709 = vunpack.c.l.b16 %v3524
        %v3710 = vunpack.c.h.b16 %v3524
        %v3711 = vunpack.c.l.b16 %v3525
        %v3712 = vunpack.c.h.b16 %v3525
        %v3713 = vunpack.c.l.b16 %v3526
        %v3714 = vunpack.c.h.b16 %v3526
        %v3715 = vunpack.c.l.b16 %v3527
        %v3716 = vunpack.c.h.b16 %v3527
        %v3717 = vunpack.c.l.b16 %v3528
        %v3718 = vunpack.c.h.b16 %v3528
        %v3719 = vunpack.c.l.b16 %v3529
        %v3720 = vunpack.c.h.b16 %v3529
        %v3721 = vunpack.c.l.b16 %v3530
        %v3722 = vunpack.c.h.b16 %v3530
        %v3723 = vunpack.c.l.b16 %v3531
        %v3724 = vunpack.c.h.b16 %v3531
        %v3725 = vunpack.c.l.b16 %v3532
        %v3726 = vunpack.c.h.b16 %v3532
        %v3727 = vunpack.c.l.b16 %v3533
        %v3728 = vunpack.c.h.b16 %v3533
        %v3729 = vunpack.c.l.b16 %v3534
        %v3730 = vunpack.c.h.b16 %v3534
        %v3731 = vunpack.c.l.b16 %v3535
        %v3732 = vunpack.c.h.b16 %v3535
        %v3733 = vunpack.c.l.b16 %v3536
        %v3734 = vunpack.c.h.b16 %v3536
        %v3735 = vunpack.c.l.b16 %v3537
        %v3736 = vunpack.c.h.b16 %v3537
        %v3737 = vpack.c.b16 %v3613, %v3609
        %v3738 = vpack.c.b16 %v3614, %v3610
        %v3739 = vpack.c.b16 %v3615, %v3611
        %v3740 = vpack.c.b16 %v3616, %v3612
        %v3741 = vpack.c.b16 %v3621, %v3617
        %v3742 = vpack.c.b16 %v3622, %v3618
        %v3743 = vpack.c.b16 %v3623, %v3619
        %v3744 = vpack.c.b16 %v3624, %v3620
        %v3745 = vpack.c.b16 %v3629, %v3625
        %v3746 = vpack.c.b16 %v3630, %v3626
        %v3747 = vpack.c.b16 %v3631, %v3627
        %v3748 = vpack.c.b16 %v3632, %v3628
        %v3749 = vpack.c.b16 %v3637, %v3633
        %v3750 = vpack.c.b16 %v3638, %v3634
        %v3751 = vpack.c.b16 %v3639, %v3635
        %v3752 = vpack.c.b16 %v3640, %v3636
        %v3753 = vpack.c.b16 %v3645, %v3641
        %v3754 = vpack.c.b16 %v3646, %v3642
        %v3755 = vpack.c.b16 %v3647, %v3643
        %v3756 = vpack.c.b16 %v3648, %v3644
        %v3757 = vpack.c.b16 %v3653, %v3649
        %v3758 = vpack.c.b16 %v3654, %v3650
        %v3759 = vpack.c.b16 %v3655, %v3651
        %v3760 = vpack.c.b16 %v3656, %v3652
        %v3761 = vpack.c.b16 %v3661, %v3657
        %v3762 = vpack.c.b16 %v3662, %v3658
        %v3763 = vpack.c.b16 %v3663, %v3659
        %v3764 = vpack.c.b16 %v3664, %v3660
        %v3765 = vpack.c.b16 %v3669, %v3665
        %v3766 = vpack.c.b16 %v3670, %v3666
        %v3767 = vpack.c.b16 %v3671, %v3667
        %v3768 = vpack.c.b16 %v3672, %v3668
        %v3769 = vpack.c.b16 %v3677, %v3673
        %v3770 = vpack.c.b16 %v3678, %v3674
        %v3771 = vpack.c.b16 %v3679, %v3675
        %v3772 = vpack.c.b16 %v3680, %v3676
        %v3773 = vpack.c.b16 %v3685, %v3681
        %v3774 = vpack.c.b16 %v3686, %v3682
        %v3775 = vpack.c.b16 %v3687, %v3683
        %v3776 = vpack.c.b16 %v3688, %v3684
        %v3777 = vpack.c.b16 %v3693, %v3689
        %v3778 = vpack.c.b16 %v3694, %v3690
        %v3779 = vpack.c.b16 %v3695, %v3691
        %v3780 = vpack.c.b16 %v3696, %v3692
        %v3781 = vpack.c.b16 %v3701, %v3697
        %v3782 = vpack.c.b16 %v3702, %v3698
        %v3783 = vpack.c.b16 %v3703, %v3699
        %v3784 = vpack.c.b16 %v3704, %v3700
        %v3785 = vpack.c.b16 %v3709, %v3705
        %v3786 = vpack.c.b16 %v3710, %v3706
        %v3787 = vpack.c.b16 %v3711, %v3707
        %v3788 = vpack.c.b16 %v3712, %v3708
        %v3789 = vpack.c.b16 %v3717, %v3713
        %v3790 = vpack.c.b16 %v3718, %v3714
        %v3791 = vpack.c.b16 %v3719, %v3715
        %v3792 = vpack.c.b16 %v3720, %v3716
        %v3793 = vpack.c.b16 %v3725, %v3721
        %v3794 = vpack.c.b16 %v3726, %v3722
        %v3795 = vpack.c.b16 %v3727, %v3723
        %v3796 = vpack.c.b16 %v3728, %v3724
        %v3797 = vpack.c.b16 %v3733, %v3729
        %v3798 = vpack.c.b16 %v3734, %v3730
        %v3799 = vpack.c.b16 %v3735, %v3731
        %v3800 = vpack.c.b16 %v3736, %v3732
        %3865 = vmatprep.subr.bf16.mxu0 %v3738
        %3866 = vmatpush1.bf16.msra.mxu0 %v3737
        %3867 = vmatprep.subr.bf16.mxu0 %v3742
        %3868 = vmatpush1.bf16.msra.mxu0 %v3741
        %3869 = vmatprep.subr.bf16.mxu0 %v3746
        %3870 = vmatpush1.bf16.msra.mxu0 %v3745
        %3871 = vmatprep.subr.bf16.mxu0 %v3750
        %3872 = vmatpush1.bf16.msra.mxu0 %v3749
        %3873 = vmatprep.subr.bf16.mxu0 %v3754
        %3874 = vmatpush1.bf16.msra.mxu0 %v3753
        %3875 = vmatprep.subr.bf16.mxu0 %v3758
        %3876 = vmatpush1.bf16.msra.mxu0 %v3757
        %3877 = vmatprep.subr.bf16.mxu0 %v3762
        %3878 = vmatpush1.bf16.msra.mxu0 %v3761
        %3879 = vmatprep.subr.bf16.mxu0 %v3766
        %3880 = vmatpush1.bf16.msra.mxu0 %v3765
        %3881 = vmatprep.subr.bf16.mxu0 %v3770
        %3882 = vmatpush1.bf16.msra.mxu0 %v3769
        %3883 = vmatprep.subr.bf16.mxu0 %v3774
        %3884 = vmatpush1.bf16.msra.mxu0 %v3773
        %3885 = vmatprep.subr.bf16.mxu0 %v3778
        %3886 = vmatpush1.bf16.msra.mxu0 %v3777
        %3887 = vmatprep.subr.bf16.mxu0 %v3782
        %3888 = vmatpush1.bf16.msra.mxu0 %v3781
        %3889 = vmatprep.subr.bf16.mxu0 %v3786
        %3890 = vmatpush1.bf16.msra.mxu0 %v3785
        %3891 = vmatprep.subr.bf16.mxu0 %v3790
        %3892 = vmatpush1.bf16.msra.mxu0 %v3789
        %3893 = vmatprep.subr.bf16.mxu0 %v3794
        %3894 = vmatpush1.bf16.msra.mxu0 %v3793
        %3895 = vmatprep.subr.bf16.mxu0 %v3798
        %3896 = vmatpush1.bf16.msra.mxu0 %v3797
        %3897 = vmatprep.mubr.bf16.mxu0 %v3542
        %3898 = vmatmul.mubr.bf16.gmra.mrb[0].mxu0 %v3541
        %v3899 = vpop.f32.mrb[0].mxu0
        %v3900 = vadd.f32 0.0, %v3899
        %v3901 = vpop.f32.mrb[0].mxu0
        %v3902 = vadd.f32 0.0, %v3901
        %v3903 = vpop.f32.mrb[0].mxu0
        %v3904 = vpop.f32.mrb[0].mxu0
        %3905 = vdwg.mxu0
        %3906 = vmatprep.subr.bf16.mxu0 %v3740
        %3907 = vmatpush1.bf16.msra.mxu0 %v3739
        %3908 = vmatprep.subr.bf16.mxu0 %v3744
        %3909 = vmatpush1.bf16.msra.mxu0 %v3743
        %3910 = vmatprep.subr.bf16.mxu0 %v3748
        %3911 = vmatpush1.bf16.msra.mxu0 %v3747
        %3912 = vmatprep.subr.bf16.mxu0 %v3752
        %3913 = vmatpush1.bf16.msra.mxu0 %v3751
        %3914 = vmatprep.subr.bf16.mxu0 %v3756
        %3915 = vmatpush1.bf16.msra.mxu0 %v3755
        %3916 = vmatprep.subr.bf16.mxu0 %v3760
        %3917 = vmatpush1.bf16.msra.mxu0 %v3759
        %3918 = vmatprep.subr.bf16.mxu0 %v3764
        %3919 = vmatpush1.bf16.msra.mxu0 %v3763
        %3920 = vmatprep.subr.bf16.mxu0 %v3768
        %3921 = vmatpush1.bf16.msra.mxu0 %v3767
        %3922 = vmatprep.subr.bf16.mxu0 %v3772
        %3923 = vmatpush1.bf16.msra.mxu0 %v3771
        %3924 = vmatprep.subr.bf16.mxu0 %v3776
        %3925 = vmatpush1.bf16.msra.mxu0 %v3775
        %3926 = vmatprep.subr.bf16.mxu0 %v3780
        %3927 = vmatpush1.bf16.msra.mxu0 %v3779
        %3928 = vmatprep.subr.bf16.mxu0 %v3784
        %3929 = vmatpush1.bf16.msra.mxu0 %v3783
        %3930 = vmatprep.subr.bf16.mxu0 %v3788
        %3931 = vmatpush1.bf16.msra.mxu0 %v3787
        %3932 = vmatprep.subr.bf16.mxu0 %v3792
        %3933 = vmatpush1.bf16.msra.mxu0 %v3791
        %3934 = vmatprep.subr.bf16.mxu0 %v3796
        %3935 = vmatpush1.bf16.msra.mxu0 %v3795
        %3936 = vmatprep.subr.bf16.mxu0 %v3800
        %3937 = vmatpush1.bf16.msra.mxu0 %v3799
        %3938 = vmatprep.mubr.bf16.mxu0 %v3542
        %3939 = vmatmul.mubr.bf16.gmra.mrb[0].mxu0 %v3541
        %v3940 = vpop.f32.mrb[0].mxu0
        %v3941 = vadd.f32 0.0, %v3940
        %v3942 = vpop.f32.mrb[0].mxu0
        %v3943 = vadd.f32 0.0, %v3942
        %v3944 = vpop.f32.mrb[0].mxu0
        %v3945 = vpop.f32.mrb[0].mxu0
        %3946 = vdwg.mxu0
        %v3948 = vunpack.c.l.b16 %v3406
        %v3949 = vunpack.c.h.b16 %v3406
        %v3950 = vpack.c.b16 %v3948, %v3948
        %v3951 = vpack.c.b16 %v3949, %v3949
        %v4018 = vunpack.c.l.b16 %v3409
        %v4019 = vunpack.c.h.b16 %v3409
        %v4020 = vunpack.c.l.b16 %v3410
        %v4021 = vunpack.c.h.b16 %v3410
        %v4022 = vunpack.c.l.b16 %v3411
        %v4023 = vunpack.c.h.b16 %v3411
        %v4024 = vunpack.c.l.b16 %v3412
        %v4025 = vunpack.c.h.b16 %v3412
        %v4026 = vunpack.c.l.b16 %v3413
        %v4027 = vunpack.c.h.b16 %v3413
        %v4028 = vunpack.c.l.b16 %v3414
        %v4029 = vunpack.c.h.b16 %v3414
        %v4030 = vunpack.c.l.b16 %v3415
        %v4031 = vunpack.c.h.b16 %v3415
        %v4032 = vunpack.c.l.b16 %v3416
        %v4033 = vunpack.c.h.b16 %v3416
        %v4034 = vunpack.c.l.b16 %v3417
        %v4035 = vunpack.c.h.b16 %v3417
        %v4036 = vunpack.c.l.b16 %v3418
        %v4037 = vunpack.c.h.b16 %v3418
        %v4038 = vunpack.c.l.b16 %v3419
        %v4039 = vunpack.c.h.b16 %v3419
        %v4040 = vunpack.c.l.b16 %v3420
        %v4041 = vunpack.c.h.b16 %v3420
        %v4042 = vunpack.c.l.b16 %v3421
        %v4043 = vunpack.c.h.b16 %v3421
        %v4044 = vunpack.c.l.b16 %v3422
        %v4045 = vunpack.c.h.b16 %v3422
        %v4046 = vunpack.c.l.b16 %v3423
        %v4047 = vunpack.c.h.b16 %v3423
        %v4048 = vunpack.c.l.b16 %v3424
        %v4049 = vunpack.c.h.b16 %v3424
        %v4050 = vunpack.c.l.b16 %v3425
        %v4051 = vunpack.c.h.b16 %v3425
        %v4052 = vunpack.c.l.b16 %v3426
        %v4053 = vunpack.c.h.b16 %v3426
        %v4054 = vunpack.c.l.b16 %v3427
        %v4055 = vunpack.c.h.b16 %v3427
        %v4056 = vunpack.c.l.b16 %v3428
        %v4057 = vunpack.c.h.b16 %v3428
        %v4058 = vunpack.c.l.b16 %v3429
        %v4059 = vunpack.c.h.b16 %v3429
        %v4060 = vunpack.c.l.b16 %v3430
        %v4061 = vunpack.c.h.b16 %v3430
        %v4062 = vunpack.c.l.b16 %v3431
        %v4063 = vunpack.c.h.b16 %v3431
        %v4064 = vunpack.c.l.b16 %v3432
        %v4065 = vunpack.c.h.b16 %v3432
        %v4066 = vunpack.c.l.b16 %v3433
        %v4067 = vunpack.c.h.b16 %v3433
        %v4068 = vunpack.c.l.b16 %v3434
        %v4069 = vunpack.c.h.b16 %v3434
        %v4070 = vunpack.c.l.b16 %v3435
        %v4071 = vunpack.c.h.b16 %v3435
        %v4072 = vunpack.c.l.b16 %v3436
        %v4073 = vunpack.c.h.b16 %v3436
        %v4074 = vunpack.c.l.b16 %v3437
        %v4075 = vunpack.c.h.b16 %v3437
        %v4076 = vunpack.c.l.b16 %v3438
        %v4077 = vunpack.c.h.b16 %v3438
        %v4078 = vunpack.c.l.b16 %v3439
        %v4079 = vunpack.c.h.b16 %v3439
        %v4080 = vunpack.c.l.b16 %v3440
        %v4081 = vunpack.c.h.b16 %v3440
        %v4082 = vunpack.c.l.b16 %v3441
        %v4083 = vunpack.c.h.b16 %v3441
        %v4084 = vunpack.c.l.b16 %v3442
        %v4085 = vunpack.c.h.b16 %v3442
        %v4086 = vunpack.c.l.b16 %v3443
        %v4087 = vunpack.c.h.b16 %v3443
        %v4088 = vunpack.c.l.b16 %v3444
        %v4089 = vunpack.c.h.b16 %v3444
        %v4090 = vunpack.c.l.b16 %v3445
        %v4091 = vunpack.c.h.b16 %v3445
        %v4092 = vunpack.c.l.b16 %v3446
        %v4093 = vunpack.c.h.b16 %v3446
        %v4094 = vunpack.c.l.b16 %v3447
        %v4095 = vunpack.c.h.b16 %v3447
        %v4096 = vunpack.c.l.b16 %v3448
        %v4097 = vunpack.c.h.b16 %v3448
        %v4098 = vunpack.c.l.b16 %v3449
        %v4099 = vunpack.c.h.b16 %v3449
        %v4100 = vunpack.c.l.b16 %v3450
        %v4101 = vunpack.c.h.b16 %v3450
        %v4102 = vunpack.c.l.b16 %v3451
        %v4103 = vunpack.c.h.b16 %v3451
        %v4104 = vunpack.c.l.b16 %v3452
        %v4105 = vunpack.c.h.b16 %v3452
        %v4106 = vunpack.c.l.b16 %v3453
        %v4107 = vunpack.c.h.b16 %v3453
        %v4108 = vunpack.c.l.b16 %v3454
        %v4109 = vunpack.c.h.b16 %v3454
        %v4110 = vunpack.c.l.b16 %v3455
        %v4111 = vunpack.c.h.b16 %v3455
        %v4112 = vunpack.c.l.b16 %v3456
        %v4113 = vunpack.c.h.b16 %v3456
        %v4114 = vunpack.c.l.b16 %v3457
        %v4115 = vunpack.c.h.b16 %v3457
        %v4116 = vunpack.c.l.b16 %v3458
        %v4117 = vunpack.c.h.b16 %v3458
        %v4118 = vunpack.c.l.b16 %v3459
        %v4119 = vunpack.c.h.b16 %v3459
        %v4120 = vunpack.c.l.b16 %v3460
        %v4121 = vunpack.c.h.b16 %v3460
        %v4122 = vunpack.c.l.b16 %v3461
        %v4123 = vunpack.c.h.b16 %v3461
        %v4124 = vunpack.c.l.b16 %v3462
        %v4125 = vunpack.c.h.b16 %v3462
        %v4126 = vunpack.c.l.b16 %v3463
        %v4127 = vunpack.c.h.b16 %v3463
        %v4128 = vunpack.c.l.b16 %v3464
        %v4129 = vunpack.c.h.b16 %v3464
        %v4130 = vunpack.c.l.b16 %v3465
        %v4131 = vunpack.c.h.b16 %v3465
        %v4132 = vunpack.c.l.b16 %v3466
        %v4133 = vunpack.c.h.b16 %v3466
        %v4134 = vunpack.c.l.b16 %v3467
        %v4135 = vunpack.c.h.b16 %v3467
        %v4136 = vunpack.c.l.b16 %v3468
        %v4137 = vunpack.c.h.b16 %v3468
        %v4138 = vunpack.c.l.b16 %v3469
        %v4139 = vunpack.c.h.b16 %v3469
        %v4140 = vunpack.c.l.b16 %v3470
        %v4141 = vunpack.c.h.b16 %v3470
        %v4142 = vunpack.c.l.b16 %v3471
        %v4143 = vunpack.c.h.b16 %v3471
        %v4144 = vunpack.c.l.b16 %v3472
        %v4145 = vunpack.c.h.b16 %v3472
        %v4146 = vpack.c.b16 %v4022, %v4018
        %v4147 = vpack.c.b16 %v4023, %v4019
        %v4148 = vpack.c.b16 %v4024, %v4020
        %v4149 = vpack.c.b16 %v4025, %v4021
        %v4150 = vpack.c.b16 %v4030, %v4026
        %v4151 = vpack.c.b16 %v4031, %v4027
        %v4152 = vpack.c.b16 %v4032, %v4028
        %v4153 = vpack.c.b16 %v4033, %v4029
        %v4154 = vpack.c.b16 %v4038, %v4034
        %v4155 = vpack.c.b16 %v4039, %v4035
        %v4156 = vpack.c.b16 %v4040, %v4036
        %v4157 = vpack.c.b16 %v4041, %v4037
        %v4158 = vpack.c.b16 %v4046, %v4042
        %v4159 = vpack.c.b16 %v4047, %v4043
        %v4160 = vpack.c.b16 %v4048, %v4044
        %v4161 = vpack.c.b16 %v4049, %v4045
        %v4162 = vpack.c.b16 %v4054, %v4050
        %v4163 = vpack.c.b16 %v4055, %v4051
        %v4164 = vpack.c.b16 %v4056, %v4052
        %v4165 = vpack.c.b16 %v4057, %v4053
        %v4166 = vpack.c.b16 %v4062, %v4058
        %v4167 = vpack.c.b16 %v4063, %v4059
        %v4168 = vpack.c.b16 %v4064, %v4060
        %v4169 = vpack.c.b16 %v4065, %v4061
        %v4170 = vpack.c.b16 %v4070, %v4066
        %v4171 = vpack.c.b16 %v4071, %v4067
        %v4172 = vpack.c.b16 %v4072, %v4068
        %v4173 = vpack.c.b16 %v4073, %v4069
        %v4174 = vpack.c.b16 %v4078, %v4074
        %v4175 = vpack.c.b16 %v4079, %v4075
        %v4176 = vpack.c.b16 %v4080, %v4076
        %v4177 = vpack.c.b16 %v4081, %v4077
        %v4178 = vpack.c.b16 %v4086, %v4082
        %v4179 = vpack.c.b16 %v4087, %v4083
        %v4180 = vpack.c.b16 %v4088, %v4084
        %v4181 = vpack.c.b16 %v4089, %v4085
        %v4182 = vpack.c.b16 %v4094, %v4090
        %v4183 = vpack.c.b16 %v4095, %v4091
        %v4184 = vpack.c.b16 %v4096, %v4092
        %v4185 = vpack.c.b16 %v4097, %v4093
        %v4186 = vpack.c.b16 %v4102, %v4098
        %v4187 = vpack.c.b16 %v4103, %v4099
        %v4188 = vpack.c.b16 %v4104, %v4100
        %v4189 = vpack.c.b16 %v4105, %v4101
        %v4190 = vpack.c.b16 %v4110, %v4106
        %v4191 = vpack.c.b16 %v4111, %v4107
        %v4192 = vpack.c.b16 %v4112, %v4108
        %v4193 = vpack.c.b16 %v4113, %v4109
        %v4194 = vpack.c.b16 %v4118, %v4114
        %v4195 = vpack.c.b16 %v4119, %v4115
        %v4196 = vpack.c.b16 %v4120, %v4116
        %v4197 = vpack.c.b16 %v4121, %v4117
        %v4198 = vpack.c.b16 %v4126, %v4122
        %v4199 = vpack.c.b16 %v4127, %v4123
        %v4200 = vpack.c.b16 %v4128, %v4124
        %v4201 = vpack.c.b16 %v4129, %v4125
        %v4202 = vpack.c.b16 %v4134, %v4130
        %v4203 = vpack.c.b16 %v4135, %v4131
        %v4204 = vpack.c.b16 %v4136, %v4132
        %v4205 = vpack.c.b16 %v4137, %v4133
        %v4206 = vpack.c.b16 %v4142, %v4138
        %v4207 = vpack.c.b16 %v4143, %v4139
        %v4208 = vpack.c.b16 %v4144, %v4140
        %v4209 = vpack.c.b16 %v4145, %v4141
        %4274 = vmatprep.subr.bf16.mxu0 %v4147
        %4275 = vmatpush1.bf16.msra.mxu0 %v4146
        %4276 = vmatprep.subr.bf16.mxu0 %v4151
        %4277 = vmatpush1.bf16.msra.mxu0 %v4150
        %4278 = vmatprep.subr.bf16.mxu0 %v4155
        %4279 = vmatpush1.bf16.msra.mxu0 %v4154
        %4280 = vmatprep.subr.bf16.mxu0 %v4159
        %4281 = vmatpush1.bf16.msra.mxu0 %v4158
        %4282 = vmatprep.subr.bf16.mxu0 %v4163
        %4283 = vmatpush1.bf16.msra.mxu0 %v4162
        %4284 = vmatprep.subr.bf16.mxu0 %v4167
        %4285 = vmatpush1.bf16.msra.mxu0 %v4166
        %4286 = vmatprep.subr.bf16.mxu0 %v4171
        %4287 = vmatpush1.bf16.msra.mxu0 %v4170
        %4288 = vmatprep.subr.bf16.mxu0 %v4175
        %4289 = vmatpush1.bf16.msra.mxu0 %v4174
        %4290 = vmatprep.subr.bf16.mxu0 %v4179
        %4291 = vmatpush1.bf16.msra.mxu0 %v4178
        %4292 = vmatprep.subr.bf16.mxu0 %v4183
        %4293 = vmatpush1.bf16.msra.mxu0 %v4182
        %4294 = vmatprep.subr.bf16.mxu0 %v4187
        %4295 = vmatpush1.bf16.msra.mxu0 %v4186
        %4296 = vmatprep.subr.bf16.mxu0 %v4191
        %4297 = vmatpush1.bf16.msra.mxu0 %v4190
        %4298 = vmatprep.subr.bf16.mxu0 %v4195
        %4299 = vmatpush1.bf16.msra.mxu0 %v4194
        %4300 = vmatprep.subr.bf16.mxu0 %v4199
        %4301 = vmatpush1.bf16.msra.mxu0 %v4198
        %4302 = vmatprep.subr.bf16.mxu0 %v4203
        %4303 = vmatpush1.bf16.msra.mxu0 %v4202
        %4304 = vmatprep.subr.bf16.mxu0 %v4207
        %4305 = vmatpush1.bf16.msra.mxu0 %v4206
        %4306 = vmatprep.mubr.bf16.mxu0 %v3951
        %4307 = vmatmul.mubr.bf16.gmra.mrb[0].mxu0 %v3950
        %v4308 = vpop.f32.mrb[0].mxu0
        %v4309 = vadd.f32 %v3900, %v4308
        %v4310 = vpop.f32.mrb[0].mxu0
        %v4311 = vadd.f32 %v3902, %v4310
        %v4312 = vpop.f32.mrb[0].mxu0
        %v4313 = vpop.f32.mrb[0].mxu0
        %4314 = vdwg.mxu0
        %4315 = vmatprep.subr.bf16.mxu0 %v4149
        %4316 = vmatpush1.bf16.msra.mxu0 %v4148
        %4317 = vmatprep.subr.bf16.mxu0 %v4153
        %4318 = vmatpush1.bf16.msra.mxu0 %v4152
        %4319 = vmatprep.subr.bf16.mxu0 %v4157
        %4320 = vmatpush1.bf16.msra.mxu0 %v4156
        %4321 = vmatprep.subr.bf16.mxu0 %v4161
        %4322 = vmatpush1.bf16.msra.mxu0 %v4160
        %4323 = vmatprep.subr.bf16.mxu0 %v4165
        %4324 = vmatpush1.bf16.msra.mxu0 %v4164
        %4325 = vmatprep.subr.bf16.mxu0 %v4169
        %4326 = vmatpush1.bf16.msra.mxu0 %v4168
        %4327 = vmatprep.subr.bf16.mxu0 %v4173
        %4328 = vmatpush1.bf16.msra.mxu0 %v4172
        %4329 = vmatprep.subr.bf16.mxu0 %v4177
        %4330 = vmatpush1.bf16.msra.mxu0 %v4176
        %4331 = vmatprep.subr.bf16.mxu0 %v4181
        %4332 = vmatpush1.bf16.msra.mxu0 %v4180
        %4333 = vmatprep.subr.bf16.mxu0 %v4185
        %4334 = vmatpush1.bf16.msra.mxu0 %v4184
        %4335 = vmatprep.subr.bf16.mxu0 %v4189
        %4336 = vmatpush1.bf16.msra.mxu0 %v4188
        %4337 = vmatprep.subr.bf16.mxu0 %v4193
        %4338 = vmatpush1.bf16.msra.mxu0 %v4192
        %4339 = vmatprep.subr.bf16.mxu0 %v4197
        %4340 = vmatpush1.bf16.msra.mxu0 %v4196
        %4341 = vmatprep.subr.bf16.mxu0 %v4201
        %4342 = vmatpush1.bf16.msra.mxu0 %v4200
        %4343 = vmatprep.subr.bf16.mxu0 %v4205
        %4344 = vmatpush1.bf16.msra.mxu0 %v4204
        %4345 = vmatprep.subr.bf16.mxu0 %v4209
        %4346 = vmatpush1.bf16.msra.mxu0 %v4208
        %4347 = vmatprep.mubr.bf16.mxu0 %v3951
        %4348 = vmatmul.mubr.bf16.gmra.mrb[0].mxu0 %v3950
        %v4349 = vpop.f32.mrb[0].mxu0
        %v4350 = vadd.f32 %v3941, %v4349
        %v4351 = vpop.f32.mrb[0].mxu0
        %v4352 = vadd.f32 %v3943, %v4351
        %v4353 = vpop.f32.mrb[0].mxu0
        %v4354 = vpop.f32.mrb[0].mxu0
        %4355 = vdwg.mxu0
        %s4356 = scalar_lea.vmem %s5, 1024
        %v4357 = vld [vmem:[%s4356] sm:$0xff]
        %v4358 = vld [vmem:[%s4356 + $0x8] sm:$0xff]
        %v4359 = vld [vmem:[%s4356 + $0x10] sm:$0xff]
        %v4360 = vld [vmem:[%s4356 + $0x18] sm:$0xff]
        %v4361 = vld [vmem:[%s4356 + $0x20] sm:$0xff]
        %v4362 = vld [vmem:[%s4356 + $0x28] sm:$0xff]
        %v4363 = vld [vmem:[%s4356 + $0x30] sm:$0xff]
        %v4364 = vld [vmem:[%s4356 + $0x38] sm:$0xff]
        %v4365 = vld [vmem:[%s4356 + $0x40] sm:$0xff]
        %v4366 = vld [vmem:[%s4356 + $0x48] sm:$0xff]
        %v4367 = vld [vmem:[%s4356 + $0x50] sm:$0xff]
        %v4368 = vld [vmem:[%s4356 + $0x58] sm:$0xff]
        %v4369 = vld [vmem:[%s4356 + $0x60] sm:$0xff]
        %v4370 = vld [vmem:[%s4356 + $0x68] sm:$0xff]
        %v4371 = vld [vmem:[%s4356 + $0x70] sm:$0xff]
        %v4372 = vld [vmem:[%s4356 + $0x78] sm:$0xff]
        %v4373 = vld [vmem:[%s4356 + $0x80] sm:$0xff]
        %v4374 = vld [vmem:[%s4356 + $0x88] sm:$0xff]
        %v4375 = vld [vmem:[%s4356 + $0x90] sm:$0xff]
        %v4376 = vld [vmem:[%s4356 + $0x98] sm:$0xff]
        %v4377 = vld [vmem:[%s4356 + $0xa0] sm:$0xff]
        %v4378 = vld [vmem:[%s4356 + $0xa8] sm:$0xff]
        %v4379 = vld [vmem:[%s4356 + $0xb0] sm:$0xff]
        %v4380 = vld [vmem:[%s4356 + $0xb8] sm:$0xff]
        %v4381 = vld [vmem:[%s4356 + $0xc0] sm:$0xff]
        %v4382 = vld [vmem:[%s4356 + $0xc8] sm:$0xff]
        %v4383 = vld [vmem:[%s4356 + $0xd0] sm:$0xff]
        %v4384 = vld [vmem:[%s4356 + $0xd8] sm:$0xff]
        %v4385 = vld [vmem:[%s4356 + $0xe0] sm:$0xff]
        %v4386 = vld [vmem:[%s4356 + $0xe8] sm:$0xff]
        %v4387 = vld [vmem:[%s4356 + $0xf0] sm:$0xff]
        %v4388 = vld [vmem:[%s4356 + $0xf8] sm:$0xff]
        %v4389 = vld [vmem:[%s4356 + $0x100] sm:$0xff]
        %v4390 = vld [vmem:[%s4356 + $0x108] sm:$0xff]
        %v4391 = vld [vmem:[%s4356 + $0x110] sm:$0xff]
        %v4392 = vld [vmem:[%s4356 + $0x118] sm:$0xff]
        %v4393 = vld [vmem:[%s4356 + $0x120] sm:$0xff]
        %v4394 = vld [vmem:[%s4356 + $0x128] sm:$0xff]
        %v4395 = vld [vmem:[%s4356 + $0x130] sm:$0xff]
        %v4396 = vld [vmem:[%s4356 + $0x138] sm:$0xff]
        %v4397 = vld [vmem:[%s4356 + $0x140] sm:$0xff]
        %v4398 = vld [vmem:[%s4356 + $0x148] sm:$0xff]
        %v4399 = vld [vmem:[%s4356 + $0x150] sm:$0xff]
        %v4400 = vld [vmem:[%s4356 + $0x158] sm:$0xff]
        %v4401 = vld [vmem:[%s4356 + $0x160] sm:$0xff]
        %v4402 = vld [vmem:[%s4356 + $0x168] sm:$0xff]
        %v4403 = vld [vmem:[%s4356 + $0x170] sm:$0xff]
        %v4404 = vld [vmem:[%s4356 + $0x178] sm:$0xff]
        %v4405 = vld [vmem:[%s4356 + $0x180] sm:$0xff]
        %v4406 = vld [vmem:[%s4356 + $0x188] sm:$0xff]
        %v4407 = vld [vmem:[%s4356 + $0x190] sm:$0xff]
        %v4408 = vld [vmem:[%s4356 + $0x198] sm:$0xff]
        %v4409 = vld [vmem:[%s4356 + $0x1a0] sm:$0xff]
        %v4410 = vld [vmem:[%s4356 + $0x1a8] sm:$0xff]
        %v4411 = vld [vmem:[%s4356 + $0x1b0] sm:$0xff]
        %v4412 = vld [vmem:[%s4356 + $0x1b8] sm:$0xff]
        %v4413 = vld [vmem:[%s4356 + $0x1c0] sm:$0xff]
        %v4414 = vld [vmem:[%s4356 + $0x1c8] sm:$0xff]
        %v4415 = vld [vmem:[%s4356 + $0x1d0] sm:$0xff]
        %v4416 = vld [vmem:[%s4356 + $0x1d8] sm:$0xff]
        %v4417 = vld [vmem:[%s4356 + $0x1e0] sm:$0xff]
        %v4418 = vld [vmem:[%s4356 + $0x1e8] sm:$0xff]
        %v4419 = vld [vmem:[%s4356 + $0x1f0] sm:$0xff]
        %v4420 = vld [vmem:[%s4356 + $0x1f8] sm:$0xff]
        %v4422 = vunpack.c.l.b16 %v3408
        %v4423 = vunpack.c.h.b16 %v3408
        %v4424 = vpack.c.b16 %v4422, %v4422
        %v4425 = vpack.c.b16 %v4423, %v4423
        %v4492 = vunpack.c.l.b16 %v4357
        %v4493 = vunpack.c.h.b16 %v4357
        %v4494 = vunpack.c.l.b16 %v4358
        %v4495 = vunpack.c.h.b16 %v4358
        %v4496 = vunpack.c.l.b16 %v4359
        %v4497 = vunpack.c.h.b16 %v4359
        %v4498 = vunpack.c.l.b16 %v4360
        %v4499 = vunpack.c.h.b16 %v4360
        %v4500 = vunpack.c.l.b16 %v4361
        %v4501 = vunpack.c.h.b16 %v4361
        %v4502 = vunpack.c.l.b16 %v4362
        %v4503 = vunpack.c.h.b16 %v4362
        %v4504 = vunpack.c.l.b16 %v4363
        %v4505 = vunpack.c.h.b16 %v4363
        %v4506 = vunpack.c.l.b16 %v4364
        %v4507 = vunpack.c.h.b16 %v4364
        %v4508 = vunpack.c.l.b16 %v4365
        %v4509 = vunpack.c.h.b16 %v4365
        %v4510 = vunpack.c.l.b16 %v4366
        %v4511 = vunpack.c.h.b16 %v4366
        %v4512 = vunpack.c.l.b16 %v4367
        %v4513 = vunpack.c.h.b16 %v4367
        %v4514 = vunpack.c.l.b16 %v4368
        %v4515 = vunpack.c.h.b16 %v4368
        %v4516 = vunpack.c.l.b16 %v4369
        %v4517 = vunpack.c.h.b16 %v4369
        %v4518 = vunpack.c.l.b16 %v4370
        %v4519 = vunpack.c.h.b16 %v4370
        %v4520 = vunpack.c.l.b16 %v4371
        %v4521 = vunpack.c.h.b16 %v4371
        %v4522 = vunpack.c.l.b16 %v4372
        %v4523 = vunpack.c.h.b16 %v4372
        %v4524 = vunpack.c.l.b16 %v4373
        %v4525 = vunpack.c.h.b16 %v4373
        %v4526 = vunpack.c.l.b16 %v4374
        %v4527 = vunpack.c.h.b16 %v4374
        %v4528 = vunpack.c.l.b16 %v4375
        %v4529 = vunpack.c.h.b16 %v4375
        %v4530 = vunpack.c.l.b16 %v4376
        %v4531 = vunpack.c.h.b16 %v4376
        %v4532 = vunpack.c.l.b16 %v4377
        %v4533 = vunpack.c.h.b16 %v4377
        %v4534 = vunpack.c.l.b16 %v4378
        %v4535 = vunpack.c.h.b16 %v4378
        %v4536 = vunpack.c.l.b16 %v4379
        %v4537 = vunpack.c.h.b16 %v4379
        %v4538 = vunpack.c.l.b16 %v4380
        %v4539 = vunpack.c.h.b16 %v4380
        %v4540 = vunpack.c.l.b16 %v4381
        %v4541 = vunpack.c.h.b16 %v4381
        %v4542 = vunpack.c.l.b16 %v4382
        %v4543 = vunpack.c.h.b16 %v4382
        %v4544 = vunpack.c.l.b16 %v4383
        %v4545 = vunpack.c.h.b16 %v4383
        %v4546 = vunpack.c.l.b16 %v4384
        %v4547 = vunpack.c.h.b16 %v4384
        %v4548 = vunpack.c.l.b16 %v4385
        %v4549 = vunpack.c.h.b16 %v4385
        %v4550 = vunpack.c.l.b16 %v4386
        %v4551 = vunpack.c.h.b16 %v4386
        %v4552 = vunpack.c.l.b16 %v4387
        %v4553 = vunpack.c.h.b16 %v4387
        %v4554 = vunpack.c.l.b16 %v4388
        %v4555 = vunpack.c.h.b16 %v4388
        %v4556 = vunpack.c.l.b16 %v4389
        %v4557 = vunpack.c.h.b16 %v4389
        %v4558 = vunpack.c.l.b16 %v4390
        %v4559 = vunpack.c.h.b16 %v4390
        %v4560 = vunpack.c.l.b16 %v4391
        %v4561 = vunpack.c.h.b16 %v4391
        %v4562 = vunpack.c.l.b16 %v4392
        %v4563 = vunpack.c.h.b16 %v4392
        %v4564 = vunpack.c.l.b16 %v4393
        %v4565 = vunpack.c.h.b16 %v4393
        %v4566 = vunpack.c.l.b16 %v4394
        %v4567 = vunpack.c.h.b16 %v4394
        %v4568 = vunpack.c.l.b16 %v4395
        %v4569 = vunpack.c.h.b16 %v4395
        %v4570 = vunpack.c.l.b16 %v4396
        %v4571 = vunpack.c.h.b16 %v4396
        %v4572 = vunpack.c.l.b16 %v4397
        %v4573 = vunpack.c.h.b16 %v4397
        %v4574 = vunpack.c.l.b16 %v4398
        %v4575 = vunpack.c.h.b16 %v4398
        %v4576 = vunpack.c.l.b16 %v4399
        %v4577 = vunpack.c.h.b16 %v4399
        %v4578 = vunpack.c.l.b16 %v4400
        %v4579 = vunpack.c.h.b16 %v4400
        %v4580 = vunpack.c.l.b16 %v4401
        %v4581 = vunpack.c.h.b16 %v4401
        %v4582 = vunpack.c.l.b16 %v4402
        %v4583 = vunpack.c.h.b16 %v4402
        %v4584 = vunpack.c.l.b16 %v4403
        %v4585 = vunpack.c.h.b16 %v4403
        %v4586 = vunpack.c.l.b16 %v4404
        %v4587 = vunpack.c.h.b16 %v4404
        %v4588 = vunpack.c.l.b16 %v4405
        %v4589 = vunpack.c.h.b16 %v4405
        %v4590 = vunpack.c.l.b16 %v4406
        %v4591 = vunpack.c.h.b16 %v4406
        %v4592 = vunpack.c.l.b16 %v4407
        %v4593 = vunpack.c.h.b16 %v4407
        %v4594 = vunpack.c.l.b16 %v4408
        %v4595 = vunpack.c.h.b16 %v4408
        %v4596 = vunpack.c.l.b16 %v4409
        %v4597 = vunpack.c.h.b16 %v4409
        %v4598 = vunpack.c.l.b16 %v4410
        %v4599 = vunpack.c.h.b16 %v4410
        %v4600 = vunpack.c.l.b16 %v4411
        %v4601 = vunpack.c.h.b16 %v4411
        %v4602 = vunpack.c.l.b16 %v4412
        %v4603 = vunpack.c.h.b16 %v4412
        %v4604 = vunpack.c.l.b16 %v4413
        %v4605 = vunpack.c.h.b16 %v4413
        %v4606 = vunpack.c.l.b16 %v4414
        %v4607 = vunpack.c.h.b16 %v4414
        %v4608 = vunpack.c.l.b16 %v4415
        %v4609 = vunpack.c.h.b16 %v4415
        %v4610 = vunpack.c.l.b16 %v4416
        %v4611 = vunpack.c.h.b16 %v4416
        %v4612 = vunpack.c.l.b16 %v4417
        %v4613 = vunpack.c.h.b16 %v4417
        %v4614 = vunpack.c.l.b16 %v4418
        %v4615 = vunpack.c.h.b16 %v4418
        %v4616 = vunpack.c.l.b16 %v4419
        %v4617 = vunpack.c.h.b16 %v4419
        %v4618 = vunpack.c.l.b16 %v4420
        %v4619 = vunpack.c.h.b16 %v4420
        %v4620 = vpack.c.b16 %v4496, %v4492
        %v4621 = vpack.c.b16 %v4497, %v4493
        %v4622 = vpack.c.b16 %v4498, %v4494
        %v4623 = vpack.c.b16 %v4499, %v4495
        %v4624 = vpack.c.b16 %v4504, %v4500
        %v4625 = vpack.c.b16 %v4505, %v4501
        %v4626 = vpack.c.b16 %v4506, %v4502
        %v4627 = vpack.c.b16 %v4507, %v4503
        %v4628 = vpack.c.b16 %v4512, %v4508
        %v4629 = vpack.c.b16 %v4513, %v4509
        %v4630 = vpack.c.b16 %v4514, %v4510
        %v4631 = vpack.c.b16 %v4515, %v4511
        %v4632 = vpack.c.b16 %v4520, %v4516
        %v4633 = vpack.c.b16 %v4521, %v4517
        %v4634 = vpack.c.b16 %v4522, %v4518
        %v4635 = vpack.c.b16 %v4523, %v4519
        %v4636 = vpack.c.b16 %v4528, %v4524
        %v4637 = vpack.c.b16 %v4529, %v4525
        %v4638 = vpack.c.b16 %v4530, %v4526
        %v4639 = vpack.c.b16 %v4531, %v4527
        %v4640 = vpack.c.b16 %v4536, %v4532
        %v4641 = vpack.c.b16 %v4537, %v4533
        %v4642 = vpack.c.b16 %v4538, %v4534
        %v4643 = vpack.c.b16 %v4539, %v4535
        %v4644 = vpack.c.b16 %v4544, %v4540
        %v4645 = vpack.c.b16 %v4545, %v4541
        %v4646 = vpack.c.b16 %v4546, %v4542
        %v4647 = vpack.c.b16 %v4547, %v4543
        %v4648 = vpack.c.b16 %v4552, %v4548
        %v4649 = vpack.c.b16 %v4553, %v4549
        %v4650 = vpack.c.b16 %v4554, %v4550
        %v4651 = vpack.c.b16 %v4555, %v4551
        %v4652 = vpack.c.b16 %v4560, %v4556
        %v4653 = vpack.c.b16 %v4561, %v4557
        %v4654 = vpack.c.b16 %v4562, %v4558
        %v4655 = vpack.c.b16 %v4563, %v4559
        %v4656 = vpack.c.b16 %v4568, %v4564
        %v4657 = vpack.c.b16 %v4569, %v4565
        %v4658 = vpack.c.b16 %v4570, %v4566
        %v4659 = vpack.c.b16 %v4571, %v4567
        %v4660 = vpack.c.b16 %v4576, %v4572
        %v4661 = vpack.c.b16 %v4577, %v4573
        %v4662 = vpack.c.b16 %v4578, %v4574
        %v4663 = vpack.c.b16 %v4579, %v4575
        %v4664 = vpack.c.b16 %v4584, %v4580
        %v4665 = vpack.c.b16 %v4585, %v4581
        %v4666 = vpack.c.b16 %v4586, %v4582
        %v4667 = vpack.c.b16 %v4587, %v4583
        %v4668 = vpack.c.b16 %v4592, %v4588
        %v4669 = vpack.c.b16 %v4593, %v4589
        %v4670 = vpack.c.b16 %v4594, %v4590
        %v4671 = vpack.c.b16 %v4595, %v4591
        %v4672 = vpack.c.b16 %v4600, %v4596
        %v4673 = vpack.c.b16 %v4601, %v4597
        %v4674 = vpack.c.b16 %v4602, %v4598
        %v4675 = vpack.c.b16 %v4603, %v4599
        %v4676 = vpack.c.b16 %v4608, %v4604
        %v4677 = vpack.c.b16 %v4609, %v4605
        %v4678 = vpack.c.b16 %v4610, %v4606
        %v4679 = vpack.c.b16 %v4611, %v4607
        %v4680 = vpack.c.b16 %v4616, %v4612
        %v4681 = vpack.c.b16 %v4617, %v4613
        %v4682 = vpack.c.b16 %v4618, %v4614
        %v4683 = vpack.c.b16 %v4619, %v4615
        %4748 = vmatprep.subr.bf16.mxu0 %v4621
        %4749 = vmatpush1.bf16.msra.mxu0 %v4620
        %4750 = vmatprep.subr.bf16.mxu0 %v4625
        %4751 = vmatpush1.bf16.msra.mxu0 %v4624
        %4752 = vmatprep.subr.bf16.mxu0 %v4629
        %4753 = vmatpush1.bf16.msra.mxu0 %v4628
        %4754 = vmatprep.subr.bf16.mxu0 %v4633
        %4755 = vmatpush1.bf16.msra.mxu0 %v4632
        %4756 = vmatprep.subr.bf16.mxu0 %v4637
        %4757 = vmatpush1.bf16.msra.mxu0 %v4636
        %4758 = vmatprep.subr.bf16.mxu0 %v4641
        %4759 = vmatpush1.bf16.msra.mxu0 %v4640
        %4760 = vmatprep.subr.bf16.mxu0 %v4645
        %4761 = vmatpush1.bf16.msra.mxu0 %v4644
        %4762 = vmatprep.subr.bf16.mxu0 %v4649
        %4763 = vmatpush1.bf16.msra.mxu0 %v4648
        %4764 = vmatprep.subr.bf16.mxu0 %v4653
        %4765 = vmatpush1.bf16.msra.mxu0 %v4652
        %4766 = vmatprep.subr.bf16.mxu0 %v4657
        %4767 = vmatpush1.bf16.msra.mxu0 %v4656
        %4768 = vmatprep.subr.bf16.mxu0 %v4661
        %4769 = vmatpush1.bf16.msra.mxu0 %v4660
        %4770 = vmatprep.subr.bf16.mxu0 %v4665
        %4771 = vmatpush1.bf16.msra.mxu0 %v4664
        %4772 = vmatprep.subr.bf16.mxu0 %v4669
        %4773 = vmatpush1.bf16.msra.mxu0 %v4668
        %4774 = vmatprep.subr.bf16.mxu0 %v4673
        %4775 = vmatpush1.bf16.msra.mxu0 %v4672
        %4776 = vmatprep.subr.bf16.mxu0 %v4677
        %4777 = vmatpush1.bf16.msra.mxu0 %v4676
        %4778 = vmatprep.subr.bf16.mxu0 %v4681
        %4779 = vmatpush1.bf16.msra.mxu0 %v4680
        %4780 = vmatprep.mubr.bf16.mxu0 %v4425
        %4781 = vmatmul.mubr.bf16.gmra.mrb[0].mxu0 %v4424
        %v4782 = vpop.f32.mrb[0].mxu0
        %v4783 = vadd.f32 0.0, %v4782
        %v4784 = vpop.f32.mrb[0].mxu0
        %v4785 = vadd.f32 0.0, %v4784
        %v4786 = vpop.f32.mrb[0].mxu0
        %v4787 = vpop.f32.mrb[0].mxu0
        %4788 = vdwg.mxu0
        %4789 = vmatprep.subr.bf16.mxu0 %v4623
        %4790 = vmatpush1.bf16.msra.mxu0 %v4622
        %4791 = vmatprep.subr.bf16.mxu0 %v4627
        %4792 = vmatpush1.bf16.msra.mxu0 %v4626
        %4793 = vmatprep.subr.bf16.mxu0 %v4631
        %4794 = vmatpush1.bf16.msra.mxu0 %v4630
        %4795 = vmatprep.subr.bf16.mxu0 %v4635
        %4796 = vmatpush1.bf16.msra.mxu0 %v4634
        %4797 = vmatprep.subr.bf16.mxu0 %v4639
        %4798 = vmatpush1.bf16.msra.mxu0 %v4638
        %4799 = vmatprep.subr.bf16.mxu0 %v4643
        %4800 = vmatpush1.bf16.msra.mxu0 %v4642
        %4801 = vmatprep.subr.bf16.mxu0 %v4647
        %4802 = vmatpush1.bf16.msra.mxu0 %v4646
        %4803 = vmatprep.subr.bf16.mxu0 %v4651
        %4804 = vmatpush1.bf16.msra.mxu0 %v4650
        %4805 = vmatprep.subr.bf16.mxu0 %v4655
        %4806 = vmatpush1.bf16.msra.mxu0 %v4654
        %4807 = vmatprep.subr.bf16.mxu0 %v4659
        %4808 = vmatpush1.bf16.msra.mxu0 %v4658
        %4809 = vmatprep.subr.bf16.mxu0 %v4663
        %4810 = vmatpush1.bf16.msra.mxu0 %v4662
        %4811 = vmatprep.subr.bf16.mxu0 %v4667
        %4812 = vmatpush1.bf16.msra.mxu0 %v4666
        %4813 = vmatprep.subr.bf16.mxu0 %v4671
        %4814 = vmatpush1.bf16.msra.mxu0 %v4670
        %4815 = vmatprep.subr.bf16.mxu0 %v4675
        %4816 = vmatpush1.bf16.msra.mxu0 %v4674
        %4817 = vmatprep.subr.bf16.mxu0 %v4679
        %4818 = vmatpush1.bf16.msra.mxu0 %v4678
        %4819 = vmatprep.subr.bf16.mxu0 %v4683
        %4820 = vmatpush1.bf16.msra.mxu0 %v4682
        %4821 = vmatprep.mubr.bf16.mxu0 %v4425
        %4822 = vmatmul.mubr.bf16.gmra.mrb[0].mxu0 %v4424
        %v4823 = vpop.f32.mrb[0].mxu0
        %v4824 = vadd.f32 0.0, %v4823
        %v4825 = vpop.f32.mrb[0].mxu0
        %v4826 = vadd.f32 0.0, %v4825
        %v4827 = vpop.f32.mrb[0].mxu0
        %v4828 = vpop.f32.mrb[0].mxu0
        %4829 = vdwg.mxu0
        %v4830 = vadd.f32 %v4309, %v4783
        %v4831 = vadd.f32 %v4311, %v4785
        %v4832 = vadd.f32 %v4350, %v4824
        %v4833 = vadd.f32 %v4352, %v4826
        %v4835 = vlaneseq
        %v4836 = vshrl.u32 %v4835, 7
        %v4837 = vsub.s32 0, %v4836
        %v4838 = vrot.slane %v3405, %v4837
        %v4839 = vlaneseq
        %v4840 = vshrl.u32 %v4839, 7
        %v4841 = vsub.s32 1, %v4840
        %v4842 = vrot.slane %v3405, %v4841
        %v4843 = vlaneseq
        %v4844 = vshrl.u32 %v4843, 7
        %v4845 = vsub.s32 2, %v4844
        %v4846 = vrot.slane %v3405, %v4845
        %v4847 = vlaneseq
        %v4848 = vshrl.u32 %v4847, 7
        %v4849 = vsub.s32 3, %v4848
        %v4850 = vrot.slane %v3405, %v4849
        %v4855 = vadd.f32 %v4830, %v4838
        %v4856 = vadd.f32 %v4831, %v4842
        %v4857 = vadd.f32 %v4832, %v4846
        %v4858 = vadd.f32 %v4833, %v4850
        %v4859 = vmax.f32 %v4855, 0.0
        %v4860 = vmax.f32 %v4856, 0.0
        %v4861 = vmax.f32 %v4857, 0.0
        %v4862 = vmax.f32 %v4858, 0.0
        %v4863 = vpack.c.bf16 %v4859, %v4859
        %v4864 = vpack.c.bf16 %v4860, %v4860
        %v4865 = vpack.c.bf16 %v4861, %v4861
        %v4866 = vpack.c.bf16 %v4862, %v4862
        %v4867 = vld [vmem:[%s6] sm:$0xff]
        %v4868 = vld [vmem:[%s6 + $0x8] sm:$0xff]
        %v4869 = vld [vmem:[%s6 + $0x10] sm:$0xff]
        %v4870 = vld [vmem:[%s6 + $0x18] sm:$0xff]
        %v4871 = vld [vmem:[%s6 + $0x20] sm:$0xff]
        %v4872 = vld [vmem:[%s6 + $0x28] sm:$0xff]
        %v4873 = vld [vmem:[%s6 + $0x30] sm:$0xff]
        %v4874 = vld [vmem:[%s6 + $0x38] sm:$0xff]
        %v4875 = vld [vmem:[%s6 + $0x40] sm:$0xff]
        %v4876 = vld [vmem:[%s6 + $0x48] sm:$0xff]
        %v4877 = vld [vmem:[%s6 + $0x50] sm:$0xff]
        %v4878 = vld [vmem:[%s6 + $0x58] sm:$0xff]
        %v4879 = vld [vmem:[%s6 + $0x60] sm:$0xff]
        %v4880 = vld [vmem:[%s6 + $0x68] sm:$0xff]
        %v4881 = vld [vmem:[%s6 + $0x70] sm:$0xff]
        %v4882 = vld [vmem:[%s6 + $0x78] sm:$0xff]
        %v4883 = vld [vmem:[%s6 + $0x80] sm:$0xff]
        %v4884 = vld [vmem:[%s6 + $0x88] sm:$0xff]
        %v4885 = vld [vmem:[%s6 + $0x90] sm:$0xff]
        %v4886 = vld [vmem:[%s6 + $0x98] sm:$0xff]
        %v4887 = vld [vmem:[%s6 + $0xa0] sm:$0xff]
        %v4888 = vld [vmem:[%s6 + $0xa8] sm:$0xff]
        %v4889 = vld [vmem:[%s6 + $0xb0] sm:$0xff]
        %v4890 = vld [vmem:[%s6 + $0xb8] sm:$0xff]
        %v4891 = vld [vmem:[%s6 + $0xc0] sm:$0xff]
        %v4892 = vld [vmem:[%s6 + $0xc8] sm:$0xff]
        %v4893 = vld [vmem:[%s6 + $0xd0] sm:$0xff]
        %v4894 = vld [vmem:[%s6 + $0xd8] sm:$0xff]
        %v4895 = vld [vmem:[%s6 + $0xe0] sm:$0xff]
        %v4896 = vld [vmem:[%s6 + $0xe8] sm:$0xff]
        %v4897 = vld [vmem:[%s6 + $0xf0] sm:$0xff]
        %v4898 = vld [vmem:[%s6 + $0xf8] sm:$0xff]
        %v4899 = vld [vmem:[%s6 + $0x100] sm:$0xff]
        %v4900 = vld [vmem:[%s6 + $0x108] sm:$0xff]
        %v4901 = vld [vmem:[%s6 + $0x110] sm:$0xff]
        %v4902 = vld [vmem:[%s6 + $0x118] sm:$0xff]
        %v4903 = vld [vmem:[%s6 + $0x120] sm:$0xff]
        %v4904 = vld [vmem:[%s6 + $0x128] sm:$0xff]
        %v4905 = vld [vmem:[%s6 + $0x130] sm:$0xff]
        %v4906 = vld [vmem:[%s6 + $0x138] sm:$0xff]
        %v4907 = vld [vmem:[%s6 + $0x140] sm:$0xff]
        %v4908 = vld [vmem:[%s6 + $0x148] sm:$0xff]
        %v4909 = vld [vmem:[%s6 + $0x150] sm:$0xff]
        %v4910 = vld [vmem:[%s6 + $0x158] sm:$0xff]
        %v4911 = vld [vmem:[%s6 + $0x160] sm:$0xff]
        %v4912 = vld [vmem:[%s6 + $0x168] sm:$0xff]
        %v4913 = vld [vmem:[%s6 + $0x170] sm:$0xff]
        %v4914 = vld [vmem:[%s6 + $0x178] sm:$0xff]
        %v4915 = vld [vmem:[%s6 + $0x180] sm:$0xff]
        %v4916 = vld [vmem:[%s6 + $0x188] sm:$0xff]
        %v4917 = vld [vmem:[%s6 + $0x190] sm:$0xff]
        %v4918 = vld [vmem:[%s6 + $0x198] sm:$0xff]
        %v4919 = vld [vmem:[%s6 + $0x1a0] sm:$0xff]
        %v4920 = vld [vmem:[%s6 + $0x1a8] sm:$0xff]
        %v4921 = vld [vmem:[%s6 + $0x1b0] sm:$0xff]
        %v4922 = vld [vmem:[%s6 + $0x1b8] sm:$0xff]
        %v4923 = vld [vmem:[%s6 + $0x1c0] sm:$0xff]
        %v4924 = vld [vmem:[%s6 + $0x1c8] sm:$0xff]
        %v4925 = vld [vmem:[%s6 + $0x1d0] sm:$0xff]
        %v4926 = vld [vmem:[%s6 + $0x1d8] sm:$0xff]
        %v4927 = vld [vmem:[%s6 + $0x1e0] sm:$0xff]
        %v4928 = vld [vmem:[%s6 + $0x1e8] sm:$0xff]
        %v4929 = vld [vmem:[%s6 + $0x1f0] sm:$0xff]
        %v4930 = vld [vmem:[%s6 + $0x1f8] sm:$0xff]
        %s4931 = scalar_lea.vmem %s8, 5
        %v4932 = vld [vmem:[%s4931] ss:$8 sm:$0x3]
        %v4934 = vlaneseq
        %v4935 = vshrl.u32 %v4934, 7
        %v4936 = vsub.s32 0, %v4935
        %v4937 = vrot.slane %v4932, %v4936
        %v4938 = vlaneseq
        %v4939 = vshrl.u32 %v4938, 7
        %v4940 = vsub.s32 1, %v4939
        %v4941 = vrot.slane %v4932, %v4940
        %v5008 = vunpack.c.l.b16 %v4867
        %v5009 = vunpack.c.h.b16 %v4867
        %v5010 = vunpack.c.l.b16 %v4868
        %v5011 = vunpack.c.h.b16 %v4868
        %v5012 = vunpack.c.l.b16 %v4869
        %v5013 = vunpack.c.h.b16 %v4869
        %v5014 = vunpack.c.l.b16 %v4870
        %v5015 = vunpack.c.h.b16 %v4870
        %v5016 = vunpack.c.l.b16 %v4871
        %v5017 = vunpack.c.h.b16 %v4871
        %v5018 = vunpack.c.l.b16 %v4872
        %v5019 = vunpack.c.h.b16 %v4872
        %v5020 = vunpack.c.l.b16 %v4873
        %v5021 = vunpack.c.h.b16 %v4873
        %v5022 = vunpack.c.l.b16 %v4874
        %v5023 = vunpack.c.h.b16 %v4874
        %v5024 = vunpack.c.l.b16 %v4875
        %v5025 = vunpack.c.h.b16 %v4875
        %v5026 = vunpack.c.l.b16 %v4876
        %v5027 = vunpack.c.h.b16 %v4876
        %v5028 = vunpack.c.l.b16 %v4877
        %v5029 = vunpack.c.h.b16 %v4877
        %v5030 = vunpack.c.l.b16 %v4878
        %v5031 = vunpack.c.h.b16 %v4878
        %v5032 = vunpack.c.l.b16 %v4879
        %v5033 = vunpack.c.h.b16 %v4879
        %v5034 = vunpack.c.l.b16 %v4880
        %v5035 = vunpack.c.h.b16 %v4880
        %v5036 = vunpack.c.l.b16 %v4881
        %v5037 = vunpack.c.h.b16 %v4881
        %v5038 = vunpack.c.l.b16 %v4882
        %v5039 = vunpack.c.h.b16 %v4882
        %v5040 = vunpack.c.l.b16 %v4883
        %v5041 = vunpack.c.h.b16 %v4883
        %v5042 = vunpack.c.l.b16 %v4884
        %v5043 = vunpack.c.h.b16 %v4884
        %v5044 = vunpack.c.l.b16 %v4885
        %v5045 = vunpack.c.h.b16 %v4885
        %v5046 = vunpack.c.l.b16 %v4886
        %v5047 = vunpack.c.h.b16 %v4886
        %v5048 = vunpack.c.l.b16 %v4887
        %v5049 = vunpack.c.h.b16 %v4887
        %v5050 = vunpack.c.l.b16 %v4888
        %v5051 = vunpack.c.h.b16 %v4888
        %v5052 = vunpack.c.l.b16 %v4889
        %v5053 = vunpack.c.h.b16 %v4889
        %v5054 = vunpack.c.l.b16 %v4890
        %v5055 = vunpack.c.h.b16 %v4890
        %v5056 = vunpack.c.l.b16 %v4891
        %v5057 = vunpack.c.h.b16 %v4891
        %v5058 = vunpack.c.l.b16 %v4892
        %v5059 = vunpack.c.h.b16 %v4892
        %v5060 = vunpack.c.l.b16 %v4893
        %v5061 = vunpack.c.h.b16 %v4893
        %v5062 = vunpack.c.l.b16 %v4894
        %v5063 = vunpack.c.h.b16 %v4894
        %v5064 = vunpack.c.l.b16 %v4895
        %v5065 = vunpack.c.h.b16 %v4895
        %v5066 = vunpack.c.l.b16 %v4896
        %v5067 = vunpack.c.h.b16 %v4896
        %v5068 = vunpack.c.l.b16 %v4897
        %v5069 = vunpack.c.h.b16 %v4897
        %v5070 = vunpack.c.l.b16 %v4898
        %v5071 = vunpack.c.h.b16 %v4898
        %v5072 = vunpack.c.l.b16 %v4899
        %v5073 = vunpack.c.h.b16 %v4899
        %v5074 = vunpack.c.l.b16 %v4900
        %v5075 = vunpack.c.h.b16 %v4900
        %v5076 = vunpack.c.l.b16 %v4901
        %v5077 = vunpack.c.h.b16 %v4901
        %v5078 = vunpack.c.l.b16 %v4902
        %v5079 = vunpack.c.h.b16 %v4902
        %v5080 = vunpack.c.l.b16 %v4903
        %v5081 = vunpack.c.h.b16 %v4903
        %v5082 = vunpack.c.l.b16 %v4904
        %v5083 = vunpack.c.h.b16 %v4904
        %v5084 = vunpack.c.l.b16 %v4905
        %v5085 = vunpack.c.h.b16 %v4905
        %v5086 = vunpack.c.l.b16 %v4906
        %v5087 = vunpack.c.h.b16 %v4906
        %v5088 = vunpack.c.l.b16 %v4907
        %v5089 = vunpack.c.h.b16 %v4907
        %v5090 = vunpack.c.l.b16 %v4908
        %v5091 = vunpack.c.h.b16 %v4908
        %v5092 = vunpack.c.l.b16 %v4909
        %v5093 = vunpack.c.h.b16 %v4909
        %v5094 = vunpack.c.l.b16 %v4910
        %v5095 = vunpack.c.h.b16 %v4910
        %v5096 = vunpack.c.l.b16 %v4911
        %v5097 = vunpack.c.h.b16 %v4911
        %v5098 = vunpack.c.l.b16 %v4912
        %v5099 = vunpack.c.h.b16 %v4912
        %v5100 = vunpack.c.l.b16 %v4913
        %v5101 = vunpack.c.h.b16 %v4913
        %v5102 = vunpack.c.l.b16 %v4914
        %v5103 = vunpack.c.h.b16 %v4914
        %v5104 = vunpack.c.l.b16 %v4915
        %v5105 = vunpack.c.h.b16 %v4915
        %v5106 = vunpack.c.l.b16 %v4916
        %v5107 = vunpack.c.h.b16 %v4916
        %v5108 = vunpack.c.l.b16 %v4917
        %v5109 = vunpack.c.h.b16 %v4917
        %v5110 = vunpack.c.l.b16 %v4918
        %v5111 = vunpack.c.h.b16 %v4918
        %v5112 = vunpack.c.l.b16 %v4919
        %v5113 = vunpack.c.h.b16 %v4919
        %v5114 = vunpack.c.l.b16 %v4920
        %v5115 = vunpack.c.h.b16 %v4920
        %v5116 = vunpack.c.l.b16 %v4921
        %v5117 = vunpack.c.h.b16 %v4921
        %v5118 = vunpack.c.l.b16 %v4922
        %v5119 = vunpack.c.h.b16 %v4922
        %v5120 = vunpack.c.l.b16 %v4923
        %v5121 = vunpack.c.h.b16 %v4923
        %v5122 = vunpack.c.l.b16 %v4924
        %v5123 = vunpack.c.h.b16 %v4924
        %v5124 = vunpack.c.l.b16 %v4925
        %v5125 = vunpack.c.h.b16 %v4925
        %v5126 = vunpack.c.l.b16 %v4926
        %v5127 = vunpack.c.h.b16 %v4926
        %v5128 = vunpack.c.l.b16 %v4927
        %v5129 = vunpack.c.h.b16 %v4927
        %v5130 = vunpack.c.l.b16 %v4928
        %v5131 = vunpack.c.h.b16 %v4928
        %v5132 = vunpack.c.l.b16 %v4929
        %v5133 = vunpack.c.h.b16 %v4929
        %v5134 = vunpack.c.l.b16 %v4930
        %v5135 = vunpack.c.h.b16 %v4930
        %v5136 = vpack.c.b16 %v5010, %v5008
        %v5137 = vpack.c.b16 %v5011, %v5009
        %v5138 = vpack.c.b16 %v5014, %v5012
        %v5139 = vpack.c.b16 %v5015, %v5013
        %v5140 = vpack.c.b16 %v5018, %v5016
        %v5141 = vpack.c.b16 %v5019, %v5017
        %v5142 = vpack.c.b16 %v5022, %v5020
        %v5143 = vpack.c.b16 %v5023, %v5021
        %v5144 = vpack.c.b16 %v5026, %v5024
        %v5145 = vpack.c.b16 %v5027, %v5025
        %v5146 = vpack.c.b16 %v5030, %v5028
        %v5147 = vpack.c.b16 %v5031, %v5029
        %v5148 = vpack.c.b16 %v5034, %v5032
        %v5149 = vpack.c.b16 %v5035, %v5033
        %v5150 = vpack.c.b16 %v5038, %v5036
        %v5151 = vpack.c.b16 %v5039, %v5037
        %v5152 = vpack.c.b16 %v5042, %v5040
        %v5153 = vpack.c.b16 %v5043, %v5041
        %v5154 = vpack.c.b16 %v5046, %v5044
        %v5155 = vpack.c.b16 %v5047, %v5045
        %v5156 = vpack.c.b16 %v5050, %v5048
        %v5157 = vpack.c.b16 %v5051, %v5049
        %v5158 = vpack.c.b16 %v5054, %v5052
        %v5159 = vpack.c.b16 %v5055, %v5053
        %v5160 = vpack.c.b16 %v5058, %v5056
        %v5161 = vpack.c.b16 %v5059, %v5057
        %v5162 = vpack.c.b16 %v5062, %v5060
        %v5163 = vpack.c.b16 %v5063, %v5061
        %v5164 = vpack.c.b16 %v5066, %v5064
        %v5165 = vpack.c.b16 %v5067, %v5065
        %v5166 = vpack.c.b16 %v5070, %v5068
        %v5167 = vpack.c.b16 %v5071, %v5069
        %v5168 = vpack.c.b16 %v5074, %v5072
        %v5169 = vpack.c.b16 %v5075, %v5073
        %v5170 = vpack.c.b16 %v5078, %v5076
        %v5171 = vpack.c.b16 %v5079, %v5077
        %v5172 = vpack.c.b16 %v5082, %v5080
        %v5173 = vpack.c.b16 %v5083, %v5081
        %v5174 = vpack.c.b16 %v5086, %v5084
        %v5175 = vpack.c.b16 %v5087, %v5085
        %v5176 = vpack.c.b16 %v5090, %v5088
        %v5177 = vpack.c.b16 %v5091, %v5089
        %v5178 = vpack.c.b16 %v5094, %v5092
        %v5179 = vpack.c.b16 %v5095, %v5093
        %v5180 = vpack.c.b16 %v5098, %v5096
        %v5181 = vpack.c.b16 %v5099, %v5097
        %v5182 = vpack.c.b16 %v5102, %v5100
        %v5183 = vpack.c.b16 %v5103, %v5101
        %v5184 = vpack.c.b16 %v5106, %v5104
        %v5185 = vpack.c.b16 %v5107, %v5105
        %v5186 = vpack.c.b16 %v5110, %v5108
        %v5187 = vpack.c.b16 %v5111, %v5109
        %v5188 = vpack.c.b16 %v5114, %v5112
        %v5189 = vpack.c.b16 %v5115, %v5113
        %v5190 = vpack.c.b16 %v5118, %v5116
        %v5191 = vpack.c.b16 %v5119, %v5117
        %v5192 = vpack.c.b16 %v5122, %v5120
        %v5193 = vpack.c.b16 %v5123, %v5121
        %v5194 = vpack.c.b16 %v5126, %v5124
        %v5195 = vpack.c.b16 %v5127, %v5125
        %v5196 = vpack.c.b16 %v5130, %v5128
        %v5197 = vpack.c.b16 %v5131, %v5129
        %v5198 = vpack.c.b16 %v5134, %v5132
        %v5199 = vpack.c.b16 %v5135, %v5133
        %5264 = vmatprep.subr.bf16.mxu0 %v5137
        %5265 = vmatpush1.bf16.msra.mxu0 %v5136
        %5266 = vmatprep.subr.bf16.mxu0 %v5139
        %5267 = vmatpush1.bf16.msra.mxu0 %v5138
        %5268 = vmatprep.subr.bf16.mxu0 %v5141
        %5269 = vmatpush1.bf16.msra.mxu0 %v5140
        %5270 = vmatprep.subr.bf16.mxu0 %v5143
        %5271 = vmatpush1.bf16.msra.mxu0 %v5142
        %5272 = vmatprep.subr.bf16.mxu0 %v5145
        %5273 = vmatpush1.bf16.msra.mxu0 %v5144
        %5274 = vmatprep.subr.bf16.mxu0 %v5147
        %5275 = vmatpush1.bf16.msra.mxu0 %v5146
        %5276 = vmatprep.subr.bf16.mxu0 %v5149
        %5277 = vmatpush1.bf16.msra.mxu0 %v5148
        %5278 = vmatprep.subr.bf16.mxu0 %v5151
        %5279 = vmatpush1.bf16.msra.mxu0 %v5150
        %5280 = vmatprep.subr.bf16.mxu0 %v5153
        %5281 = vmatpush1.bf16.msra.mxu0 %v5152
        %5282 = vmatprep.subr.bf16.mxu0 %v5155
        %5283 = vmatpush1.bf16.msra.mxu0 %v5154
        %5284 = vmatprep.subr.bf16.mxu0 %v5157
        %5285 = vmatpush1.bf16.msra.mxu0 %v5156
        %5286 = vmatprep.subr.bf16.mxu0 %v5159
        %5287 = vmatpush1.bf16.msra.mxu0 %v5158
        %5288 = vmatprep.subr.bf16.mxu0 %v5161
        %5289 = vmatpush1.bf16.msra.mxu0 %v5160
        %5290 = vmatprep.subr.bf16.mxu0 %v5163
        %5291 = vmatpush1.bf16.msra.mxu0 %v5162
        %5292 = vmatprep.subr.bf16.mxu0 %v5165
        %5293 = vmatpush1.bf16.msra.mxu0 %v5164
        %5294 = vmatprep.subr.bf16.mxu0 %v5167
        %5295 = vmatpush1.bf16.msra.mxu0 %v5166
        %5296 = vmatprep.mubr.bf16.mxu0 %v4864
        %5297 = vmatmul.mubr.bf16.gmra.mrb[0].mxu0 %v4863
        %v5298 = vpop.f32.mrb[0].mxu0
        %v5299 = vadd.f32 %v4937, %v5298
        %v5300 = vpop.f32.mrb[0].mxu0
        %v5301 = vadd.f32 %v4941, %v5300
        %v5302 = vpop.f32.mrb[0].mxu0
        %v5303 = vpop.f32.mrb[0].mxu0
        %5304 = vdwg.mxu0
        %5305 = vmatprep.subr.bf16.mxu0 %v5169
        %5306 = vmatpush1.bf16.msra.mxu0 %v5168
        %5307 = vmatprep.subr.bf16.mxu0 %v5171
        %5308 = vmatpush1.bf16.msra.mxu0 %v5170
        %5309 = vmatprep.subr.bf16.mxu0 %v5173
        %5310 = vmatpush1.bf16.msra.mxu0 %v5172
        %5311 = vmatprep.subr.bf16.mxu0 %v5175
        %5312 = vmatpush1.bf16.msra.mxu0 %v5174
        %5313 = vmatprep.subr.bf16.mxu0 %v5177
        %5314 = vmatpush1.bf16.msra.mxu0 %v5176
        %5315 = vmatprep.subr.bf16.mxu0 %v5179
        %5316 = vmatpush1.bf16.msra.mxu0 %v5178
        %5317 = vmatprep.subr.bf16.mxu0 %v5181
        %5318 = vmatpush1.bf16.msra.mxu0 %v5180
        %5319 = vmatprep.subr.bf16.mxu0 %v5183
        %5320 = vmatpush1.bf16.msra.mxu0 %v5182
        %5321 = vmatprep.subr.bf16.mxu0 %v5185
        %5322 = vmatpush1.bf16.msra.mxu0 %v5184
        %5323 = vmatprep.subr.bf16.mxu0 %v5187
        %5324 = vmatpush1.bf16.msra.mxu0 %v5186
        %5325 = vmatprep.subr.bf16.mxu0 %v5189
        %5326 = vmatpush1.bf16.msra.mxu0 %v5188
        %5327 = vmatprep.subr.bf16.mxu0 %v5191
        %5328 = vmatpush1.bf16.msra.mxu0 %v5190
        %5329 = vmatprep.subr.bf16.mxu0 %v5193
        %5330 = vmatpush1.bf16.msra.mxu0 %v5192
        %5331 = vmatprep.subr.bf16.mxu0 %v5195
        %5332 = vmatpush1.bf16.msra.mxu0 %v5194
        %5333 = vmatprep.subr.bf16.mxu0 %v5197
        %5334 = vmatpush1.bf16.msra.mxu0 %v5196
        %5335 = vmatprep.subr.bf16.mxu0 %v5199
        %5336 = vmatpush1.bf16.msra.mxu0 %v5198
        %5337 = vmatprep.mubr.bf16.mxu0 %v4866
        %5338 = vmatmul.mubr.bf16.gmra.mrb[0].mxu0 %v4865
        %v5339 = vpop.f32.mrb[0].mxu0
        %v5340 = vadd.f32 %v5299, %v5339
        %v5341 = vpop.f32.mrb[0].mxu0
        %v5342 = vadd.f32 %v5301, %v5341
        %v5343 = vpop.f32.mrb[0].mxu0
        %v5344 = vpop.f32.mrb[0].mxu0
        %5345 = vdwg.mxu0
        %v5346 = vmax.f32 %v5340, 0.0
        %v5347 = vmax.f32 %v5342, 0.0
        %v5348 = vpack.c.bf16 %v5346, %v5346
        %v5349 = vpack.c.bf16 %v5347, %v5347
        %v5350 = vld [vmem:[%s7] sm:$0xf]
        %v5351 = vld [vmem:[%s7 + $0x4] sm:$0xf]
        %v5352 = vld [vmem:[%s7 + $0x8] sm:$0xf]
        %v5353 = vld [vmem:[%s7 + $0xc] sm:$0xf]
        %v5354 = vld [vmem:[%s7 + $0x10] sm:$0xf]
        %v5355 = vld [vmem:[%s7 + $0x14] sm:$0xf]
        %v5356 = vld [vmem:[%s7 + $0x18] sm:$0xf]
        %v5357 = vld [vmem:[%s7 + $0x1c] sm:$0xf]
        %v5358 = vld [vmem:[%s7 + $0x20] sm:$0xf]
        %v5359 = vld [vmem:[%s7 + $0x24] sm:$0xf]
        %v5360 = vld [vmem:[%s7 + $0x28] sm:$0xf]
        %v5361 = vld [vmem:[%s7 + $0x2c] sm:$0xf]
        %v5362 = vld [vmem:[%s7 + $0x30] sm:$0xf]
        %v5363 = vld [vmem:[%s7 + $0x34] sm:$0xf]
        %v5364 = vld [vmem:[%s7 + $0x38] sm:$0xf]
        %v5365 = vld [vmem:[%s7 + $0x3c] sm:$0xf]
        %v5366 = vld [vmem:[%s7 + $0x40] sm:$0xf]
        %v5367 = vld [vmem:[%s7 + $0x44] sm:$0xf]
        %v5368 = vld [vmem:[%s7 + $0x48] sm:$0xf]
        %v5369 = vld [vmem:[%s7 + $0x4c] sm:$0xf]
        %v5370 = vld [vmem:[%s7 + $0x50] sm:$0xf]
        %v5371 = vld [vmem:[%s7 + $0x54] sm:$0xf]
        %v5372 = vld [vmem:[%s7 + $0x58] sm:$0xf]
        %v5373 = vld [vmem:[%s7 + $0x5c] sm:$0xf]
        %v5374 = vld [vmem:[%s7 + $0x60] sm:$0xf]
        %v5375 = vld [vmem:[%s7 + $0x64] sm:$0xf]
        %v5376 = vld [vmem:[%s7 + $0x68] sm:$0xf]
        %v5377 = vld [vmem:[%s7 + $0x6c] sm:$0xf]
        %v5378 = vld [vmem:[%s7 + $0x70] sm:$0xf]
        %v5379 = vld [vmem:[%s7 + $0x74] sm:$0xf]
        %v5380 = vld [vmem:[%s7 + $0x78] sm:$0xf]
        %v5381 = vld [vmem:[%s7 + $0x7c] sm:$0xf]
        %v5382 = vld [vmem:[%s8 + $0x6] ss:$0 sm:$0xff]
        %v5415 = vunpack.c.l.b16 %v5350
        %v5416 = vunpack.c.l.b16 %v5351
        %v5417 = vunpack.c.l.b16 %v5352
        %v5418 = vunpack.c.l.b16 %v5353
        %v5419 = vunpack.c.l.b16 %v5354
        %v5420 = vunpack.c.l.b16 %v5355
        %v5421 = vunpack.c.l.b16 %v5356
        %v5422 = vunpack.c.l.b16 %v5357
        %v5423 = vunpack.c.l.b16 %v5358
        %v5424 = vunpack.c.l.b16 %v5359
        %v5425 = vunpack.c.l.b16 %v5360
        %v5426 = vunpack.c.l.b16 %v5361
        %v5427 = vunpack.c.l.b16 %v5362
        %v5428 = vunpack.c.l.b16 %v5363
        %v5429 = vunpack.c.l.b16 %v5364
        %v5430 = vunpack.c.l.b16 %v5365
        %v5431 = vunpack.c.l.b16 %v5366
        %v5432 = vunpack.c.l.b16 %v5367
        %v5433 = vunpack.c.l.b16 %v5368
        %v5434 = vunpack.c.l.b16 %v5369
        %v5435 = vunpack.c.l.b16 %v5370
        %v5436 = vunpack.c.l.b16 %v5371
        %v5437 = vunpack.c.l.b16 %v5372
        %v5438 = vunpack.c.l.b16 %v5373
        %v5439 = vunpack.c.l.b16 %v5374
        %v5440 = vunpack.c.l.b16 %v5375
        %v5441 = vunpack.c.l.b16 %v5376
        %v5442 = vunpack.c.l.b16 %v5377
        %v5443 = vunpack.c.l.b16 %v5378
        %v5444 = vunpack.c.l.b16 %v5379
        %v5445 = vunpack.c.l.b16 %v5380
        %v5446 = vunpack.c.l.b16 %v5381
        %v5447 = vpack.c.b16 %v5416, %v5415
        %v5448 = vpack.c.b16 %v5418, %v5417
        %v5449 = vpack.c.b16 %v5420, %v5419
        %v5450 = vpack.c.b16 %v5422, %v5421
        %v5451 = vpack.c.b16 %v5424, %v5423
        %v5452 = vpack.c.b16 %v5426, %v5425
        %v5453 = vpack.c.b16 %v5428, %v5427
        %v5454 = vpack.c.b16 %v5430, %v5429
        %v5455 = vpack.c.b16 %v5432, %v5431
        %v5456 = vpack.c.b16 %v5434, %v5433
        %v5457 = vpack.c.b16 %v5436, %v5435
        %v5458 = vpack.c.b16 %v5438, %v5437
        %v5459 = vpack.c.b16 %v5440, %v5439
        %v5460 = vpack.c.b16 %v5442, %v5441
        %v5461 = vpack.c.b16 %v5444, %v5443
        %v5462 = vpack.c.b16 %v5446, %v5445
        %5479 = vmatprep.subr.bf16.mxu0 0
        %5480 = vmatpush1.bf16.msra.mxu0 %v5447
        %5481 = vmatprep.subr.bf16.mxu0 0
        %5482 = vmatpush1.bf16.msra.mxu0 %v5448
        %5483 = vmatprep.subr.bf16.mxu0 0
        %5484 = vmatpush1.bf16.msra.mxu0 %v5449
        %5485 = vmatprep.subr.bf16.mxu0 0
        %5486 = vmatpush1.bf16.msra.mxu0 %v5450
        %5487 = vmatprep.subr.bf16.mxu0 0
        %5488 = vmatpush1.bf16.msra.mxu0 %v5451
        %5489 = vmatprep.subr.bf16.mxu0 0
        %5490 = vmatpush1.bf16.msra.mxu0 %v5452
        %5491 = vmatprep.subr.bf16.mxu0 0
        %5492 = vmatpush1.bf16.msra.mxu0 %v5453
        %5493 = vmatprep.subr.bf16.mxu0 0
        %5494 = vmatpush1.bf16.msra.mxu0 %v5454
        %5495 = vmatprep.subr.bf16.mxu0 0
        %5496 = vmatpush1.bf16.msra.mxu0 %v5455
        %5497 = vmatprep.subr.bf16.mxu0 0
        %5498 = vmatpush1.bf16.msra.mxu0 %v5456
        %5499 = vmatprep.subr.bf16.mxu0 0
        %5500 = vmatpush1.bf16.msra.mxu0 %v5457
        %5501 = vmatprep.subr.bf16.mxu0 0
        %5502 = vmatpush1.bf16.msra.mxu0 %v5458
        %5503 = vmatprep.subr.bf16.mxu0 0
        %5504 = vmatpush1.bf16.msra.mxu0 %v5459
        %5505 = vmatprep.subr.bf16.mxu0 0
        %5506 = vmatpush1.bf16.msra.mxu0 %v5460
        %5507 = vmatprep.subr.bf16.mxu0 0
        %5508 = vmatpush1.bf16.msra.mxu0 %v5461
        %5509 = vmatprep.subr.bf16.mxu0 0
        %5510 = vmatpush1.bf16.msra.mxu0 %v5462
        %5511 = vmatprep.mubr.bf16.mxu0 %v5349
        %5512 = vmatmul.mubr.bf16.gmra.mrb[0].mxu0 %v5348
        %v5513 = vpop.f32.mrb[0].mxu0
        %v5514 = vadd.f32 %v5382, %v5513
        %v5515 = vpop.f32.mrb[0].mxu0
        %v5516 = vpop.f32.mrb[0].mxu0
        %v5517 = vpop.f32.mrb[0].mxu0
        %5518 = vdwg.mxu0
        %5519 = vmax.xlane.f32.xlu0 %v5514
        %v5520 = vpop.xlane.xlu0 %5519
        %v5521 = vsub.f32 %v5514, %v5520
        %v5522 = vmul.f32 %v5521, 1.442695
        %v5523 = vpow.pop %v5522
        %5524 = vadd.xlane.f32.xlu0 %v5523
        %v5525 = vpop.xlane.xlu0 %5524
        %v5526 = vlog2.pop %v5525
        %v5527 = vmul.f32 %v5526, 0.6931472
        %v5528 = vadd.f32 %v5527, %v5520
        %v5529 = vsub.f32 %v5514, %v5528
        %5530 = vst [vmem:[%s325] sm:$0xff] %v5529
        %s5531 = sand.u32 %s225, 1
        %s5532 = scalar_lea.sflag [#allocation7], %s5531
        %s5533 = sand.u32 %s225, 1
        %s5534 = smul.addr %s5533, 8
        %s5535 = scalar_lea.vmem [#allocation6], %s5534
        // Predicated region
        $region57: #{_lambda_.1} parent=55 // pred_check
          %p5536 = pneg %p235
        $region58: #{_lambda_.1} parent=55 // pred_check_branch
          %5538 = sbr.rel (%p5536) target = $region60
        $region59: #{_lambda_.1} parent=55 // pred_region
          %s5540 = ssub.s32 128, 128
          %5541 = vsyncadd %s5532, %s5540
          %s5542 = smul.addr %s23, 128
          %s5543 = scalar_lea.hbm %s9, %s5542
          %s5545 = sshll.u32 %s5535, 4
          %s5546 = int_to_ptr.vmem [resolvable:$true] %s5545
          %5548 = dma.vmem_to_hbm [thread:$0]  %s5546, 128, %s5543, %s5532
        $region60: #{_lambda_.1} parent=55 // pred_fallthru
          _
      $region56: #{_lambda_.1} parent=5 // pred_fallthru
        _
      %p5549 = scmp.le.s32.totalorder 2, %s18
      // Predicated region
      $region61: #{_lambda_.1} parent=5 // pred_check
        %p5550 = pneg %p5549
      $region62: #{_lambda_.1} parent=5 // pred_check_branch
        %5552 = sbr.rel (%p5550) target = $region64
      $region63: #{_lambda_.1} parent=5 // pred_region
        %s5553 = ssub.s32 %s18, 2
        // Predicated region
        $region65: #{_lambda_.1} parent=63 // pred_check
          %p5554 = pneg %p241
        $region66: #{_lambda_.1} parent=63 // pred_check_branch
          %5556 = sbr.rel (%p5554) target = $region68
        $region67: #{_lambda_.1} parent=63 // pred_region
          %s5557 = sand.u32 %s226, 1
          %s5558 = scalar_lea.sflag [#allocation7], %s5557
          %s5559 = sand.u32 %s226, 1
          %s5560 = smul.addr %s5559, 8
          %s5561 = scalar_lea.vmem [#allocation6], %s5560
          %5562 = dma.done %s5558, 128
        $region68: #{_lambda_.1} parent=63 // pred_fallthru
          _
      $region64: #{_lambda_.1} parent=5 // pred_fallthru
        _
    $region6: #{_lambda_.1} parent=1 // loop_footer
      %s22 = sadd.s32 1, %s18
    $region7: #{_lambda_.1} parent=1 // loop_footer_branch
      %17 = sbr.rel target = $region3
    $region8: #{_lambda_.1} parent=1 // loop_exit
      _
    %5563 = vsyncpa [#allocation7], 1
    %s5564 = scalar_lea.sflag [#allocation7], 1
    %5565 = vsyncpa %s5564, 1

</llo_original>
